<compile_context>
chip_gen: v7x
topology: tpu7x:2x2x1
jax: 0.10.0
libtpu: 0.0.40
codegen_flags: <defaults>
</compile_context>

<pallas_src>
import functools

import jax
import jax.numpy as jnp
from jax.experimental import pallas as pl
from jax.experimental.pallas import tpu as pltpu


def _round_up(x, m):
    return ((x + m - 1) // m) * m


# ------------------------------ Pallas kernel ------------------------------ #
def _conv_relu_x2_kernel(p1_ref, w1_ref, b1_ref, w2_ref, b2_ref, o_ref, h1_ref,
                         *, K, SPW):
    """conv1 -> ReLU -> conv2 -> ReLU for ONE image (grid is over the batch).

    p1_ref : (OH1*SPW, C*K*K)   im2col patches of this image (width padded)
    w1_ref : (C*K*K, OCP)       conv1 weights, out-channels zero-padded to OCP
    b1_ref : (1, OCP)
    w2_ref : (K*K, OC1P, OCP)   conv2 weights, compact in_channels (OC1P=24)
    b2_ref : (1, OCP)
    o_ref  : (OH2*SPW, OCP)     lane-dense, width-padded output slab
    h1_ref : (OH1*SPW + slack, OCP) flat VMEM scratch for the conv1 activation
    """
    M1 = p1_ref.shape[0]                      # OH1 * SPW
    TAP_ROWS, OCP = o_ref.shape               # OH2 * SPW, 128
    OC1P = w2_ref.shape[1]
    SLACK = h1_ref.shape[0] - M1

    # ---- Stage 1: conv1 + bias + ReLU as a single MXU matmul, ONE store ---- #
    h1 = jnp.dot(p1_ref[...], w1_ref[...], preferred_element_type=jnp.float32)
    h1_ref[pl.ds(0, M1), :] = jnp.maximum(h1 + b1_ref[...], 0.0)
    # Zero the slack rows so the over-reaching tap slices below read zeros
    # (they only feed discarded padded-width output columns anyway).
    h1_ref[pl.ds(M1, SLACK), :] = jnp.zeros((SLACK, OCP), jnp.float32)

    # ---- Stage 2: conv2 + bias + ReLU as K*K chained MXU matmuls ---- #
    # Zero rows appended to each compact w2 slab; they multiply activation
    # channels >= OC1P which are exactly zero (zero-padded w1/b1 + ReLU).
    pad_rows = jnp.zeros((OCP - OC1P, OCP), jnp.float32)
    acc = jnp.zeros((TAP_ROWS, OCP), jnp.float32)
    for kh in range(K):
        for kw in range(K):
            # One contiguous slab of the flat activation per tap: row
            # oy*SPW + x of this slab is h1[oy+kh, x+kw] for every valid
            # output column x < OW2 (x+kw < SPW always holds there).
            tap = h1_ref[pl.ds(kh * SPW + kw, TAP_ROWS), :]
            w2_slab = jnp.concatenate([w2_ref[kh * K + kw], pad_rows], axis=0)
            acc = acc + jnp.dot(tap, w2_slab,
                                preferred_element_type=jnp.float32)
    o_ref[...] = jnp.maximum(acc + b2_ref[...], 0.0)


# ------------------------------- JAX wrapper ------------------------------- #
def _conv_conv_pallas(x, w1, b1, w2, b2):
    """relu(conv2(relu(conv1(x)))), VALID padding, stride 1, NCHW in / NCHW out."""
    N, C, H, W = x.shape
    OC1, _, K, _ = w1.shape
    OC2 = w2.shape[0]
    OH1, OW1 = H - K + 1, W - K + 1           # conv1 spatial
    OH2, OW2 = OH1 - K + 1, OW1 - K + 1       # conv2 spatial
    SPW = _round_up(OW1, 8)                   # tile-aligned activation width
    OCP = _round_up(max(OC1, OC2), 128)       # lane-dense channel dimension
    OC1P = _round_up(OC1, 8)                  # compact (sublane-aligned) conv2 Cin
    CKK = C * K * K
    M1 = OH1 * SPW                            # flat activation rows per image
    TAP_ROWS = OH2 * SPW                      # flat output rows per image
    SLACK = _round_up(K - 1, 8)               # over-reach rows for tap slices

    # im2col patches for conv1 (single fused XLA op, channel-last output).
    # Extra right padding on W yields SPW columns; those positions only ever
    # feed the discarded padded output columns.
    p1 = jax.lax.conv_general_dilated_patches(
        x, filter_shape=(K, K), window_strides=(1, 1),
        padding=((0, 0), (0, SPW - OW1)),
        dimension_numbers=("NCHW", "OIHW", "NHWC"))           # (N, OH1, SPW, CKK)
    p1 = p1.reshape(N * M1, CKK)

    # Re-layout PyTorch parameters for the kernel.
    w1m = w1.reshape(OC1, CKK).T                              # (CKK, OC1)
    w1p = jnp.zeros((CKK, OCP), jnp.float32).at[:, :OC1].set(w1m)
    b1p = jnp.zeros((1, OCP), jnp.float32).at[0, :OC1].set(b1)
    # conv2 weights stay COMPACT along Cin (OC1P rows, ~5x less DMA than a
    # full (K*K, OCP, OCP) slab); rows are zero-extended inside the kernel.
    w2k = jnp.transpose(w2, (2, 3, 1, 0)).reshape(K * K, OC1, OC2)
    w2c = jnp.zeros((K * K, OC1P, OCP), jnp.float32).at[:, :OC1, :OC2].set(w2k)
    b2p = jnp.zeros((1, OCP), jnp.float32).at[0, :OC2].set(b2)

    kernel = functools.partial(_conv_relu_x2_kernel, K=K, SPW=SPW)
    out2d = pl.pallas_call(
        kernel,
        out_shape=jax.ShapeDtypeStruct((N * TAP_ROWS, OCP), jnp.float32),
        grid=(N,),
        in_specs=[
            pl.BlockSpec((M1, CKK), lambda n: (n, 0)),            # per-image patches
            pl.BlockSpec((CKK, OCP), lambda n: (0, 0)),           # w1 (constant)
            pl.BlockSpec((1, OCP), lambda n: (0, 0)),             # b1 (constant)
            pl.BlockSpec((K * K, OC1P, OCP), lambda n: (0, 0, 0)),  # w2 (constant)
            pl.BlockSpec((1, OCP), lambda n: (0, 0)),             # b2 (constant)
        ],
        out_specs=pl.BlockSpec((TAP_ROWS, OCP), lambda n: (n, 0)),
        scratch_shapes=[pltpu.VMEM((M1 + SLACK, OCP), jnp.float32)],
        compiler_params=pltpu.CompilerParams(
            dimension_semantics=("parallel",)),                   # dual-TC on v7x
    )(p1, w1p, b1p, w2c, b2p)

    # Channel-last / width-padded inside the kernel; single slice + transpose
    # back to PyTorch's NCHW at the end (fused by XLA under jit).
    out = out2d.reshape(N, OH2, SPW, OCP)[:, :, :OW2, :OC2]
    return out.transpose(0, 3, 1, 2)


def sequential_forward(x, params):
    """Sequential(Conv2d, ReLU, Conv2d, ReLU).forward(x)."""
    (w1, b1), (w2, b2) = params
    return _conv_conv_pallas(x, w1, b1, w2, b2)


# ----------------------------- reference (XLA) ----------------------------- #
def _ref_forward(x, params):
    out = x
    for w, b in params:
        out = jax.lax.conv_general_dilated(
            out, w, window_strides=(1, 1), padding="VALID",
            dimension_numbers=("NCHW", "OIHW", "NCHW"))
        out = jnp.maximum(out + b[None, :, None, None], 0.0)
    return out


if __name__ == "__main__":
    key = jax.random.PRNGKey(0)
    k_x, k_w1, k_b1, k_w2, k_b2 = jax.random.split(key, 5)

    # batch=2, in_channels=1, spatial=16x16 (canonical Conv2d(1,20,5) stack).
    x = jax.random.normal(k_x, (2, 1, 16, 16), dtype=jnp.float32)
    w1 = 0.1 * jax.random.normal(k_w1, (20, 1, 5, 5), dtype=jnp.float32)
    b1 = 0.1 * jax.random.normal(k_b1, (20,), dtype=jnp.float32)
    w2 = 0.05 * jax.random.normal(k_w2, (64, 20, 5, 5), dtype=jnp.float32)
    b2 = 0.05 * jax.random.normal(k_b2, (64,), dtype=jnp.float32)
    params = ((w1, b1), (w2, b2))

    fwd = jax.jit(functools.partial(sequential_forward, params=params))
    out = fwd(x)
    jax.block_until_ready(out)

    ref = _ref_forward(x, params)
    assert out.shape == (2, 64, 8, 8), out.shape
    assert jnp.allclose(out, ref, atol=1e-4, rtol=1e-4), "mismatch vs XLA conv reference"

    print("KERNEL_OK")
</pallas_src>

<mosaic_0001>
module attributes {stable_mosaic.version = 11 : i64} {
  func.func @_conv_relu_x2_kernel(%arg0: i32, %arg1: memref<192x25xf32, #tpu.memory_space<vmem>>, %arg2: memref<25x128xf32, #tpu.memory_space<vmem>>, %arg3: memref<1x128xf32, #tpu.memory_space<vmem>>, %arg4: memref<25x24x128xf32, #tpu.memory_space<vmem>>, %arg5: memref<1x128xf32, #tpu.memory_space<vmem>>, %arg6: memref<128x128xf32, #tpu.memory_space<vmem>>, %arg7: memref<200x128xf32, #tpu.memory_space<vmem>>) attributes {dimension_semantics = [#tpu.dimension_semantics<parallel>], iteration_bounds = array<i64: 2>, scalar_prefetch = 0 : i64, scratch_operands = 1 : i64, tpu.core_type = #tpu.core_type<tc>, window_params = [{transform_indices = @transform_0, window_bounds = array<i64: 192, 25>}, {pipeline_mode = #tpu.pipeline_mode<synchronous>, transform_indices = @transform_1, window_bounds = array<i64: 25, 128>}, {pipeline_mode = #tpu.pipeline_mode<synchronous>, transform_indices = @transform_2, window_bounds = array<i64: 1, 128>}, {pipeline_mode = #tpu.pipeline_mode<synchronous>, transform_indices = @transform_3, window_bounds = array<i64: 25, 24, 128>}, {pipeline_mode = #tpu.pipeline_mode<synchronous>, transform_indices = @transform_4, window_bounds = array<i64: 1, 128>}, {transform_indices = @transform_5, window_bounds = array<i64: 128, 128>}]} {
    %c0 = arith.constant 0 : index
    %c0_0 = arith.constant 0 : index
    %0 = vector.load %arg1[%c0, %c0_0] : memref<192x25xf32, #tpu.memory_space<vmem>>, vector<192x25xf32>
    %c0_1 = arith.constant 0 : index
    %c0_2 = arith.constant 0 : index
    %1 = vector.load %arg2[%c0_1, %c0_2] : memref<25x128xf32, #tpu.memory_space<vmem>>, vector<25x128xf32>
    %cst = arith.constant dense<0.000000e+00> : vector<192x128xf32>
    %2 = tpu.matmul %0, %1, %cst {dimension_numbers = #tpu.dot_dimension_numbers<[1], [0], [0], [1], [0, 0, 1, 1], [], []>} : vector<192x25xf32>, vector<25x128xf32>, vector<192x128xf32> -> vector<192x128xf32>
    %c0_3 = arith.constant 0 : index
    %c0_4 = arith.constant 0 : index
    %3 = vector.load %arg3[%c0_3, %c0_4] : memref<1x128xf32, #tpu.memory_space<vmem>>, vector<1x128xf32>
    %4 = vector.broadcast %3 : vector<1x128xf32> to vector<192x128xf32>
    %5 = arith.addf %2, %4 : vector<192x128xf32>
    %cst_5 = arith.constant 0.000000e+00 : f32
    %6 = vector.broadcast %cst_5 : f32 to vector<192x128xf32>
    %7 = arith.maximumf %5, %6 : vector<192x128xf32>
    %c0_6 = arith.constant 0 : index
    %c0_7 = arith.constant 0 : index
    %8 = vector.load %arg7[%c0_6, %c0_7] : memref<200x128xf32, #tpu.memory_space<vmem>>, vector<192x128xf32>
    tpu.vector_store %arg7[%c0_6, %c0_7], %7 {strides = array<i32>} : memref<200x128xf32, #tpu.memory_space<vmem>>, vector<192x128xf32>,
    %cst_8 = arith.constant 0.000000e+00 : f32
    %9 = vector.broadcast %cst_8 : f32 to vector<8x128xf32>
    %c192 = arith.constant 192 : index
    %c0_9 = arith.constant 0 : index
    %10 = vector.load %arg7[%c192, %c0_9] : memref<200x128xf32, #tpu.memory_space<vmem>>, vector<8x128xf32>
    tpu.vector_store %arg7[%c192, %c0_9], %9 {strides = array<i32>} : memref<200x128xf32, #tpu.memory_space<vmem>>, vector<8x128xf32>,
    %cst_10 = arith.constant 0.000000e+00 : f32
    %11 = vector.broadcast %cst_10 : f32 to vector<104x128xf32>
    %cst_11 = arith.constant 0.000000e+00 : f32
    %12 = vector.broadcast %cst_11 : f32 to vector<128x128xf32>
    %c0_12 = arith.constant 0 : index
    %c0_13 = arith.constant 0 : index
    %13 = vector.load %arg7[%c0_12, %c0_13] : memref<200x128xf32, #tpu.memory_space<vmem>>, vector<128x128xf32>
    %c0_14 = arith.constant 0 : index
    %c0_15 = arith.constant 0 : index
    %c0_16 = arith.constant 0 : index
    %14 = vector.load %arg4[%c0_14, %c0_15, %c0_16] : memref<25x24x128xf32, #tpu.memory_space<vmem>>, vector<1x24x128xf32>
    %15 = vector.shape_cast %14 : vector<1x24x128xf32> to vector<24x128xf32>
    %16 = tpu.concatenate %15, %11 in 0 : vector<24x128xf32>, vector<104x128xf32> -> vector<128x128xf32>
    %cst_17 = arith.constant dense<0.000000e+00> : vector<128x128xf32>
    %17 = tpu.matmul %13, %16, %cst_17 {dimension_numbers = #tpu.dot_dimension_numbers<[1], [0], [0], [1], [0, 0, 1, 1], [], []>} : vector<128x128xf32>, vector<128x128xf32>, vector<128x128xf32> -> vector<128x128xf32>
    %18 = arith.addf %12, %17 : vector<128x128xf32>
    %c1 = arith.constant 1 : index
    %c0_18 = arith.constant 0 : index
    %19 = vector.load %arg7[%c1, %c0_18] : memref<200x128xf32, #tpu.memory_space<vmem>>, vector<128x128xf32>
    %c1_19 = arith.constant 1 : index
    %c0_20 = arith.constant 0 : index
    %c0_21 = arith.constant 0 : index
    %20 = vector.load %arg4[%c1_19, %c0_20, %c0_21] : memref<25x24x128xf32, #tpu.memory_space<vmem>>, vector<1x24x128xf32>
    %21 = vector.shape_cast %20 : vector<1x24x128xf32> to vector<24x128xf32>
    %22 = tpu.concatenate %21, %11 in 0 : vector<24x128xf32>, vector<104x128xf32> -> vector<128x128xf32>
    %cst_22 = arith.constant dense<0.000000e+00> : vector<128x128xf32>
    %23 = tpu.matmul %19, %22, %cst_22 {dimension_numbers = #tpu.dot_dimension_numbers<[1], [0], [0], [1], [0, 0, 1, 1], [], []>} : vector<128x128xf32>, vector<128x128xf32>, vector<128x128xf32> -> vector<128x128xf32>
    %24 = arith.addf %18, %23 : vector<128x128xf32>
    %c2 = arith.constant 2 : index
    %c0_23 = arith.constant 0 : index
    %25 = vector.load %arg7[%c2, %c0_23] : memref<200x128xf32, #tpu.memory_space<vmem>>, vector<128x128xf32>
    %c2_24 = arith.constant 2 : index
    %c0_25 = arith.constant 0 : index
    %c0_26 = arith.constant 0 : index
    %26 = vector.load %arg4[%c2_24, %c0_25, %c0_26] : memref<25x24x128xf32, #tpu.memory_space<vmem>>, vector<1x24x128xf32>
    %27 = vector.shape_cast %26 : vector<1x24x128xf32> to vector<24x128xf32>
    %28 = tpu.concatenate %27, %11 in 0 : vector<24x128xf32>, vector<104x128xf32> -> vector<128x128xf32>
    %cst_27 = arith.constant dense<0.000000e+00> : vector<128x128xf32>
    %29 = tpu.matmul %25, %28, %cst_27 {dimension_numbers = #tpu.dot_dimension_numbers<[1], [0], [0], [1], [0, 0, 1, 1], [], []>} : vector<128x128xf32>, vector<128x128xf32>, vector<128x128xf32> -> vector<128x128xf32>
    %30 = arith.addf %24, %29 : vector<128x128xf32>
    %c3 = arith.constant 3 : index
    %c0_28 = arith.constant 0 : index
    %31 = vector.load %arg7[%c3, %c0_28] : memref<200x128xf32, #tpu.memory_space<vmem>>, vector<128x128xf32>
    %c3_29 = arith.constant 3 : index
    %c0_30 = arith.constant 0 : index
    %c0_31 = arith.constant 0 : index
    %32 = vector.load %arg4[%c3_29, %c0_30, %c0_31] : memref<25x24x128xf32, #tpu.memory_space<vmem>>, vector<1x24x128xf32>
    %33 = vector.shape_cast %32 : vector<1x24x128xf32> to vector<24x128xf32>
    %34 = tpu.concatenate %33, %11 in 0 : vector<24x128xf32>, vector<104x128xf32> -> vector<128x128xf32>
    %cst_32 = arith.constant dense<0.000000e+00> : vector<128x128xf32>
    %35 = tpu.matmul %31, %34, %cst_32 {dimension_numbers = #tpu.dot_dimension_numbers<[1], [0], [0], [1], [0, 0, 1, 1], [], []>} : vector<128x128xf32>, vector<128x128xf32>, vector<128x128xf32> -> vector<128x128xf32>
    %36 = arith.addf %30, %35 : vector<128x128xf32>
    %c4 = arith.constant 4 : index
    %c0_33 = arith.constant 0 : index
    %37 = vector.load %arg7[%c4, %c0_33] : memref<200x128xf32, #tpu.memory_space<vmem>>, vector<128x128xf32>
    %c4_34 = arith.constant 4 : index
    %c0_35 = arith.constant 0 : index
    %c0_36 = arith.constant 0 : index
    %38 = vector.load %arg4[%c4_34, %c0_35, %c0_36] : memref<25x24x128xf32, #tpu.memory_space<vmem>>, vector<1x24x128xf32>
    %39 = vector.shape_cast %38 : vector<1x24x128xf32> to vector<24x128xf32>
    %40 = tpu.concatenate %39, %11 in 0 : vector<24x128xf32>, vector<104x128xf32> -> vector<128x128xf32>
    %cst_37 = arith.constant dense<0.000000e+00> : vector<128x128xf32>
    %41 = tpu.matmul %37, %40, %cst_37 {dimension_numbers = #tpu.dot_dimension_numbers<[1], [0], [0], [1], [0, 0, 1, 1], [], []>} : vector<128x128xf32>, vector<128x128xf32>, vector<128x128xf32> -> vector<128x128xf32>
    %42 = arith.addf %36, %41 : vector<128x128xf32>
    %c16 = arith.constant 16 : index
    %c0_38 = arith.constant 0 : index
    %43 = vector.load %arg7[%c16, %c0_38] : memref<200x128xf32, #tpu.memory_space<vmem>>, vector<128x128xf32>
    %c5 = arith.constant 5 : index
    %c0_39 = arith.constant 0 : index
    %c0_40 = arith.constant 0 : index
    %44 = vector.load %arg4[%c5, %c0_39, %c0_40] : memref<25x24x128xf32, #tpu.memory_space<vmem>>, vector<1x24x128xf32>
    %45 = vector.shape_cast %44 : vector<1x24x128xf32> to vector<24x128xf32>
    %46 = tpu.concatenate %45, %11 in 0 : vector<24x128xf32>, vector<104x128xf32> -> vector<128x128xf32>
    %cst_41 = arith.constant dense<0.000000e+00> : vector<128x128xf32>
    %47 = tpu.matmul %43, %46, %cst_41 {dimension_numbers = #tpu.dot_dimension_numbers<[1], [0], [0], [1], [0, 0, 1, 1], [], []>} : vector<128x128xf32>, vector<128x128xf32>, vector<128x128xf32> -> vector<128x128xf32>
    %48 = arith.addf %42, %47 : vector<128x128xf32>
    %c17 = arith.constant 17 : index
    %c0_42 = arith.constant 0 : index
    %49 = vector.load %arg7[%c17, %c0_42] : memref<200x128xf32, #tpu.memory_space<vmem>>, vector<128x128xf32>
    %c6 = arith.constant 6 : index
    %c0_43 = arith.constant 0 : index
    %c0_44 = arith.constant 0 : index
    %50 = vector.load %arg4[%c6, %c0_43, %c0_44] : memref<25x24x128xf32, #tpu.memory_space<vmem>>, vector<1x24x128xf32>
    %51 = vector.shape_cast %50 : vector<1x24x128xf32> to vector<24x128xf32>
    %52 = tpu.concatenate %51, %11 in 0 : vector<24x128xf32>, vector<104x128xf32> -> vector<128x128xf32>
    %cst_45 = arith.constant dense<0.000000e+00> : vector<128x128xf32>
    %53 = tpu.matmul %49, %52, %cst_45 {dimension_numbers = #tpu.dot_dimension_numbers<[1], [0], [0], [1], [0, 0, 1, 1], [], []>} : vector<128x128xf32>, vector<128x128xf32>, vector<128x128xf32> -> vector<128x128xf32>
    %54 = arith.addf %48, %53 : vector<128x128xf32>
    %c18 = arith.constant 18 : index
    %c0_46 = arith.constant 0 : index
    %55 = vector.load %arg7[%c18, %c0_46] : memref<200x128xf32, #tpu.memory_space<vmem>>, vector<128x128xf32>
    %c7 = arith.constant 7 : index
    %c0_47 = arith.constant 0 : index
    %c0_48 = arith.constant 0 : index
    %56 = vector.load %arg4[%c7, %c0_47, %c0_48] : memref<25x24x128xf32, #tpu.memory_space<vmem>>, vector<1x24x128xf32>
    %57 = vector.shape_cast %56 : vector<1x24x128xf32> to vector<24x128xf32>
    %58 = tpu.concatenate %57, %11 in 0 : vector<24x128xf32>, vector<104x128xf32> -> vector<128x128xf32>
    %cst_49 = arith.constant dense<0.000000e+00> : vector<128x128xf32>
    %59 = tpu.matmul %55, %58, %cst_49 {dimension_numbers = #tpu.dot_dimension_numbers<[1], [0], [0], [1], [0, 0, 1, 1], [], []>} : vector<128x128xf32>, vector<128x128xf32>, vector<128x128xf32> -> vector<128x128xf32>
    %60 = arith.addf %54, %59 : vector<128x128xf32>
    %c19 = arith.constant 19 : index
    %c0_50 = arith.constant 0 : index
    %61 = vector.load %arg7[%c19, %c0_50] : memref<200x128xf32, #tpu.memory_space<vmem>>, vector<128x128xf32>
    %c8 = arith.constant 8 : index
    %c0_51 = arith.constant 0 : index
    %c0_52 = arith.constant 0 : index
    %62 = vector.load %arg4[%c8, %c0_51, %c0_52] : memref<25x24x128xf32, #tpu.memory_space<vmem>>, vector<1x24x128xf32>
    %63 = vector.shape_cast %62 : vector<1x24x128xf32> to vector<24x128xf32>
    %64 = tpu.concatenate %63, %11 in 0 : vector<24x128xf32>, vector<104x128xf32> -> vector<128x128xf32>
    %cst_53 = arith.constant dense<0.000000e+00> : vector<128x128xf32>
    %65 = tpu.matmul %61, %64, %cst_53 {dimension_numbers = #tpu.dot_dimension_numbers<[1], [0], [0], [1], [0, 0, 1, 1], [], []>} : vector<128x128xf32>, vector<128x128xf32>, vector<128x128xf32> -> vector<128x128xf32>
    %66 = arith.addf %60, %65 : vector<128x128xf32>
    %c20 = arith.constant 20 : index
    %c0_54 = arith.constant 0 : index
    %67 = vector.load %arg7[%c20, %c0_54] : memref<200x128xf32, #tpu.memory_space<vmem>>, vector<128x128xf32>
    %c9 = arith.constant 9 : index
    %c0_55 = arith.constant 0 : index
    %c0_56 = arith.constant 0 : index
    %68 = vector.load %arg4[%c9, %c0_55, %c0_56] : memref<25x24x128xf32, #tpu.memory_space<vmem>>, vector<1x24x128xf32>
    %69 = vector.shape_cast %68 : vector<1x24x128xf32> to vector<24x128xf32>
    %70 = tpu.concatenate %69, %11 in 0 : vector<24x128xf32>, vector<104x128xf32> -> vector<128x128xf32>
    %cst_57 = arith.constant dense<0.000000e+00> : vector<128x128xf32>
    %71 = tpu.matmul %67, %70, %cst_57 {dimension_numbers = #tpu.dot_dimension_numbers<[1], [0], [0], [1], [0, 0, 1, 1], [], []>} : vector<128x128xf32>, vector<128x128xf32>, vector<128x128xf32> -> vector<128x128xf32>
    %72 = arith.addf %66, %71 : vector<128x128xf32>
    %c32 = arith.constant 32 : index
    %c0_58 = arith.constant 0 : index
    %73 = vector.load %arg7[%c32, %c0_58] : memref<200x128xf32, #tpu.memory_space<vmem>>, vector<128x128xf32>
    %c10 = arith.constant 10 : index
    %c0_59 = arith.constant 0 : index
    %c0_60 = arith.constant 0 : index
    %74 = vector.load %arg4[%c10, %c0_59, %c0_60] : memref<25x24x128xf32, #tpu.memory_space<vmem>>, vector<1x24x128xf32>
    %75 = vector.shape_cast %74 : vector<1x24x128xf32> to vector<24x128xf32>
    %76 = tpu.concatenate %75, %11 in 0 : vector<24x128xf32>, vector<104x128xf32> -> vector<128x128xf32>
    %cst_61 = arith.constant dense<0.000000e+00> : vector<128x128xf32>
    %77 = tpu.matmul %73, %76, %cst_61 {dimension_numbers = #tpu.dot_dimension_numbers<[1], [0], [0], [1], [0, 0, 1, 1], [], []>} : vector<128x128xf32>, vector<128x128xf32>, vector<128x128xf32> -> vector<128x128xf32>
    %78 = arith.addf %72, %77 : vector<128x128xf32>
    %c33 = arith.constant 33 : index
    %c0_62 = arith.constant 0 : index
    %79 = vector.load %arg7[%c33, %c0_62] : memref<200x128xf32, #tpu.memory_space<vmem>>, vector<128x128xf32>
    %c11 = arith.constant 11 : index
    %c0_63 = arith.constant 0 : index
    %c0_64 = arith.constant 0 : index
    %80 = vector.load %arg4[%c11, %c0_63, %c0_64] : memref<25x24x128xf32, #tpu.memory_space<vmem>>, vector<1x24x128xf32>
    %81 = vector.shape_cast %80 : vector<1x24x128xf32> to vector<24x128xf32>
    %82 = tpu.concatenate %81, %11 in 0 : vector<24x128xf32>, vector<104x128xf32> -> vector<128x128xf32>
    %cst_65 = arith.constant dense<0.000000e+00> : vector<128x128xf32>
    %83 = tpu.matmul %79, %82, %cst_65 {dimension_numbers = #tpu.dot_dimension_numbers<[1], [0], [0], [1], [0, 0, 1, 1], [], []>} : vector<128x128xf32>, vector<128x128xf32>, vector<128x128xf32> -> vector<128x128xf32>
    %84 = arith.addf %78, %83 : vector<128x128xf32>
    %c34 = arith.constant 34 : index
    %c0_66 = arith.constant 0 : index
    %85 = vector.load %arg7[%c34, %c0_66] : memref<200x128xf32, #tpu.memory_space<vmem>>, vector<128x128xf32>
    %c12 = arith.constant 12 : index
    %c0_67 = arith.constant 0 : index
    %c0_68 = arith.constant 0 : index
    %86 = vector.load %arg4[%c12, %c0_67, %c0_68] : memref<25x24x128xf32, #tpu.memory_space<vmem>>, vector<1x24x128xf32>
    %87 = vector.shape_cast %86 : vector<1x24x128xf32> to vector<24x128xf32>
    %88 = tpu.concatenate %87, %11 in 0 : vector<24x128xf32>, vector<104x128xf32> -> vector<128x128xf32>
    %cst_69 = arith.constant dense<0.000000e+00> : vector<128x128xf32>
    %89 = tpu.matmul %85, %88, %cst_69 {dimension_numbers = #tpu.dot_dimension_numbers<[1], [0], [0], [1], [0, 0, 1, 1], [], []>} : vector<128x128xf32>, vector<128x128xf32>, vector<128x128xf32> -> vector<128x128xf32>
    %90 = arith.addf %84, %89 : vector<128x128xf32>
    %c35 = arith.constant 35 : index
    %c0_70 = arith.constant 0 : index
    %91 = vector.load %arg7[%c35, %c0_70] : memref<200x128xf32, #tpu.memory_space<vmem>>, vector<128x128xf32>
    %c13 = arith.constant 13 : index
    %c0_71 = arith.constant 0 : index
    %c0_72 = arith.constant 0 : index
    %92 = vector.load %arg4[%c13, %c0_71, %c0_72] : memref<25x24x128xf32, #tpu.memory_space<vmem>>, vector<1x24x128xf32>
    %93 = vector.shape_cast %92 : vector<1x24x128xf32> to vector<24x128xf32>
    %94 = tpu.concatenate %93, %11 in 0 : vector<24x128xf32>, vector<104x128xf32> -> vector<128x128xf32>
    %cst_73 = arith.constant dense<0.000000e+00> : vector<128x128xf32>
    %95 = tpu.matmul %91, %94, %cst_73 {dimension_numbers = #tpu.dot_dimension_numbers<[1], [0], [0], [1], [0, 0, 1, 1], [], []>} : vector<128x128xf32>, vector<128x128xf32>, vector<128x128xf32> -> vector<128x128xf32>
    %96 = arith.addf %90, %95 : vector<128x128xf32>
    %c36 = arith.constant 36 : index
    %c0_74 = arith.constant 0 : index
    %97 = vector.load %arg7[%c36, %c0_74] : memref<200x128xf32, #tpu.memory_space<vmem>>, vector<128x128xf32>
    %c14 = arith.constant 14 : index
    %c0_75 = arith.constant 0 : index
    %c0_76 = arith.constant 0 : index
    %98 = vector.load %arg4[%c14, %c0_75, %c0_76] : memref<25x24x128xf32, #tpu.memory_space<vmem>>, vector<1x24x128xf32>
    %99 = vector.shape_cast %98 : vector<1x24x128xf32> to vector<24x128xf32>
    %100 = tpu.concatenate %99, %11 in 0 : vector<24x128xf32>, vector<104x128xf32> -> vector<128x128xf32>
    %cst_77 = arith.constant dense<0.000000e+00> : vector<128x128xf32>
    %101 = tpu.matmul %97, %100, %cst_77 {dimension_numbers = #tpu.dot_dimension_numbers<[1], [0], [0], [1], [0, 0, 1, 1], [], []>} : vector<128x128xf32>, vector<128x128xf32>, vector<128x128xf32> -> vector<128x128xf32>
    %102 = arith.addf %96, %101 : vector<128x128xf32>
    %c48 = arith.constant 48 : index
    %c0_78 = arith.constant 0 : index
    %103 = vector.load %arg7[%c48, %c0_78] : memref<200x128xf32, #tpu.memory_space<vmem>>, vector<128x128xf32>
    %c15 = arith.constant 15 : index
    %c0_79 = arith.constant 0 : index
    %c0_80 = arith.constant 0 : index
    %104 = vector.load %arg4[%c15, %c0_79, %c0_80] : memref<25x24x128xf32, #tpu.memory_space<vmem>>, vector<1x24x128xf32>
    %105 = vector.shape_cast %104 : vector<1x24x128xf32> to vector<24x128xf32>
    %106 = tpu.concatenate %105, %11 in 0 : vector<24x128xf32>, vector<104x128xf32> -> vector<128x128xf32>
    %cst_81 = arith.constant dense<0.000000e+00> : vector<128x128xf32>
    %107 = tpu.matmul %103, %106, %cst_81 {dimension_numbers = #tpu.dot_dimension_numbers<[1], [0], [0], [1], [0, 0, 1, 1], [], []>} : vector<128x128xf32>, vector<128x128xf32>, vector<128x128xf32> -> vector<128x128xf32>
    %108 = arith.addf %102, %107 : vector<128x128xf32>
    %c49 = arith.constant 49 : index
    %c0_82 = arith.constant 0 : index
    %109 = vector.load %arg7[%c49, %c0_82] : memref<200x128xf32, #tpu.memory_space<vmem>>, vector<128x128xf32>
    %c16_83 = arith.constant 16 : index
    %c0_84 = arith.constant 0 : index
    %c0_85 = arith.constant 0 : index
    %110 = vector.load %arg4[%c16_83, %c0_84, %c0_85] : memref<25x24x128xf32, #tpu.memory_space<vmem>>, vector<1x24x128xf32>
    %111 = vector.shape_cast %110 : vector<1x24x128xf32> to vector<24x128xf32>
    %112 = tpu.concatenate %111, %11 in 0 : vector<24x128xf32>, vector<104x128xf32> -> vector<128x128xf32>
    %cst_86 = arith.constant dense<0.000000e+00> : vector<128x128xf32>
    %113 = tpu.matmul %109, %112, %cst_86 {dimension_numbers = #tpu.dot_dimension_numbers<[1], [0], [0], [1], [0, 0, 1, 1], [], []>} : vector<128x128xf32>, vector<128x128xf32>, vector<128x128xf32> -> vector<128x128xf32>
    %114 = arith.addf %108, %113 : vector<128x128xf32>
    %c50 = arith.constant 50 : index
    %c0_87 = arith.constant 0 : index
    %115 = vector.load %arg7[%c50, %c0_87] : memref<200x128xf32, #tpu.memory_space<vmem>>, vector<128x128xf32>
    %c17_88 = arith.constant 17 : index
    %c0_89 = arith.constant 0 : index
    %c0_90 = arith.constant 0 : index
    %116 = vector.load %arg4[%c17_88, %c0_89, %c0_90] : memref<25x24x128xf32, #tpu.memory_space<vmem>>, vector<1x24x128xf32>
    %117 = vector.shape_cast %116 : vector<1x24x128xf32> to vector<24x128xf32>
    %118 = tpu.concatenate %117, %11 in 0 : vector<24x128xf32>, vector<104x128xf32> -> vector<128x128xf32>
    %cst_91 = arith.constant dense<0.000000e+00> : vector<128x128xf32>
    %119 = tpu.matmul %115, %118, %cst_91 {dimension_numbers = #tpu.dot_dimension_numbers<[1], [0], [0], [1], [0, 0, 1, 1], [], []>} : vector<128x128xf32>, vector<128x128xf32>, vector<128x128xf32> -> vector<128x128xf32>
    %120 = arith.addf %114, %119 : vector<128x128xf32>
    %c51 = arith.constant 51 : index
    %c0_92 = arith.constant 0 : index
    %121 = vector.load %arg7[%c51, %c0_92] : memref<200x128xf32, #tpu.memory_space<vmem>>, vector<128x128xf32>
    %c18_93 = arith.constant 18 : index
    %c0_94 = arith.constant 0 : index
    %c0_95 = arith.constant 0 : index
    %122 = vector.load %arg4[%c18_93, %c0_94, %c0_95] : memref<25x24x128xf32, #tpu.memory_space<vmem>>, vector<1x24x128xf32>
    %123 = vector.shape_cast %122 : vector<1x24x128xf32> to vector<24x128xf32>
    %124 = tpu.concatenate %123, %11 in 0 : vector<24x128xf32>, vector<104x128xf32> -> vector<128x128xf32>
    %cst_96 = arith.constant dense<0.000000e+00> : vector<128x128xf32>
    %125 = tpu.matmul %121, %124, %cst_96 {dimension_numbers = #tpu.dot_dimension_numbers<[1], [0], [0], [1], [0, 0, 1, 1], [], []>} : vector<128x128xf32>, vector<128x128xf32>, vector<128x128xf32> -> vector<128x128xf32>
    %126 = arith.addf %120, %125 : vector<128x128xf32>
    %c52 = arith.constant 52 : index
    %c0_97 = arith.constant 0 : index
    %127 = vector.load %arg7[%c52, %c0_97] : memref<200x128xf32, #tpu.memory_space<vmem>>, vector<128x128xf32>
    %c19_98 = arith.constant 19 : index
    %c0_99 = arith.constant 0 : index
    %c0_100 = arith.constant 0 : index
    %128 = vector.load %arg4[%c19_98, %c0_99, %c0_100] : memref<25x24x128xf32, #tpu.memory_space<vmem>>, vector<1x24x128xf32>
    %129 = vector.shape_cast %128 : vector<1x24x128xf32> to vector<24x128xf32>
    %130 = tpu.concatenate %129, %11 in 0 : vector<24x128xf32>, vector<104x128xf32> -> vector<128x128xf32>
    %cst_101 = arith.constant dense<0.000000e+00> : vector<128x128xf32>
    %131 = tpu.matmul %127, %130, %cst_101 {dimension_numbers = #tpu.dot_dimension_numbers<[1], [0], [0], [1], [0, 0, 1, 1], [], []>} : vector<128x128xf32>, vector<128x128xf32>, vector<128x128xf32> -> vector<128x128xf32>
    %132 = arith.addf %126, %131 : vector<128x128xf32>
    %c64 = arith.constant 64 : index
    %c0_102 = arith.constant 0 : index
    %133 = vector.load %arg7[%c64, %c0_102] : memref<200x128xf32, #tpu.memory_space<vmem>>, vector<128x128xf32>
    %c20_103 = arith.constant 20 : index
    %c0_104 = arith.constant 0 : index
    %c0_105 = arith.constant 0 : index
    %134 = vector.load %arg4[%c20_103, %c0_104, %c0_105] : memref<25x24x128xf32, #tpu.memory_space<vmem>>, vector<1x24x128xf32>
    %135 = vector.shape_cast %134 : vector<1x24x128xf32> to vector<24x128xf32>
    %136 = tpu.concatenate %135, %11 in 0 : vector<24x128xf32>, vector<104x128xf32> -> vector<128x128xf32>
    %cst_106 = arith.constant dense<0.000000e+00> : vector<128x128xf32>
    %137 = tpu.matmul %133, %136, %cst_106 {dimension_numbers = #tpu.dot_dimension_numbers<[1], [0], [0], [1], [0, 0, 1, 1], [], []>} : vector<128x128xf32>, vector<128x128xf32>, vector<128x128xf32> -> vector<128x128xf32>
    %138 = arith.addf %132, %137 : vector<128x128xf32>
    %c65 = arith.constant 65 : index
    %c0_107 = arith.constant 0 : index
    %139 = vector.load %arg7[%c65, %c0_107] : memref<200x128xf32, #tpu.memory_space<vmem>>, vector<128x128xf32>
    %c21 = arith.constant 21 : index
    %c0_108 = arith.constant 0 : index
    %c0_109 = arith.constant 0 : index
    %140 = vector.load %arg4[%c21, %c0_108, %c0_109] : memref<25x24x128xf32, #tpu.memory_space<vmem>>, vector<1x24x128xf32>
    %141 = vector.shape_cast %140 : vector<1x24x128xf32> to vector<24x128xf32>
    %142 = tpu.concatenate %141, %11 in 0 : vector<24x128xf32>, vector<104x128xf32> -> vector<128x128xf32>
    %cst_110 = arith.constant dense<0.000000e+00> : vector<128x128xf32>
    %143 = tpu.matmul %139, %142, %cst_110 {dimension_numbers = #tpu.dot_dimension_numbers<[1], [0], [0], [1], [0, 0, 1, 1], [], []>} : vector<128x128xf32>, vector<128x128xf32>, vector<128x128xf32> -> vector<128x128xf32>
    %144 = arith.addf %138, %143 : vector<128x128xf32>
    %c66 = arith.constant 66 : index
    %c0_111 = arith.constant 0 : index
    %145 = vector.load %arg7[%c66, %c0_111] : memref<200x128xf32, #tpu.memory_space<vmem>>, vector<128x128xf32>
    %c22 = arith.constant 22 : index
    %c0_112 = arith.constant 0 : index
    %c0_113 = arith.constant 0 : index
    %146 = vector.load %arg4[%c22, %c0_112, %c0_113] : memref<25x24x128xf32, #tpu.memory_space<vmem>>, vector<1x24x128xf32>
    %147 = vector.shape_cast %146 : vector<1x24x128xf32> to vector<24x128xf32>
    %148 = tpu.concatenate %147, %11 in 0 : vector<24x128xf32>, vector<104x128xf32> -> vector<128x128xf32>
    %cst_114 = arith.constant dense<0.000000e+00> : vector<128x128xf32>
    %149 = tpu.matmul %145, %148, %cst_114 {dimension_numbers = #tpu.dot_dimension_numbers<[1], [0], [0], [1], [0, 0, 1, 1], [], []>} : vector<128x128xf32>, vector<128x128xf32>, vector<128x128xf32> -> vector<128x128xf32>
    %150 = arith.addf %144, %149 : vector<128x128xf32>
    %c67 = arith.constant 67 : index
    %c0_115 = arith.constant 0 : index
    %151 = vector.load %arg7[%c67, %c0_115] : memref<200x128xf32, #tpu.memory_space<vmem>>, vector<128x128xf32>
    %c23 = arith.constant 23 : index
    %c0_116 = arith.constant 0 : index
    %c0_117 = arith.constant 0 : index
    %152 = vector.load %arg4[%c23, %c0_116, %c0_117] : memref<25x24x128xf32, #tpu.memory_space<vmem>>, vector<1x24x128xf32>
    %153 = vector.shape_cast %152 : vector<1x24x128xf32> to vector<24x128xf32>
    %154 = tpu.concatenate %153, %11 in 0 : vector<24x128xf32>, vector<104x128xf32> -> vector<128x128xf32>
    %cst_118 = arith.constant dense<0.000000e+00> : vector<128x128xf32>
    %155 = tpu.matmul %151, %154, %cst_118 {dimension_numbers = #tpu.dot_dimension_numbers<[1], [0], [0], [1], [0, 0, 1, 1], [], []>} : vector<128x128xf32>, vector<128x128xf32>, vector<128x128xf32> -> vector<128x128xf32>
    %156 = arith.addf %150, %155 : vector<128x128xf32>
    %c68 = arith.constant 68 : index
    %c0_119 = arith.constant 0 : index
    %157 = vector.load %arg7[%c68, %c0_119] : memref<200x128xf32, #tpu.memory_space<vmem>>, vector<128x128xf32>
    %c24 = arith.constant 24 : index
    %c0_120 = arith.constant 0 : index
    %c0_121 = arith.constant 0 : index
    %158 = vector.load %arg4[%c24, %c0_120, %c0_121] : memref<25x24x128xf32, #tpu.memory_space<vmem>>, vector<1x24x128xf32>
    %159 = vector.shape_cast %158 : vector<1x24x128xf32> to vector<24x128xf32>
    %160 = tpu.concatenate %159, %11 in 0 : vector<24x128xf32>, vector<104x128xf32> -> vector<128x128xf32>
    %cst_122 = arith.constant dense<0.000000e+00> : vector<128x128xf32>
    %161 = tpu.matmul %157, %160, %cst_122 {dimension_numbers = #tpu.dot_dimension_numbers<[1], [0], [0], [1], [0, 0, 1, 1], [], []>} : vector<128x128xf32>, vector<128x128xf32>, vector<128x128xf32> -> vector<128x128xf32>
    %162 = arith.addf %156, %161 : vector<128x128xf32>
    %c0_123 = arith.constant 0 : index
    %c0_124 = arith.constant 0 : index
    %163 = vector.load %arg5[%c0_123, %c0_124] : memref<1x128xf32, #tpu.memory_space<vmem>>, vector<1x128xf32>
    %164 = vector.broadcast %163 : vector<1x128xf32> to vector<128x128xf32>
    %165 = arith.addf %162, %164 : vector<128x128xf32>
    %cst_125 = arith.constant 0.000000e+00 : f32
    %166 = vector.broadcast %cst_125 : f32 to vector<128x128xf32>
    %167 = arith.maximumf %165, %166 : vector<128x128xf32>
    %c0_126 = arith.constant 0 : index
    %c0_127 = arith.constant 0 : index
    %168 = vector.load %arg6[%c0_126, %c0_127] : memref<128x128xf32, #tpu.memory_space<vmem>>, vector<128x128xf32>
    tpu.vector_store %arg6[%c0_126, %c0_127], %167 {strides = array<i32>} : memref<128x128xf32, #tpu.memory_space<vmem>>, vector<128x128xf32>,
    return
  }
  func.func @transform_0(%arg0: i32) -> (i32, i32) {
    %c0_i32 = arith.constant 0 : i32
    %c0_i32_0 = arith.constant 0 : i32
    return %arg0, %c0_i32 : i32, i32
  }
  func.func @transform_1(%arg0: i32) -> (i32, i32) {
    %c0_i32 = arith.constant 0 : i32
    %c0_i32_0 = arith.constant 0 : i32
    %c0_i32_1 = arith.constant 0 : i32
    return %c0_i32, %c0_i32_0 : i32, i32
  }
  func.func @transform_2(%arg0: i32) -> (i32, i32) {
    %c0_i32 = arith.constant 0 : i32
    %c0_i32_0 = arith.constant 0 : i32
    %c0_i32_1 = arith.constant 0 : i32
    return %c0_i32, %c0_i32_0 : i32, i32
  }
  func.func @transform_3(%arg0: i32) -> (i32, i32, i32) {
    %c0_i32 = arith.constant 0 : i32
    %c0_i32_0 = arith.constant 0 : i32
    %c0_i32_1 = arith.constant 0 : i32
    %c0_i32_2 = arith.constant 0 : i32
    return %c0_i32, %c0_i32_0, %c0_i32_1 : i32, i32, i32
  }
  func.func @transform_4(%arg0: i32) -> (i32, i32) {
    %c0_i32 = arith.constant 0 : i32
    %c0_i32_0 = arith.constant 0 : i32
    %c0_i32_1 = arith.constant 0 : i32
    return %c0_i32, %c0_i32_0 : i32, i32
  }
  func.func @transform_5(%arg0: i32) -> (i32, i32) {
    %c0_i32 = arith.constant 0 : i32
    %c0_i32_0 = arith.constant 0 : i32
    return %arg0, %c0_i32 : i32, i32
  }
}

</mosaic_0001>

<llo_original>
// kernel: sequential_forward.1
$region0: #{sequential_forward.1}
  #allocation0 [shape = 'u32[]', space=smem, size = 0x4, offset = 0x4, fixed_abs, tag = 'smem constant byte address 0x4 - core index']
  #allocation1 [shape = 'u32[144,128]{1,0:T(1,128)}', space=vmem, size = 0x12000, scoped, tag = 'internal scratch']
  #allocation2 [shape = 'f32[200,128]{1,0:T(8,128)}', space=vmem, size = 0x19000, scoped, tag = 'scratch operand']
  %s0 = inlined_call_operand.vmem [shape: f32[384,25], index: 0, kind: input, shape index: {}]
  %s1 = inlined_call_operand.vmem [shape: f32[25,128], index: 1, kind: input, shape index: {}]
  %s2 = inlined_call_operand.vmem [shape: f32[1,128], index: 2, kind: input, shape index: {}]
  %s3 = inlined_call_operand.vmem [shape: f32[25,24,128], index: 3, kind: input, shape index: {}]
  %s4 = inlined_call_operand.vmem [shape: f32[1,128], index: 4, kind: input, shape index: {}]
  %s5 = inlined_call_operand.vmem [shape: f32[256,128], index: 5, kind: output, shape index: {}]
  %s6 = sld [smem:[#allocation0]]
  $region53: #{sequential_forward.1} parent=0
    _
  %s8 = ssub.s32 1, %s6
  %s9 = scalar_select 0, %s8, %s6
  loop: start=0, step=1, limit=4
  $region2: #{sequential_forward.1} parent=0 // loop_pre_header
    _
  $region3: #{sequential_forward.1} parent=0 // loop_header
    %s11 = sphi 0, %s15
    %p12 = scmp.ge.s32.totalorder %s11, 4
    %s21 = sphi 0, %s23
    %s24 = sphi 0, %s21
    %s25 = sphi 0, %s24
    %s41 = sphi 0, %s25
    %s45 = sphi 0, %s45
    %s47 = sphi 0, %s45
    %s48 = sphi 0, %s47
    %s62 = sphi 0, %s48
    %s66 = sphi 0, %s66
    %s68 = sphi 0, %s66
    %s69 = sphi 0, %s68
    %s83 = sphi 0, %s69
    %s87 = sphi 0, %s87
    %s89 = sphi 0, %s87
    %s90 = sphi 0, %s89
    %s104 = sphi 0, %s90
    %s108 = sphi 0, %s108
    %s110 = sphi 0, %s108
    %s111 = sphi 0, %s110
    %s125 = sphi 0, %s111
    %s131 = sphi 0, %s133
    %s134 = sphi 0, %s131
    %s135 = sphi 0, %s134
    %s151 = sphi 0, %s135
  $region4: #{sequential_forward.1} parent=0 // loop_header_branch
    %14 = sbr.rel (%p12) target = $region8
  $region5: #{sequential_forward.1} parent=0 // loop_body
    %s16 = ssub.s32 %s11, 1
    %s17 = ssub.s32 %s11, 2
    %s18 = sadd.s32 %s11, 1
    %s19 = ssub.s32 %s11, %s18
    %p20 = scmp.eq.s32.totalorder %s19, 0
    %s22 = sadd.s32 %s21, 1
    %s23 = scalar_select %p20, %s21, %s22
    %p26 = pneg %p20
    %p27 = scmp.eq.s32.totalorder %s11, 1
    %p28 = por %p26, %p27
    %p29 = scmp.ne.s32.totalorder %s21, %s24
    %p30 = scmp.eq.s32.totalorder %s11, 0
    %p31 = por %p29, %p30
    %p32 = scmp.ne.s32.totalorder %s21, %s24
    %p33 = scmp.eq.s32.totalorder %s16, 1
    %p34 = por %p32, %p33
    %p35 = scmp.ne.s32.totalorder %s24, %s25
    %p36 = scmp.eq.s32.totalorder %s16, 0
    %p37 = por %p35, %p36
    %p38 = scmp.ne.s32.totalorder %s24, %s25
    %p39 = scmp.eq.s32.totalorder %s17, 1
    %p40 = por %p38, %p39
    %p42 = scmp.ne.s32.totalorder %s25, %s41
    %p43 = scmp.eq.s32.totalorder %s17, 0
    %p44 = por %p42, %p43
    %s46 = sadd.s32 %s45, 1
    %p49 = scmp.eq.s32.totalorder %s11, 1
    %p50 = scmp.ne.s32.totalorder %s45, %s47
    %p51 = scmp.eq.s32.totalorder %s11, 0
    %p52 = por %p50, %p51
    %p53 = scmp.ne.s32.totalorder %s45, %s47
    %p54 = scmp.eq.s32.totalorder %s16, 1
    %p55 = por %p53, %p54
    %p56 = scmp.ne.s32.totalorder %s47, %s48
    %p57 = scmp.eq.s32.totalorder %s16, 0
    %p58 = por %p56, %p57
    %p59 = scmp.ne.s32.totalorder %s47, %s48
    %p60 = scmp.eq.s32.totalorder %s17, 1
    %p61 = por %p59, %p60
    %p63 = scmp.ne.s32.totalorder %s48, %s62
    %p64 = scmp.eq.s32.totalorder %s17, 0
    %p65 = por %p63, %p64
    %s67 = sadd.s32 %s66, 1
    %p70 = scmp.eq.s32.totalorder %s11, 1
    %p71 = scmp.ne.s32.totalorder %s66, %s68
    %p72 = scmp.eq.s32.totalorder %s11, 0
    %p73 = por %p71, %p72
    %p74 = scmp.ne.s32.totalorder %s66, %s68
    %p75 = scmp.eq.s32.totalorder %s16, 1
    %p76 = por %p74, %p75
    %p77 = scmp.ne.s32.totalorder %s68, %s69
    %p78 = scmp.eq.s32.totalorder %s16, 0
    %p79 = por %p77, %p78
    %p80 = scmp.ne.s32.totalorder %s68, %s69
    %p81 = scmp.eq.s32.totalorder %s17, 1
    %p82 = por %p80, %p81
    %p84 = scmp.ne.s32.totalorder %s69, %s83
    %p85 = scmp.eq.s32.totalorder %s17, 0
    %p86 = por %p84, %p85
    %s88 = sadd.s32 %s87, 1
    %p91 = scmp.eq.s32.totalorder %s11, 1
    %p92 = scmp.ne.s32.totalorder %s87, %s89
    %p93 = scmp.eq.s32.totalorder %s11, 0
    %p94 = por %p92, %p93
    %p95 = scmp.ne.s32.totalorder %s87, %s89
    %p96 = scmp.eq.s32.totalorder %s16, 1
    %p97 = por %p95, %p96
    %p98 = scmp.ne.s32.totalorder %s89, %s90
    %p99 = scmp.eq.s32.totalorder %s16, 0
    %p100 = por %p98, %p99
    %p101 = scmp.ne.s32.totalorder %s89, %s90
    %p102 = scmp.eq.s32.totalorder %s17, 1
    %p103 = por %p101, %p102
    %p105 = scmp.ne.s32.totalorder %s90, %s104
    %p106 = scmp.eq.s32.totalorder %s17, 0
    %p107 = por %p105, %p106
    %s109 = sadd.s32 %s108, 1
    %p112 = scmp.eq.s32.totalorder %s11, 1
    %p113 = scmp.ne.s32.totalorder %s108, %s110
    %p114 = scmp.eq.s32.totalorder %s11, 0
    %p115 = por %p113, %p114
    %p116 = scmp.ne.s32.totalorder %s108, %s110
    %p117 = scmp.eq.s32.totalorder %s16, 1
    %p118 = por %p116, %p117
    %p119 = scmp.ne.s32.totalorder %s110, %s111
    %p120 = scmp.eq.s32.totalorder %s16, 0
    %p121 = por %p119, %p120
    %p122 = scmp.ne.s32.totalorder %s110, %s111
    %p123 = scmp.eq.s32.totalorder %s17, 1
    %p124 = por %p122, %p123
    %p126 = scmp.ne.s32.totalorder %s111, %s125
    %p127 = scmp.eq.s32.totalorder %s17, 0
    %p128 = por %p126, %p127
    %s129 = ssub.s32 %s11, %s18
    %p130 = scmp.eq.s32.totalorder %s129, 0
    %s132 = sadd.s32 %s131, 1
    %s133 = scalar_select %p130, %s131, %s132
    %p136 = pneg %p130
    %p137 = scmp.eq.s32.totalorder %s11, 1
    %p138 = por %p136, %p137
    %p139 = scmp.ne.s32.totalorder %s131, %s134
    %p140 = scmp.eq.s32.totalorder %s11, 0
    %p141 = por %p139, %p140
    %p142 = scmp.ne.s32.totalorder %s131, %s134
    %p143 = scmp.eq.s32.totalorder %s16, 1
    %p144 = por %p142, %p143
    %p145 = scmp.ne.s32.totalorder %s134, %s135
    %p146 = scmp.eq.s32.totalorder %s16, 0
    %p147 = por %p145, %p146
    %p148 = scmp.ne.s32.totalorder %s134, %s135
    %p149 = scmp.eq.s32.totalorder %s17, 1
    %p150 = por %p148, %p149
    %p152 = scmp.ne.s32.totalorder %s135, %s151
    %p153 = scmp.eq.s32.totalorder %s17, 0
    %p154 = por %p152, %p153
    %p155 = scmp.le.s32.totalorder 1, %s11
    %p156 = scmp.lt.s32.totalorder %s11, 3
    %p157 = pnand %p155, %p156
    %p158 = pneg %p157
    // Predicated region
    $region9: #{sequential_forward.1} parent=5 // pred_check
      _
    $region10: #{sequential_forward.1} parent=5 // pred_check_branch
      %160 = sbr.rel (%p157) target = $region12
    $region11: #{sequential_forward.1} parent=5 // pred_region
      %s161 = ssub.s32 %s11, 1
      // Predicated region
      $region13: #{sequential_forward.1} parent=11 // pred_check
        %p162 = pneg %p58
      $region14: #{sequential_forward.1} parent=11 // pred_check_branch
        %164 = sbr.rel (%p162) target = $region16
      $region15: #{sequential_forward.1} parent=11 // pred_region
        _
      $region16: #{sequential_forward.1} parent=11 // pred_fallthru
        _
      // Predicated region
      $region17: #{sequential_forward.1} parent=11 // pred_check
        %p165 = pneg %p79
      $region18: #{sequential_forward.1} parent=11 // pred_check_branch
        %167 = sbr.rel (%p165) target = $region20
      $region19: #{sequential_forward.1} parent=11 // pred_region
        _
      $region20: #{sequential_forward.1} parent=11 // pred_fallthru
        _
      // Predicated region
      $region21: #{sequential_forward.1} parent=11 // pred_check
        %p168 = pneg %p100
      $region22: #{sequential_forward.1} parent=11 // pred_check_branch
        %170 = sbr.rel (%p168) target = $region24
      $region23: #{sequential_forward.1} parent=11 // pred_region
        _
      $region24: #{sequential_forward.1} parent=11 // pred_fallthru
        _
      // Predicated region
      $region25: #{sequential_forward.1} parent=11 // pred_check
        %p171 = pneg %p121
      $region26: #{sequential_forward.1} parent=11 // pred_check_branch
        %173 = sbr.rel (%p171) target = $region28
      $region27: #{sequential_forward.1} parent=11 // pred_region
        _
      $region28: #{sequential_forward.1} parent=11 // pred_fallthru
        _
    $region12: #{sequential_forward.1} parent=5 // pred_fallthru
      _
    %p174 = scmp.lt.s32.totalorder %s11, 2
    // Predicated region
    $region29: #{sequential_forward.1} parent=5 // pred_check
      %p175 = pneg %p174
    $region30: #{sequential_forward.1} parent=5 // pred_check_branch
      %177 = sbr.rel (%p175) target = $region32
    $region31: #{sequential_forward.1} parent=5 // pred_region
      // Predicated region
      $region33: #{sequential_forward.1} parent=31 // pred_check
        %p178 = pneg %p31
      $region34: #{sequential_forward.1} parent=31 // pred_check_branch
        %180 = sbr.rel (%p178) target = $region36
      $region35: #{sequential_forward.1} parent=31 // pred_region
        %s181 = smul.u32 24, %s11
        %p182 = scmp.lt.s32.totalorder %s181, 47
        %s183 = scalar_select %p182, %s181, 47
        %s184 = smul.addr %s183, 8
        %s185 = scalar_lea.vmem %s0, %s184
        %s186 = smul.u32 24, %s11
      $region36: #{sequential_forward.1} parent=31 // pred_fallthru
        _
    $region32: #{sequential_forward.1} parent=5 // pred_fallthru
      _
    %p187 = scmp.le.s32.totalorder 1, %s11
    %p188 = scmp.lt.s32.totalorder %s11, 3
    %p189 = pnand %p187, %p188
    %p190 = pneg %p189
    // Predicated region
    $region37: #{sequential_forward.1} parent=5 // pred_check
      _
    $region38: #{sequential_forward.1} parent=5 // pred_check_branch
      %192 = sbr.rel (%p189) target = $region40
    $region39: #{sequential_forward.1} parent=5 // pred_region
      %s193 = ssub.s32 %s11, 1
      %s194 = smul.u32 24, %s16
      %p195 = scmp.lt.s32.totalorder %s194, 47
      %s196 = scalar_select %p195, %s194, 47
      %s197 = smul.addr %s196, 8
      %s198 = scalar_lea.vmem %s0, %s197
      %p199 = pneg %p37
      %p200 = pneg %p34
      %p201 = pneg %p58
      %p202 = pneg %p55
      %p203 = pneg %p79
      %p204 = pneg %p76
      %p205 = pneg %p100
      %p206 = pneg %p97
      %p207 = pneg %p121
      %p208 = pneg %p118
      %p209 = pneg %p147
      %p210 = pneg %p144
      %s211 = smul.u32 16, %s16
      %p212 = scmp.lt.s32.totalorder %s211, 31
      %s213 = scalar_select %p212, %s211, 31
      %s214 = smul.addr %s213, 8
      %s215 = scalar_lea.vmem %s5, %s214
      %s216 = smul.u32 24, %s16
      %p217 = scmp.lt.s32.totalorder %s216, 47
      %s218 = scalar_select %p217, %s216, 47
      %s219 = smul.addr %s218, 8
      %s220 = scalar_lea.vmem %s0, %s219
      %s221 = smul.u32 24, %s16
      %s222 = smul.u32 16, %s16
      %p223 = scmp.lt.s32.totalorder %s222, 31
      %s224 = scalar_select %p223, %s222, 31
      %s225 = smul.addr %s224, 8
      %s226 = scalar_lea.vmem %s5, %s225
      %s227 = smul.u32 16, %s16
      %v228 = vld [vmem:[%s220] sm:$0xff]
      %v229 = vld [vmem:[%s220 + $0x8] sm:$0xff]
      %v230 = vld [vmem:[%s220 + $0x10] sm:$0xff]
      %v231 = vld [vmem:[%s220 + $0x18] sm:$0xff]
      %v232 = vld [vmem:[%s220 + $0x20] sm:$0xff]
      %v233 = vld [vmem:[%s220 + $0x28] sm:$0xff]
      %v234 = vld [vmem:[%s220 + $0x30] sm:$0xff]
      %v235 = vld [vmem:[%s220 + $0x38] sm:$0xff]
      %v236 = vld [vmem:[%s220 + $0x40] sm:$0xff]
      %v237 = vld [vmem:[%s220 + $0x48] sm:$0xff]
      %v238 = vld [vmem:[%s220 + $0x50] sm:$0xff]
      %v239 = vld [vmem:[%s220 + $0x58] sm:$0xff]
      %v240 = vld [vmem:[%s220 + $0x60] sm:$0xff]
      %v241 = vld [vmem:[%s220 + $0x68] sm:$0xff]
      %v242 = vld [vmem:[%s220 + $0x70] sm:$0xff]
      %v243 = vld [vmem:[%s220 + $0x78] sm:$0xff]
      %v244 = vld [vmem:[%s220 + $0x80] sm:$0xff]
      %v245 = vld [vmem:[%s220 + $0x88] sm:$0xff]
      %v246 = vld [vmem:[%s220 + $0x90] sm:$0xff]
      %v247 = vld [vmem:[%s220 + $0x98] sm:$0xff]
      %v248 = vld [vmem:[%s220 + $0xa0] sm:$0xff]
      %v249 = vld [vmem:[%s220 + $0xa8] sm:$0xff]
      %v250 = vld [vmem:[%s220 + $0xb0] sm:$0xff]
      %v251 = vld [vmem:[%s220 + $0xb8] sm:$0xff]
      %v252 = vld [vmem:[%s1] sm:$0xff]
      %v253 = vld [vmem:[%s1 + $0x8] sm:$0xff]
      %v254 = vld [vmem:[%s1 + $0x10] sm:$0xff]
      %v255 = vld [vmem:[%s1 + $0x18] sm:$0x1]
      %v256 = vld [vmem:[%s2] sm:$0x1]
      %v258 = vlaneseq
      %v259 = vshrl.u32 %v258, 7
      %v260 = vsub.s32 0, %v259
      %v261 = vrot.slane %v256, %v260
      %vm263 = vcmask 203776
      %v265 = vsel %vm263, %v228, 0
      %v268 = vsel %vm263, %v229, 0
      %v271 = vsel %vm263, %v230, 0
      %v274 = vsel %vm263, %v231, 0
      %v277 = vsel %vm263, %v232, 0
      %v280 = vsel %vm263, %v233, 0
      %v283 = vsel %vm263, %v234, 0
      %v286 = vsel %vm263, %v235, 0
      %v289 = vsel %vm263, %v236, 0
      %v292 = vsel %vm263, %v237, 0
      %v295 = vsel %vm263, %v238, 0
      %v298 = vsel %vm263, %v239, 0
      %v301 = vsel %vm263, %v240, 0
      %v304 = vsel %vm263, %v241, 0
      %v307 = vsel %vm263, %v242, 0
      %v310 = vsel %vm263, %v243, 0
      %v313 = vsel %vm263, %v244, 0
      %v316 = vsel %vm263, %v245, 0
      %v319 = vsel %vm263, %v246, 0
      %v322 = vsel %vm263, %v247, 0
      %v325 = vsel %vm263, %v248, 0
      %v328 = vsel %vm263, %v249, 0
      %v331 = vsel %vm263, %v250, 0
      %v334 = vsel %vm263, %v251, 0
      %vm336 = vcmask 1040384
      %v338 = vsel %vm336, %v255, 0
      %340 = vmatprep.subr.mxu0 0.0
      %341 = vmatpush1.msra.mxu0 %v252
      %342 = vmatprep.subr.mxu0 0.0
      %343 = vmatpush1.msra.mxu0 %v253
      %344 = vmatprep.subr.mxu0 0.0
      %345 = vmatpush1.msra.mxu0 %v254
      %346 = vmatprep.subr.mxu0 0.0
      %347 = vmatpush1.msra.mxu0 %v338
      %348 = vmatprep.subr.mxu0 0.0
      %349 = vmatpush1.msra.mxu0 0.0
      %350 = vmatprep.subr.mxu0 0.0
      %351 = vmatpush1.msra.mxu0 0.0
      %352 = vmatprep.subr.mxu0 0.0
      %353 = vmatpush1.msra.mxu0 0.0
      %354 = vmatprep.subr.mxu0 0.0
      %355 = vmatpush1.msra.mxu0 0.0
      %356 = vmatprep.subr.mxu0 0.0
      %357 = vmatpush1.msra.mxu0 0.0
      %358 = vmatprep.subr.mxu0 0.0
      %359 = vmatpush1.msra.mxu0 0.0
      %360 = vmatprep.subr.mxu0 0.0
      %361 = vmatpush1.msra.mxu0 0.0
      %362 = vmatprep.subr.mxu0 0.0
      %363 = vmatpush1.msra.mxu0 0.0
      %364 = vmatprep.subr.mxu0 0.0
      %365 = vmatpush1.msra.mxu0 0.0
      %366 = vmatprep.subr.mxu0 0.0
      %367 = vmatpush1.msra.mxu0 0.0
      %368 = vmatprep.subr.mxu0 0.0
      %369 = vmatpush1.msra.mxu0 0.0
      %370 = vmatprep.subr.mxu0 0.0
      %371 = vmatpush1.msra.mxu0 0.0
      %372 = vmatprep.subr.mxu0 0.0
      %373 = vmatpush1.msra.mxu0 0.0
      %374 = vmatprep.subr.mxu0 0.0
      %375 = vmatpush1.msra.mxu0 0.0
      %376 = vmatprep.subr.mxu0 0.0
      %377 = vmatpush1.msra.mxu0 0.0
      %378 = vmatprep.subr.mxu0 0.0
      %379 = vmatpush1.msra.mxu0 0.0
      %380 = vmatprep.subr.mxu0 0.0
      %381 = vmatpush1.msra.mxu0 0.0
      %382 = vmatprep.subr.mxu0 0.0
      %383 = vmatpush1.msra.mxu0 0.0
      %384 = vmatprep.subr.mxu0 0.0
      %385 = vmatpush1.msra.mxu0 0.0
      %386 = vmatprep.subr.mxu0 0.0
      %387 = vmatpush1.msra.mxu0 0.0
      %388 = vmatprep.subr.mxu0 0.0
      %389 = vmatpush1.msra.mxu0 0.0
      %390 = vmatprep.subr.mxu0 0.0
      %391 = vmatpush1.msra.mxu0 0.0
      %392 = vmatprep.subr.mxu0 0.0
      %393 = vmatpush1.msra.mxu0 0.0
      %394 = vmatprep.subr.mxu0 0.0
      %395 = vmatpush1.msra.mxu0 0.0
      %396 = vmatprep.subr.mxu0 0.0
      %397 = vmatpush1.msra.mxu0 0.0
      %398 = vmatprep.subr.mxu0 0.0
      %399 = vmatpush1.msra.mxu0 0.0
      %400 = vmatprep.subr.mxu0 0.0
      %401 = vmatpush1.msra.mxu0 0.0
      %402 = vmatprep.subr.mxu0 0.0
      %403 = vmatpush1.msra.mxu0 0.0
      %404 = vmatprep.mubr.f32.mxu0 0.0
      %405 = vmatmul.mubr.f32.gmra.mrb[0].mxu0 %v265
      %v406 = vpop.f32.mrb[0].mxu0
      %v407 = vadd.f32 %v261, %v406
      %v408 = vpop.f32.mrb[0].mxu0
      %409 = vmatprep.mubr.f32.mxu0 0.0
      %410 = vmatmul.mubr.f32.gmra.mrb[0].mxu0 %v268
      %v411 = vpop.f32.mrb[0].mxu0
      %v412 = vadd.f32 %v261, %v411
      %v413 = vpop.f32.mrb[0].mxu0
      %414 = vmatprep.mubr.f32.mxu0 0.0
      %415 = vmatmul.mubr.f32.gmra.mrb[0].mxu0 %v271
      %v416 = vpop.f32.mrb[0].mxu0
      %v417 = vadd.f32 %v261, %v416
      %v418 = vpop.f32.mrb[0].mxu0
      %419 = vmatprep.mubr.f32.mxu0 0.0
      %420 = vmatmul.mubr.f32.gmra.mrb[0].mxu0 %v274
      %v421 = vpop.f32.mrb[0].mxu0
      %v422 = vadd.f32 %v261, %v421
      %v423 = vpop.f32.mrb[0].mxu0
      %424 = vmatprep.mubr.f32.mxu0 0.0
      %425 = vmatmul.mubr.f32.gmra.mrb[0].mxu0 %v277
      %v426 = vpop.f32.mrb[0].mxu0
      %v427 = vadd.f32 %v261, %v426
      %v428 = vpop.f32.mrb[0].mxu0
      %429 = vmatprep.mubr.f32.mxu0 0.0
      %430 = vmatmul.mubr.f32.gmra.mrb[0].mxu0 %v280
      %v431 = vpop.f32.mrb[0].mxu0
      %v432 = vadd.f32 %v261, %v431
      %v433 = vpop.f32.mrb[0].mxu0
      %434 = vmatprep.mubr.f32.mxu0 0.0
      %435 = vmatmul.mubr.f32.gmra.mrb[0].mxu0 %v283
      %v436 = vpop.f32.mrb[0].mxu0
      %v437 = vadd.f32 %v261, %v436
      %v438 = vpop.f32.mrb[0].mxu0
      %439 = vmatprep.mubr.f32.mxu0 0.0
      %440 = vmatmul.mubr.f32.gmra.mrb[0].mxu0 %v286
      %v441 = vpop.f32.mrb[0].mxu0
      %v442 = vadd.f32 %v261, %v441
      %v443 = vpop.f32.mrb[0].mxu0
      %444 = vmatprep.mubr.f32.mxu0 0.0
      %445 = vmatmul.mubr.f32.gmra.mrb[0].mxu0 %v289
      %v446 = vpop.f32.mrb[0].mxu0
      %v447 = vadd.f32 %v261, %v446
      %v448 = vpop.f32.mrb[0].mxu0
      %449 = vmatprep.mubr.f32.mxu0 0.0
      %450 = vmatmul.mubr.f32.gmra.mrb[0].mxu0 %v292
      %v451 = vpop.f32.mrb[0].mxu0
      %v452 = vadd.f32 %v261, %v451
      %v453 = vpop.f32.mrb[0].mxu0
      %454 = vmatprep.mubr.f32.mxu0 0.0
      %455 = vmatmul.mubr.f32.gmra.mrb[0].mxu0 %v295
      %v456 = vpop.f32.mrb[0].mxu0
      %v457 = vadd.f32 %v261, %v456
      %v458 = vpop.f32.mrb[0].mxu0
      %459 = vmatprep.mubr.f32.mxu0 0.0
      %460 = vmatmul.mubr.f32.gmra.mrb[0].mxu0 %v298
      %v461 = vpop.f32.mrb[0].mxu0
      %v462 = vadd.f32 %v261, %v461
      %v463 = vpop.f32.mrb[0].mxu0
      %464 = vmatprep.mubr.f32.mxu0 0.0
      %465 = vmatmul.mubr.f32.gmra.mrb[0].mxu0 %v301
      %v466 = vpop.f32.mrb[0].mxu0
      %v467 = vadd.f32 %v261, %v466
      %v468 = vpop.f32.mrb[0].mxu0
      %469 = vmatprep.mubr.f32.mxu0 0.0
      %470 = vmatmul.mubr.f32.gmra.mrb[0].mxu0 %v304
      %v471 = vpop.f32.mrb[0].mxu0
      %v472 = vadd.f32 %v261, %v471
      %v473 = vpop.f32.mrb[0].mxu0
      %474 = vmatprep.mubr.f32.mxu0 0.0
      %475 = vmatmul.mubr.f32.gmra.mrb[0].mxu0 %v307
      %v476 = vpop.f32.mrb[0].mxu0
      %v477 = vadd.f32 %v261, %v476
      %v478 = vpop.f32.mrb[0].mxu0
      %479 = vmatprep.mubr.f32.mxu0 0.0
      %480 = vmatmul.mubr.f32.gmra.mrb[0].mxu0 %v310
      %v481 = vpop.f32.mrb[0].mxu0
      %v482 = vadd.f32 %v261, %v481
      %v483 = vpop.f32.mrb[0].mxu0
      %484 = vmatprep.mubr.f32.mxu0 0.0
      %485 = vmatmul.mubr.f32.gmra.mrb[0].mxu0 %v313
      %v486 = vpop.f32.mrb[0].mxu0
      %v487 = vadd.f32 %v261, %v486
      %v488 = vpop.f32.mrb[0].mxu0
      %489 = vmatprep.mubr.f32.mxu0 0.0
      %490 = vmatmul.mubr.f32.gmra.mrb[0].mxu0 %v316
      %v491 = vpop.f32.mrb[0].mxu0
      %v492 = vadd.f32 %v261, %v491
      %v493 = vpop.f32.mrb[0].mxu0
      %494 = vmatprep.mubr.f32.mxu0 0.0
      %495 = vmatmul.mubr.f32.gmra.mrb[0].mxu0 %v319
      %v496 = vpop.f32.mrb[0].mxu0
      %v497 = vadd.f32 %v261, %v496
      %v498 = vpop.f32.mrb[0].mxu0
      %499 = vmatprep.mubr.f32.mxu0 0.0
      %500 = vmatmul.mubr.f32.gmra.mrb[0].mxu0 %v322
      %v501 = vpop.f32.mrb[0].mxu0
      %v502 = vadd.f32 %v261, %v501
      %v503 = vpop.f32.mrb[0].mxu0
      %504 = vmatprep.mubr.f32.mxu0 0.0
      %505 = vmatmul.mubr.f32.gmra.mrb[0].mxu0 %v325
      %v506 = vpop.f32.mrb[0].mxu0
      %v507 = vadd.f32 %v261, %v506
      %v508 = vpop.f32.mrb[0].mxu0
      %509 = vmatprep.mubr.f32.mxu0 0.0
      %510 = vmatmul.mubr.f32.gmra.mrb[0].mxu0 %v328
      %v511 = vpop.f32.mrb[0].mxu0
      %v512 = vadd.f32 %v261, %v511
      %v513 = vpop.f32.mrb[0].mxu0
      %514 = vmatprep.mubr.f32.mxu0 0.0
      %515 = vmatmul.mubr.f32.gmra.mrb[0].mxu0 %v331
      %v516 = vpop.f32.mrb[0].mxu0
      %v517 = vadd.f32 %v261, %v516
      %v518 = vpop.f32.mrb[0].mxu0
      %519 = vmatprep.mubr.f32.mxu0 0.0
      %520 = vmatmul.mubr.f32.gmra.mrb[0].mxu0 %v334
      %v521 = vpop.f32.mrb[0].mxu0
      %v522 = vadd.f32 %v261, %v521
      %v523 = vpop.f32.mrb[0].mxu0
      %524 = vdwg.mxu0
      %v525 = vmax.f32 %v407, 0.0
      %v526 = vmax.f32 %v412, 0.0
      %v527 = vmax.f32 %v417, 0.0
      %v528 = vmax.f32 %v422, 0.0
      %v529 = vmax.f32 %v427, 0.0
      %v530 = vmax.f32 %v432, 0.0
      %v531 = vmax.f32 %v437, 0.0
      %v532 = vmax.f32 %v442, 0.0
      %v533 = vmax.f32 %v447, 0.0
      %v534 = vmax.f32 %v452, 0.0
      %v535 = vmax.f32 %v457, 0.0
      %v536 = vmax.f32 %v462, 0.0
      %v537 = vmax.f32 %v467, 0.0
      %v538 = vmax.f32 %v472, 0.0
      %v539 = vmax.f32 %v477, 0.0
      %v540 = vmax.f32 %v482, 0.0
      %v541 = vmax.f32 %v487, 0.0
      %v542 = vmax.f32 %v492, 0.0
      %v543 = vmax.f32 %v497, 0.0
      %v544 = vmax.f32 %v502, 0.0
      %v545 = vmax.f32 %v507, 0.0
      %v546 = vmax.f32 %v512, 0.0
      %v547 = vmax.f32 %v517, 0.0
      %v548 = vmax.f32 %v522, 0.0
      %549 = vst [vmem:[#allocation2] sm:$0xff] %v525
      %550 = vst [vmem:[#allocation2 + $0x8] sm:$0xff] %v526
      %551 = vst [vmem:[#allocation2 + $0x10] sm:$0xff] %v527
      %552 = vst [vmem:[#allocation2 + $0x18] sm:$0xff] %v528
      %553 = vst [vmem:[#allocation2 + $0x20] sm:$0xff] %v529
      %554 = vst [vmem:[#allocation2 + $0x28] sm:$0xff] %v530
      %555 = vst [vmem:[#allocation2 + $0x30] sm:$0xff] %v531
      %556 = vst [vmem:[#allocation2 + $0x38] sm:$0xff] %v532
      %557 = vst [vmem:[#allocation2 + $0x40] sm:$0xff] %v533
      %558 = vst [vmem:[#allocation2 + $0x48] sm:$0xff] %v534
      %559 = vst [vmem:[#allocation2 + $0x50] sm:$0xff] %v535
      %560 = vst [vmem:[#allocation2 + $0x58] sm:$0xff] %v536
      %561 = vst [vmem:[#allocation2 + $0x60] sm:$0xff] %v537
      %562 = vst [vmem:[#allocation2 + $0x68] sm:$0xff] %v538
      %563 = vst [vmem:[#allocation2 + $0x70] sm:$0xff] %v539
      %564 = vst [vmem:[#allocation2 + $0x78] sm:$0xff] %v540
      %565 = vst [vmem:[#allocation2 + $0x80] sm:$0xff] %v541
      %566 = vst [vmem:[#allocation2 + $0x88] sm:$0xff] %v542
      %567 = vst [vmem:[#allocation2 + $0x90] sm:$0xff] %v543
      %568 = vst [vmem:[#allocation2 + $0x98] sm:$0xff] %v544
      %569 = vst [vmem:[#allocation2 + $0xa0] sm:$0xff] %v545
      %570 = vst [vmem:[#allocation2 + $0xa8] sm:$0xff] %v546
      %571 = vst [vmem:[#allocation2 + $0xb0] sm:$0xff] %v547
      %572 = vst [vmem:[#allocation2 + $0xb8] sm:$0xff] %v548
      %573 = vst [vmem:[#allocation2 + $0xc0] sm:$0xff] 0.0
      %v574 = vld [vmem:[#allocation2] sm:$0xff]
      %v575 = vld [vmem:[#allocation2 + $0x8] sm:$0xff]
      %v576 = vld [vmem:[#allocation2 + $0x10] sm:$0xff]
      %v577 = vld [vmem:[#allocation2 + $0x18] sm:$0xff]
      %v578 = vld [vmem:[#allocation2 + $0x20] sm:$0xff]
      %v579 = vld [vmem:[#allocation2 + $0x28] sm:$0xff]
      %v580 = vld [vmem:[#allocation2 + $0x30] sm:$0xff]
      %v581 = vld [vmem:[#allocation2 + $0x38] sm:$0xff]
      %v582 = vld [vmem:[#allocation2 + $0x40] sm:$0xff]
      %v583 = vld [vmem:[#allocation2 + $0x48] sm:$0xff]
      %v584 = vld [vmem:[#allocation2 + $0x50] sm:$0xff]
      %v585 = vld [vmem:[#allocation2 + $0x58] sm:$0xff]
      %v586 = vld [vmem:[#allocation2 + $0x60] sm:$0xff]
      %v587 = vld [vmem:[#allocation2 + $0x68] sm:$0xff]
      %v588 = vld [vmem:[#allocation2 + $0x70] sm:$0xff]
      %v589 = vld [vmem:[#allocation2 + $0x78] sm:$0xff]
      %v590 = vld [vmem:[%s3] sm:$0xff]
      %v591 = vld [vmem:[%s3 + $0x8] sm:$0xff]
      %v592 = vld [vmem:[%s3 + $0x10] sm:$0xff]
      %v593 = vld [vmem:[#allocation2 + $0x1] sm:$0xff]
      %v594 = vld [vmem:[#allocation2 + $0x9] sm:$0xff]
      %v595 = vld [vmem:[#allocation2 + $0x11] sm:$0xff]
      %v596 = vld [vmem:[#allocation2 + $0x19] sm:$0xff]
      %v597 = vld [vmem:[#allocation2 + $0x21] sm:$0xff]
      %v598 = vld [vmem:[#allocation2 + $0x29] sm:$0xff]
      %v599 = vld [vmem:[#allocation2 + $0x31] sm:$0xff]
      %v600 = vld [vmem:[#allocation2 + $0x39] sm:$0xff]
      %v601 = vld [vmem:[#allocation2 + $0x41] sm:$0xff]
      %v602 = vld [vmem:[#allocation2 + $0x49] sm:$0xff]
      %v603 = vld [vmem:[#allocation2 + $0x51] sm:$0xff]
      %v604 = vld [vmem:[#allocation2 + $0x59] sm:$0xff]
      %v605 = vld [vmem:[#allocation2 + $0x61] sm:$0xff]
      %v606 = vld [vmem:[#allocation2 + $0x69] sm:$0xff]
      %v607 = vld [vmem:[#allocation2 + $0x71] sm:$0xff]
      %v608 = vld [vmem:[#allocation2 + $0x79] sm:$0xff]
      %s609 = scalar_lea.vmem %s3, 24
      %v610 = vld [vmem:[%s609] sm:$0xff]
      %v611 = vld [vmem:[%s609 + $0x8] sm:$0xff]
      %v612 = vld [vmem:[%s609 + $0x10] sm:$0xff]
      %613 = vmatprep.subr.mxu0 0.0
      %614 = vmatpush1.msra.mxu0 %v610
      %615 = vmatprep.subr.mxu0 0.0
      %616 = vmatpush1.msra.mxu0 %v611
      %617 = vmatprep.subr.mxu0 0.0
      %618 = vmatpush1.msra.mxu0 %v612
      %619 = vmatprep.subr.mxu0 0.0
      %620 = vmatpush1.msra.mxu0 0.0
      %621 = vmatprep.subr.mxu0 0.0
      %622 = vmatpush1.msra.mxu0 0.0
      %623 = vmatprep.subr.mxu0 0.0
      %624 = vmatpush1.msra.mxu0 0.0
      %625 = vmatprep.subr.mxu0 0.0
      %626 = vmatpush1.msra.mxu0 0.0
      %627 = vmatprep.subr.mxu0 0.0
      %628 = vmatpush1.msra.mxu0 0.0
      %629 = vmatprep.subr.mxu0 0.0
      %630 = vmatpush1.msra.mxu0 0.0
      %631 = vmatprep.subr.mxu0 0.0
      %632 = vmatpush1.msra.mxu0 0.0
      %633 = vmatprep.subr.mxu0 0.0
      %634 = vmatpush1.msra.mxu0 0.0
      %635 = vmatprep.subr.mxu0 0.0
      %636 = vmatpush1.msra.mxu0 0.0
      %637 = vmatprep.subr.mxu0 0.0
      %638 = vmatpush1.msra.mxu0 0.0
      %639 = vmatprep.subr.mxu0 0.0
      %640 = vmatpush1.msra.mxu0 0.0
      %641 = vmatprep.subr.mxu0 0.0
      %642 = vmatpush1.msra.mxu0 0.0
      %643 = vmatprep.subr.mxu0 0.0
      %644 = vmatpush1.msra.mxu0 0.0
      %645 = vmatprep.subr.mxu0 0.0
      %646 = vmatpush1.msra.mxu0 0.0
      %647 = vmatprep.subr.mxu0 0.0
      %648 = vmatpush1.msra.mxu0 0.0
      %649 = vmatprep.subr.mxu0 0.0
      %650 = vmatpush1.msra.mxu0 0.0
      %651 = vmatprep.subr.mxu0 0.0
      %652 = vmatpush1.msra.mxu0 0.0
      %653 = vmatprep.subr.mxu0 0.0
      %654 = vmatpush1.msra.mxu0 0.0
      %655 = vmatprep.subr.mxu0 0.0
      %656 = vmatpush1.msra.mxu0 0.0
      %657 = vmatprep.subr.mxu0 0.0
      %658 = vmatpush1.msra.mxu0 0.0
      %659 = vmatprep.subr.mxu0 0.0
      %660 = vmatpush1.msra.mxu0 0.0
      %661 = vmatprep.subr.mxu0 0.0
      %662 = vmatpush1.msra.mxu0 0.0
      %663 = vmatprep.subr.mxu0 0.0
      %664 = vmatpush1.msra.mxu0 0.0
      %665 = vmatprep.subr.mxu0 0.0
      %666 = vmatpush1.msra.mxu0 0.0
      %667 = vmatprep.subr.mxu0 0.0
      %668 = vmatpush1.msra.mxu0 0.0
      %669 = vmatprep.subr.mxu0 0.0
      %670 = vmatpush1.msra.mxu0 0.0
      %671 = vmatprep.subr.mxu0 0.0
      %672 = vmatpush1.msra.mxu0 0.0
      %673 = vmatprep.subr.mxu0 0.0
      %674 = vmatpush1.msra.mxu0 0.0
      %675 = vmatprep.subr.mxu0 0.0
      %676 = vmatpush1.msra.mxu0 0.0
      %677 = vmatprep.mubr.f32.mxu0 0.0
      %678 = vmatmul.mubr.f32.gmra.mrb[0].mxu0 %v593
      %v679 = vpop.f32.mrb[0].mxu0
      %v680 = vadd.f32 0.0, %v679
      %v681 = vpop.f32.mrb[0].mxu0
      %682 = vmatprep.mubr.f32.mxu0 0.0
      %683 = vmatmul.mubr.f32.gmra.mrb[0].mxu0 %v594
      %v684 = vpop.f32.mrb[0].mxu0
      %v685 = vadd.f32 0.0, %v684
      %v686 = vpop.f32.mrb[0].mxu0
      %687 = vmatprep.mubr.f32.mxu0 0.0
      %688 = vmatmul.mubr.f32.gmra.mrb[0].mxu0 %v595
      %v689 = vpop.f32.mrb[0].mxu0
      %v690 = vadd.f32 0.0, %v689
      %v691 = vpop.f32.mrb[0].mxu0
      %692 = vmatprep.mubr.f32.mxu0 0.0
      %693 = vmatmul.mubr.f32.gmra.mrb[0].mxu0 %v596
      %v694 = vpop.f32.mrb[0].mxu0
      %v695 = vadd.f32 0.0, %v694
      %v696 = vpop.f32.mrb[0].mxu0
      %697 = vmatprep.mubr.f32.mxu0 0.0
      %698 = vmatmul.mubr.f32.gmra.mrb[0].mxu0 %v597
      %v699 = vpop.f32.mrb[0].mxu0
      %v700 = vadd.f32 0.0, %v699
      %v701 = vpop.f32.mrb[0].mxu0
      %702 = vmatprep.mubr.f32.mxu0 0.0
      %703 = vmatmul.mubr.f32.gmra.mrb[0].mxu0 %v598
      %v704 = vpop.f32.mrb[0].mxu0
      %v705 = vadd.f32 0.0, %v704
      %v706 = vpop.f32.mrb[0].mxu0
      %707 = vmatprep.mubr.f32.mxu0 0.0
      %708 = vmatmul.mubr.f32.gmra.mrb[0].mxu0 %v599
      %v709 = vpop.f32.mrb[0].mxu0
      %v710 = vadd.f32 0.0, %v709
      %v711 = vpop.f32.mrb[0].mxu0
      %712 = vmatprep.mubr.f32.mxu0 0.0
      %713 = vmatmul.mubr.f32.gmra.mrb[0].mxu0 %v600
      %v714 = vpop.f32.mrb[0].mxu0
      %v715 = vadd.f32 0.0, %v714
      %v716 = vpop.f32.mrb[0].mxu0
      %717 = vmatprep.mubr.f32.mxu0 0.0
      %718 = vmatmul.mubr.f32.gmra.mrb[0].mxu0 %v601
      %v719 = vpop.f32.mrb[0].mxu0
      %v720 = vadd.f32 0.0, %v719
      %v721 = vpop.f32.mrb[0].mxu0
      %722 = vmatprep.mubr.f32.mxu0 0.0
      %723 = vmatmul.mubr.f32.gmra.mrb[0].mxu0 %v602
      %v724 = vpop.f32.mrb[0].mxu0
      %v725 = vadd.f32 0.0, %v724
      %v726 = vpop.f32.mrb[0].mxu0
      %727 = vmatprep.mubr.f32.mxu0 0.0
      %728 = vmatmul.mubr.f32.gmra.mrb[0].mxu0 %v603
      %v729 = vpop.f32.mrb[0].mxu0
      %v730 = vadd.f32 0.0, %v729
      %v731 = vpop.f32.mrb[0].mxu0
      %732 = vmatprep.mubr.f32.mxu0 0.0
      %733 = vmatmul.mubr.f32.gmra.mrb[0].mxu0 %v604
      %v734 = vpop.f32.mrb[0].mxu0
      %v735 = vadd.f32 0.0, %v734
      %v736 = vpop.f32.mrb[0].mxu0
      %737 = vmatprep.mubr.f32.mxu0 0.0
      %738 = vmatmul.mubr.f32.gmra.mrb[0].mxu0 %v605
      %v739 = vpop.f32.mrb[0].mxu0
      %v740 = vadd.f32 0.0, %v739
      %v741 = vpop.f32.mrb[0].mxu0
      %742 = vmatprep.mubr.f32.mxu0 0.0
      %743 = vmatmul.mubr.f32.gmra.mrb[0].mxu0 %v606
      %v744 = vpop.f32.mrb[0].mxu0
      %v745 = vadd.f32 0.0, %v744
      %v746 = vpop.f32.mrb[0].mxu0
      %747 = vmatprep.mubr.f32.mxu0 0.0
      %748 = vmatmul.mubr.f32.gmra.mrb[0].mxu0 %v607
      %v749 = vpop.f32.mrb[0].mxu0
      %v750 = vadd.f32 0.0, %v749
      %v751 = vpop.f32.mrb[0].mxu0
      %752 = vmatprep.mubr.f32.mxu0 0.0
      %753 = vmatmul.mubr.f32.gmra.mrb[0].mxu0 %v608
      %v754 = vpop.f32.mrb[0].mxu0
      %v755 = vadd.f32 0.0, %v754
      %v756 = vpop.f32.mrb[0].mxu0
      %757 = vdwg.mxu0
      %758 = vmatprep.subr.mxu0 0.0
      %759 = vmatpush1.msra.mxu0 %v590
      %760 = vmatprep.subr.mxu0 0.0
      %761 = vmatpush1.msra.mxu0 %v591
      %762 = vmatprep.subr.mxu0 0.0
      %763 = vmatpush1.msra.mxu0 %v592
      %764 = vmatprep.subr.mxu0 0.0
      %765 = vmatpush1.msra.mxu0 0.0
      %766 = vmatprep.subr.mxu0 0.0
      %767 = vmatpush1.msra.mxu0 0.0
      %768 = vmatprep.subr.mxu0 0.0
      %769 = vmatpush1.msra.mxu0 0.0
      %770 = vmatprep.subr.mxu0 0.0
      %771 = vmatpush1.msra.mxu0 0.0
      %772 = vmatprep.subr.mxu0 0.0
      %773 = vmatpush1.msra.mxu0 0.0
      %774 = vmatprep.subr.mxu0 0.0
      %775 = vmatpush1.msra.mxu0 0.0
      %776 = vmatprep.subr.mxu0 0.0
      %777 = vmatpush1.msra.mxu0 0.0
      %778 = vmatprep.subr.mxu0 0.0
      %779 = vmatpush1.msra.mxu0 0.0
      %780 = vmatprep.subr.mxu0 0.0
      %781 = vmatpush1.msra.mxu0 0.0
      %782 = vmatprep.subr.mxu0 0.0
      %783 = vmatpush1.msra.mxu0 0.0
      %784 = vmatprep.subr.mxu0 0.0
      %785 = vmatpush1.msra.mxu0 0.0
      %786 = vmatprep.subr.mxu0 0.0
      %787 = vmatpush1.msra.mxu0 0.0
      %788 = vmatprep.subr.mxu0 0.0
      %789 = vmatpush1.msra.mxu0 0.0
      %790 = vmatprep.subr.mxu0 0.0
      %791 = vmatpush1.msra.mxu0 0.0
      %792 = vmatprep.subr.mxu0 0.0
      %793 = vmatpush1.msra.mxu0 0.0
      %794 = vmatprep.subr.mxu0 0.0
      %795 = vmatpush1.msra.mxu0 0.0
      %796 = vmatprep.subr.mxu0 0.0
      %797 = vmatpush1.msra.mxu0 0.0
      %798 = vmatprep.subr.mxu0 0.0
      %799 = vmatpush1.msra.mxu0 0.0
      %800 = vmatprep.subr.mxu0 0.0
      %801 = vmatpush1.msra.mxu0 0.0
      %802 = vmatprep.subr.mxu0 0.0
      %803 = vmatpush1.msra.mxu0 0.0
      %804 = vmatprep.subr.mxu0 0.0
      %805 = vmatpush1.msra.mxu0 0.0
      %806 = vmatprep.subr.mxu0 0.0
      %807 = vmatpush1.msra.mxu0 0.0
      %808 = vmatprep.subr.mxu0 0.0
      %809 = vmatpush1.msra.mxu0 0.0
      %810 = vmatprep.subr.mxu0 0.0
      %811 = vmatpush1.msra.mxu0 0.0
      %812 = vmatprep.subr.mxu0 0.0
      %813 = vmatpush1.msra.mxu0 0.0
      %814 = vmatprep.subr.mxu0 0.0
      %815 = vmatpush1.msra.mxu0 0.0
      %816 = vmatprep.subr.mxu0 0.0
      %817 = vmatpush1.msra.mxu0 0.0
      %818 = vmatprep.subr.mxu0 0.0
      %819 = vmatpush1.msra.mxu0 0.0
      %820 = vmatprep.subr.mxu0 0.0
      %821 = vmatpush1.msra.mxu0 0.0
      %822 = vmatprep.mubr.f32.mxu0 0.0
      %823 = vmatmul.mubr.f32.gmra.mrb[0].mxu0 %v574
      %v824 = vpop.f32.mrb[0].mxu0
      %v825 = vadd.f32 %v680, %v824
      %v826 = vpop.f32.mrb[0].mxu0
      %827 = vmatprep.mubr.f32.mxu0 0.0
      %828 = vmatmul.mubr.f32.gmra.mrb[0].mxu0 %v575
      %v829 = vpop.f32.mrb[0].mxu0
      %v830 = vadd.f32 %v685, %v829
      %v831 = vpop.f32.mrb[0].mxu0
      %832 = vmatprep.mubr.f32.mxu0 0.0
      %833 = vmatmul.mubr.f32.gmra.mrb[0].mxu0 %v576
      %v834 = vpop.f32.mrb[0].mxu0
      %v835 = vadd.f32 %v690, %v834
      %v836 = vpop.f32.mrb[0].mxu0
      %837 = vmatprep.mubr.f32.mxu0 0.0
      %838 = vmatmul.mubr.f32.gmra.mrb[0].mxu0 %v577
      %v839 = vpop.f32.mrb[0].mxu0
      %v840 = vadd.f32 %v695, %v839
      %v841 = vpop.f32.mrb[0].mxu0
      %842 = vmatprep.mubr.f32.mxu0 0.0
      %843 = vmatmul.mubr.f32.gmra.mrb[0].mxu0 %v578
      %v844 = vpop.f32.mrb[0].mxu0
      %v845 = vadd.f32 %v700, %v844
      %v846 = vpop.f32.mrb[0].mxu0
      %847 = vmatprep.mubr.f32.mxu0 0.0
      %848 = vmatmul.mubr.f32.gmra.mrb[0].mxu0 %v579
      %v849 = vpop.f32.mrb[0].mxu0
      %v850 = vadd.f32 %v705, %v849
      %v851 = vpop.f32.mrb[0].mxu0
      %852 = vmatprep.mubr.f32.mxu0 0.0
      %853 = vmatmul.mubr.f32.gmra.mrb[0].mxu0 %v580
      %v854 = vpop.f32.mrb[0].mxu0
      %v855 = vadd.f32 %v710, %v854
      %v856 = vpop.f32.mrb[0].mxu0
      %857 = vmatprep.mubr.f32.mxu0 0.0
      %858 = vmatmul.mubr.f32.gmra.mrb[0].mxu0 %v581
      %v859 = vpop.f32.mrb[0].mxu0
      %v860 = vadd.f32 %v715, %v859
      %v861 = vpop.f32.mrb[0].mxu0
      %862 = vmatprep.mubr.f32.mxu0 0.0
      %863 = vmatmul.mubr.f32.gmra.mrb[0].mxu0 %v582
      %v864 = vpop.f32.mrb[0].mxu0
      %v865 = vadd.f32 %v720, %v864
      %v866 = vpop.f32.mrb[0].mxu0
      %867 = vmatprep.mubr.f32.mxu0 0.0
      %868 = vmatmul.mubr.f32.gmra.mrb[0].mxu0 %v583
      %v869 = vpop.f32.mrb[0].mxu0
      %v870 = vadd.f32 %v725, %v869
      %v871 = vpop.f32.mrb[0].mxu0
      %872 = vmatprep.mubr.f32.mxu0 0.0
      %873 = vmatmul.mubr.f32.gmra.mrb[0].mxu0 %v584
      %v874 = vpop.f32.mrb[0].mxu0
      %v875 = vadd.f32 %v730, %v874
      %v876 = vpop.f32.mrb[0].mxu0
      %877 = vmatprep.mubr.f32.mxu0 0.0
      %878 = vmatmul.mubr.f32.gmra.mrb[0].mxu0 %v585
      %v879 = vpop.f32.mrb[0].mxu0
      %v880 = vadd.f32 %v735, %v879
      %v881 = vpop.f32.mrb[0].mxu0
      %882 = vmatprep.mubr.f32.mxu0 0.0
      %883 = vmatmul.mubr.f32.gmra.mrb[0].mxu0 %v586
      %v884 = vpop.f32.mrb[0].mxu0
      %v885 = vadd.f32 %v740, %v884
      %v886 = vpop.f32.mrb[0].mxu0
      %887 = vmatprep.mubr.f32.mxu0 0.0
      %888 = vmatmul.mubr.f32.gmra.mrb[0].mxu0 %v587
      %v889 = vpop.f32.mrb[0].mxu0
      %v890 = vadd.f32 %v745, %v889
      %v891 = vpop.f32.mrb[0].mxu0
      %892 = vmatprep.mubr.f32.mxu0 0.0
      %893 = vmatmul.mubr.f32.gmra.mrb[0].mxu0 %v588
      %v894 = vpop.f32.mrb[0].mxu0
      %v895 = vadd.f32 %v750, %v894
      %v896 = vpop.f32.mrb[0].mxu0
      %897 = vmatprep.mubr.f32.mxu0 0.0
      %898 = vmatmul.mubr.f32.gmra.mrb[0].mxu0 %v589
      %v899 = vpop.f32.mrb[0].mxu0
      %v900 = vadd.f32 %v755, %v899
      %v901 = vpop.f32.mrb[0].mxu0
      %902 = vdwg.mxu0
      %v903 = vld [vmem:[#allocation2 + $0x2] sm:$0xff]
      %v904 = vld [vmem:[#allocation2 + $0xa] sm:$0xff]
      %v905 = vld [vmem:[#allocation2 + $0x12] sm:$0xff]
      %v906 = vld [vmem:[#allocation2 + $0x1a] sm:$0xff]
      %v907 = vld [vmem:[#allocation2 + $0x22] sm:$0xff]
      %v908 = vld [vmem:[#allocation2 + $0x2a] sm:$0xff]
      %v909 = vld [vmem:[#allocation2 + $0x32] sm:$0xff]
      %v910 = vld [vmem:[#allocation2 + $0x3a] sm:$0xff]
      %v911 = vld [vmem:[#allocation2 + $0x42] sm:$0xff]
      %v912 = vld [vmem:[#allocation2 + $0x4a] sm:$0xff]
      %v913 = vld [vmem:[#allocation2 + $0x52] sm:$0xff]
      %v914 = vld [vmem:[#allocation2 + $0x5a] sm:$0xff]
      %v915 = vld [vmem:[#allocation2 + $0x62] sm:$0xff]
      %v916 = vld [vmem:[#allocation2 + $0x6a] sm:$0xff]
      %v917 = vld [vmem:[#allocation2 + $0x72] sm:$0xff]
      %v918 = vld [vmem:[#allocation2 + $0x7a] sm:$0xff]
      %s919 = scalar_lea.vmem %s3, 48
      %v920 = vld [vmem:[%s919] sm:$0xff]
      %v921 = vld [vmem:[%s919 + $0x8] sm:$0xff]
      %v922 = vld [vmem:[%s919 + $0x10] sm:$0xff]
      %923 = vmatprep.subr.mxu0 0.0
      %924 = vmatpush1.msra.mxu0 %v920
      %925 = vmatprep.subr.mxu0 0.0
      %926 = vmatpush1.msra.mxu0 %v921
      %927 = vmatprep.subr.mxu0 0.0
      %928 = vmatpush1.msra.mxu0 %v922
      %929 = vmatprep.subr.mxu0 0.0
      %930 = vmatpush1.msra.mxu0 0.0
      %931 = vmatprep.subr.mxu0 0.0
      %932 = vmatpush1.msra.mxu0 0.0
      %933 = vmatprep.subr.mxu0 0.0
      %934 = vmatpush1.msra.mxu0 0.0
      %935 = vmatprep.subr.mxu0 0.0
      %936 = vmatpush1.msra.mxu0 0.0
      %937 = vmatprep.subr.mxu0 0.0
      %938 = vmatpush1.msra.mxu0 0.0
      %939 = vmatprep.subr.mxu0 0.0
      %940 = vmatpush1.msra.mxu0 0.0
      %941 = vmatprep.subr.mxu0 0.0
      %942 = vmatpush1.msra.mxu0 0.0
      %943 = vmatprep.subr.mxu0 0.0
      %944 = vmatpush1.msra.mxu0 0.0
      %945 = vmatprep.subr.mxu0 0.0
      %946 = vmatpush1.msra.mxu0 0.0
      %947 = vmatprep.subr.mxu0 0.0
      %948 = vmatpush1.msra.mxu0 0.0
      %949 = vmatprep.subr.mxu0 0.0
      %950 = vmatpush1.msra.mxu0 0.0
      %951 = vmatprep.subr.mxu0 0.0
      %952 = vmatpush1.msra.mxu0 0.0
      %953 = vmatprep.subr.mxu0 0.0
      %954 = vmatpush1.msra.mxu0 0.0
      %955 = vmatprep.subr.mxu0 0.0
      %956 = vmatpush1.msra.mxu0 0.0
      %957 = vmatprep.subr.mxu0 0.0
      %958 = vmatpush1.msra.mxu0 0.0
      %959 = vmatprep.subr.mxu0 0.0
      %960 = vmatpush1.msra.mxu0 0.0
      %961 = vmatprep.subr.mxu0 0.0
      %962 = vmatpush1.msra.mxu0 0.0
      %963 = vmatprep.subr.mxu0 0.0
      %964 = vmatpush1.msra.mxu0 0.0
      %965 = vmatprep.subr.mxu0 0.0
      %966 = vmatpush1.msra.mxu0 0.0
      %967 = vmatprep.subr.mxu0 0.0
      %968 = vmatpush1.msra.mxu0 0.0
      %969 = vmatprep.subr.mxu0 0.0
      %970 = vmatpush1.msra.mxu0 0.0
      %971 = vmatprep.subr.mxu0 0.0
      %972 = vmatpush1.msra.mxu0 0.0
      %973 = vmatprep.subr.mxu0 0.0
      %974 = vmatpush1.msra.mxu0 0.0
      %975 = vmatprep.subr.mxu0 0.0
      %976 = vmatpush1.msra.mxu0 0.0
      %977 = vmatprep.subr.mxu0 0.0
      %978 = vmatpush1.msra.mxu0 0.0
      %979 = vmatprep.subr.mxu0 0.0
      %980 = vmatpush1.msra.mxu0 0.0
      %981 = vmatprep.subr.mxu0 0.0
      %982 = vmatpush1.msra.mxu0 0.0
      %983 = vmatprep.subr.mxu0 0.0
      %984 = vmatpush1.msra.mxu0 0.0
      %985 = vmatprep.subr.mxu0 0.0
      %986 = vmatpush1.msra.mxu0 0.0
      %987 = vmatprep.mubr.f32.mxu0 0.0
      %988 = vmatmul.mubr.f32.gmra.mrb[0].mxu0 %v903
      %v989 = vpop.f32.mrb[0].mxu0
      %v990 = vadd.f32 0.0, %v989
      %v991 = vpop.f32.mrb[0].mxu0
      %992 = vmatprep.mubr.f32.mxu0 0.0
      %993 = vmatmul.mubr.f32.gmra.mrb[0].mxu0 %v904
      %v994 = vpop.f32.mrb[0].mxu0
      %v995 = vadd.f32 0.0, %v994
      %v996 = vpop.f32.mrb[0].mxu0
      %997 = vmatprep.mubr.f32.mxu0 0.0
      %998 = vmatmul.mubr.f32.gmra.mrb[0].mxu0 %v905
      %v999 = vpop.f32.mrb[0].mxu0
      %v1000 = vadd.f32 0.0, %v999
      %v1001 = vpop.f32.mrb[0].mxu0
      %1002 = vmatprep.mubr.f32.mxu0 0.0
      %1003 = vmatmul.mubr.f32.gmra.mrb[0].mxu0 %v906
      %v1004 = vpop.f32.mrb[0].mxu0
      %v1005 = vadd.f32 0.0, %v1004
      %v1006 = vpop.f32.mrb[0].mxu0
      %1007 = vmatprep.mubr.f32.mxu0 0.0
      %1008 = vmatmul.mubr.f32.gmra.mrb[0].mxu0 %v907
      %v1009 = vpop.f32.mrb[0].mxu0
      %v1010 = vadd.f32 0.0, %v1009
      %v1011 = vpop.f32.mrb[0].mxu0
      %1012 = vmatprep.mubr.f32.mxu0 0.0
      %1013 = vmatmul.mubr.f32.gmra.mrb[0].mxu0 %v908
      %v1014 = vpop.f32.mrb[0].mxu0
      %v1015 = vadd.f32 0.0, %v1014
      %v1016 = vpop.f32.mrb[0].mxu0
      %1017 = vmatprep.mubr.f32.mxu0 0.0
      %1018 = vmatmul.mubr.f32.gmra.mrb[0].mxu0 %v909
      %v1019 = vpop.f32.mrb[0].mxu0
      %v1020 = vadd.f32 0.0, %v1019
      %v1021 = vpop.f32.mrb[0].mxu0
      %1022 = vmatprep.mubr.f32.mxu0 0.0
      %1023 = vmatmul.mubr.f32.gmra.mrb[0].mxu0 %v910
      %v1024 = vpop.f32.mrb[0].mxu0
      %v1025 = vadd.f32 0.0, %v1024
      %v1026 = vpop.f32.mrb[0].mxu0
      %1027 = vmatprep.mubr.f32.mxu0 0.0
      %1028 = vmatmul.mubr.f32.gmra.mrb[0].mxu0 %v911
      %v1029 = vpop.f32.mrb[0].mxu0
      %v1030 = vadd.f32 0.0, %v1029
      %v1031 = vpop.f32.mrb[0].mxu0
      %1032 = vmatprep.mubr.f32.mxu0 0.0
      %1033 = vmatmul.mubr.f32.gmra.mrb[0].mxu0 %v912
      %v1034 = vpop.f32.mrb[0].mxu0
      %v1035 = vadd.f32 0.0, %v1034
      %v1036 = vpop.f32.mrb[0].mxu0
      %1037 = vmatprep.mubr.f32.mxu0 0.0
      %1038 = vmatmul.mubr.f32.gmra.mrb[0].mxu0 %v913
      %v1039 = vpop.f32.mrb[0].mxu0
      %v1040 = vadd.f32 0.0, %v1039
      %v1041 = vpop.f32.mrb[0].mxu0
      %1042 = vmatprep.mubr.f32.mxu0 0.0
      %1043 = vmatmul.mubr.f32.gmra.mrb[0].mxu0 %v914
      %v1044 = vpop.f32.mrb[0].mxu0
      %v1045 = vadd.f32 0.0, %v1044
      %v1046 = vpop.f32.mrb[0].mxu0
      %1047 = vmatprep.mubr.f32.mxu0 0.0
      %1048 = vmatmul.mubr.f32.gmra.mrb[0].mxu0 %v915
      %v1049 = vpop.f32.mrb[0].mxu0
      %v1050 = vadd.f32 0.0, %v1049
      %v1051 = vpop.f32.mrb[0].mxu0
      %1052 = vmatprep.mubr.f32.mxu0 0.0
      %1053 = vmatmul.mubr.f32.gmra.mrb[0].mxu0 %v916
      %v1054 = vpop.f32.mrb[0].mxu0
      %v1055 = vadd.f32 0.0, %v1054
      %v1056 = vpop.f32.mrb[0].mxu0
      %1057 = vmatprep.mubr.f32.mxu0 0.0
      %1058 = vmatmul.mubr.f32.gmra.mrb[0].mxu0 %v917
      %v1059 = vpop.f32.mrb[0].mxu0
      %v1060 = vadd.f32 0.0, %v1059
      %v1061 = vpop.f32.mrb[0].mxu0
      %1062 = vmatprep.mubr.f32.mxu0 0.0
      %1063 = vmatmul.mubr.f32.gmra.mrb[0].mxu0 %v918
      %v1064 = vpop.f32.mrb[0].mxu0
      %v1065 = vadd.f32 0.0, %v1064
      %v1066 = vpop.f32.mrb[0].mxu0
      %1067 = vdwg.mxu0
      %v1068 = vadd.f32 %v825, %v990
      %v1069 = vadd.f32 %v830, %v995
      %v1070 = vadd.f32 %v835, %v1000
      %v1071 = vadd.f32 %v840, %v1005
      %v1072 = vadd.f32 %v845, %v1010
      %v1073 = vadd.f32 %v850, %v1015
      %v1074 = vadd.f32 %v855, %v1020
      %v1075 = vadd.f32 %v860, %v1025
      %v1076 = vadd.f32 %v865, %v1030
      %v1077 = vadd.f32 %v870, %v1035
      %v1078 = vadd.f32 %v875, %v1040
      %v1079 = vadd.f32 %v880, %v1045
      %v1080 = vadd.f32 %v885, %v1050
      %v1081 = vadd.f32 %v890, %v1055
      %v1082 = vadd.f32 %v895, %v1060
      %v1083 = vadd.f32 %v900, %v1065
      %v1084 = vld [vmem:[#allocation2 + $0x3] sm:$0xff]
      %v1085 = vld [vmem:[#allocation2 + $0xb] sm:$0xff]
      %v1086 = vld [vmem:[#allocation2 + $0x13] sm:$0xff]
      %v1087 = vld [vmem:[#allocation2 + $0x1b] sm:$0xff]
      %v1088 = vld [vmem:[#allocation2 + $0x23] sm:$0xff]
      %v1089 = vld [vmem:[#allocation2 + $0x2b] sm:$0xff]
      %v1090 = vld [vmem:[#allocation2 + $0x33] sm:$0xff]
      %v1091 = vld [vmem:[#allocation2 + $0x3b] sm:$0xff]
      %v1092 = vld [vmem:[#allocation2 + $0x43] sm:$0xff]
      %v1093 = vld [vmem:[#allocation2 + $0x4b] sm:$0xff]
      %v1094 = vld [vmem:[#allocation2 + $0x53] sm:$0xff]
      %v1095 = vld [vmem:[#allocation2 + $0x5b] sm:$0xff]
      %v1096 = vld [vmem:[#allocation2 + $0x63] sm:$0xff]
      %v1097 = vld [vmem:[#allocation2 + $0x6b] sm:$0xff]
      %v1098 = vld [vmem:[#allocation2 + $0x73] sm:$0xff]
      %v1099 = vld [vmem:[#allocation2 + $0x7b] sm:$0xff]
      %s1100 = scalar_lea.vmem %s3, 72
      %v1101 = vld [vmem:[%s1100] sm:$0xff]
      %v1102 = vld [vmem:[%s1100 + $0x8] sm:$0xff]
      %v1103 = vld [vmem:[%s1100 + $0x10] sm:$0xff]
      %1104 = vmatprep.subr.mxu0 0.0
      %1105 = vmatpush1.msra.mxu0 %v1101
      %1106 = vmatprep.subr.mxu0 0.0
      %1107 = vmatpush1.msra.mxu0 %v1102
      %1108 = vmatprep.subr.mxu0 0.0
      %1109 = vmatpush1.msra.mxu0 %v1103
      %1110 = vmatprep.subr.mxu0 0.0
      %1111 = vmatpush1.msra.mxu0 0.0
      %1112 = vmatprep.subr.mxu0 0.0
      %1113 = vmatpush1.msra.mxu0 0.0
      %1114 = vmatprep.subr.mxu0 0.0
      %1115 = vmatpush1.msra.mxu0 0.0
      %1116 = vmatprep.subr.mxu0 0.0
      %1117 = vmatpush1.msra.mxu0 0.0
      %1118 = vmatprep.subr.mxu0 0.0
      %1119 = vmatpush1.msra.mxu0 0.0
      %1120 = vmatprep.subr.mxu0 0.0
      %1121 = vmatpush1.msra.mxu0 0.0
      %1122 = vmatprep.subr.mxu0 0.0
      %1123 = vmatpush1.msra.mxu0 0.0
      %1124 = vmatprep.subr.mxu0 0.0
      %1125 = vmatpush1.msra.mxu0 0.0
      %1126 = vmatprep.subr.mxu0 0.0
      %1127 = vmatpush1.msra.mxu0 0.0
      %1128 = vmatprep.subr.mxu0 0.0
      %1129 = vmatpush1.msra.mxu0 0.0
      %1130 = vmatprep.subr.mxu0 0.0
      %1131 = vmatpush1.msra.mxu0 0.0
      %1132 = vmatprep.subr.mxu0 0.0
      %1133 = vmatpush1.msra.mxu0 0.0
      %1134 = vmatprep.subr.mxu0 0.0
      %1135 = vmatpush1.msra.mxu0 0.0
      %1136 = vmatprep.subr.mxu0 0.0
      %1137 = vmatpush1.msra.mxu0 0.0
      %1138 = vmatprep.subr.mxu0 0.0
      %1139 = vmatpush1.msra.mxu0 0.0
      %1140 = vmatprep.subr.mxu0 0.0
      %1141 = vmatpush1.msra.mxu0 0.0
      %1142 = vmatprep.subr.mxu0 0.0
      %1143 = vmatpush1.msra.mxu0 0.0
      %1144 = vmatprep.subr.mxu0 0.0
      %1145 = vmatpush1.msra.mxu0 0.0
      %1146 = vmatprep.subr.mxu0 0.0
      %1147 = vmatpush1.msra.mxu0 0.0
      %1148 = vmatprep.subr.mxu0 0.0
      %1149 = vmatpush1.msra.mxu0 0.0
      %1150 = vmatprep.subr.mxu0 0.0
      %1151 = vmatpush1.msra.mxu0 0.0
      %1152 = vmatprep.subr.mxu0 0.0
      %1153 = vmatpush1.msra.mxu0 0.0
      %1154 = vmatprep.subr.mxu0 0.0
      %1155 = vmatpush1.msra.mxu0 0.0
      %1156 = vmatprep.subr.mxu0 0.0
      %1157 = vmatpush1.msra.mxu0 0.0
      %1158 = vmatprep.subr.mxu0 0.0
      %1159 = vmatpush1.msra.mxu0 0.0
      %1160 = vmatprep.subr.mxu0 0.0
      %1161 = vmatpush1.msra.mxu0 0.0
      %1162 = vmatprep.subr.mxu0 0.0
      %1163 = vmatpush1.msra.mxu0 0.0
      %1164 = vmatprep.subr.mxu0 0.0
      %1165 = vmatpush1.msra.mxu0 0.0
      %1166 = vmatprep.subr.mxu0 0.0
      %1167 = vmatpush1.msra.mxu0 0.0
      %1168 = vmatprep.mubr.f32.mxu0 0.0
      %1169 = vmatmul.mubr.f32.gmra.mrb[0].mxu0 %v1084
      %v1170 = vpop.f32.mrb[0].mxu0
      %v1171 = vadd.f32 0.0, %v1170
      %v1172 = vpop.f32.mrb[0].mxu0
      %1173 = vmatprep.mubr.f32.mxu0 0.0
      %1174 = vmatmul.mubr.f32.gmra.mrb[0].mxu0 %v1085
      %v1175 = vpop.f32.mrb[0].mxu0
      %v1176 = vadd.f32 0.0, %v1175
      %v1177 = vpop.f32.mrb[0].mxu0
      %1178 = vmatprep.mubr.f32.mxu0 0.0
      %1179 = vmatmul.mubr.f32.gmra.mrb[0].mxu0 %v1086
      %v1180 = vpop.f32.mrb[0].mxu0
      %v1181 = vadd.f32 0.0, %v1180
      %v1182 = vpop.f32.mrb[0].mxu0
      %1183 = vmatprep.mubr.f32.mxu0 0.0
      %1184 = vmatmul.mubr.f32.gmra.mrb[0].mxu0 %v1087
      %v1185 = vpop.f32.mrb[0].mxu0
      %v1186 = vadd.f32 0.0, %v1185
      %v1187 = vpop.f32.mrb[0].mxu0
      %1188 = vmatprep.mubr.f32.mxu0 0.0
      %1189 = vmatmul.mubr.f32.gmra.mrb[0].mxu0 %v1088
      %v1190 = vpop.f32.mrb[0].mxu0
      %v1191 = vadd.f32 0.0, %v1190
      %v1192 = vpop.f32.mrb[0].mxu0
      %1193 = vmatprep.mubr.f32.mxu0 0.0
      %1194 = vmatmul.mubr.f32.gmra.mrb[0].mxu0 %v1089
      %v1195 = vpop.f32.mrb[0].mxu0
      %v1196 = vadd.f32 0.0, %v1195
      %v1197 = vpop.f32.mrb[0].mxu0
      %1198 = vmatprep.mubr.f32.mxu0 0.0
      %1199 = vmatmul.mubr.f32.gmra.mrb[0].mxu0 %v1090
      %v1200 = vpop.f32.mrb[0].mxu0
      %v1201 = vadd.f32 0.0, %v1200
      %v1202 = vpop.f32.mrb[0].mxu0
      %1203 = vmatprep.mubr.f32.mxu0 0.0
      %1204 = vmatmul.mubr.f32.gmra.mrb[0].mxu0 %v1091
      %v1205 = vpop.f32.mrb[0].mxu0
      %v1206 = vadd.f32 0.0, %v1205
      %v1207 = vpop.f32.mrb[0].mxu0
      %1208 = vmatprep.mubr.f32.mxu0 0.0
      %1209 = vmatmul.mubr.f32.gmra.mrb[0].mxu0 %v1092
      %v1210 = vpop.f32.mrb[0].mxu0
      %v1211 = vadd.f32 0.0, %v1210
      %v1212 = vpop.f32.mrb[0].mxu0
      %1213 = vmatprep.mubr.f32.mxu0 0.0
      %1214 = vmatmul.mubr.f32.gmra.mrb[0].mxu0 %v1093
      %v1215 = vpop.f32.mrb[0].mxu0
      %v1216 = vadd.f32 0.0, %v1215
      %v1217 = vpop.f32.mrb[0].mxu0
      %1218 = vmatprep.mubr.f32.mxu0 0.0
      %1219 = vmatmul.mubr.f32.gmra.mrb[0].mxu0 %v1094
      %v1220 = vpop.f32.mrb[0].mxu0
      %v1221 = vadd.f32 0.0, %v1220
      %v1222 = vpop.f32.mrb[0].mxu0
      %1223 = vmatprep.mubr.f32.mxu0 0.0
      %1224 = vmatmul.mubr.f32.gmra.mrb[0].mxu0 %v1095
      %v1225 = vpop.f32.mrb[0].mxu0
      %v1226 = vadd.f32 0.0, %v1225
      %v1227 = vpop.f32.mrb[0].mxu0
      %1228 = vmatprep.mubr.f32.mxu0 0.0
      %1229 = vmatmul.mubr.f32.gmra.mrb[0].mxu0 %v1096
      %v1230 = vpop.f32.mrb[0].mxu0
      %v1231 = vadd.f32 0.0, %v1230
      %v1232 = vpop.f32.mrb[0].mxu0
      %1233 = vmatprep.mubr.f32.mxu0 0.0
      %1234 = vmatmul.mubr.f32.gmra.mrb[0].mxu0 %v1097
      %v1235 = vpop.f32.mrb[0].mxu0
      %v1236 = vadd.f32 0.0, %v1235
      %v1237 = vpop.f32.mrb[0].mxu0
      %1238 = vmatprep.mubr.f32.mxu0 0.0
      %1239 = vmatmul.mubr.f32.gmra.mrb[0].mxu0 %v1098
      %v1240 = vpop.f32.mrb[0].mxu0
      %v1241 = vadd.f32 0.0, %v1240
      %v1242 = vpop.f32.mrb[0].mxu0
      %1243 = vmatprep.mubr.f32.mxu0 0.0
      %1244 = vmatmul.mubr.f32.gmra.mrb[0].mxu0 %v1099
      %v1245 = vpop.f32.mrb[0].mxu0
      %v1246 = vadd.f32 0.0, %v1245
      %v1247 = vpop.f32.mrb[0].mxu0
      %1248 = vdwg.mxu0
      %v1249 = vadd.f32 %v1068, %v1171
      %v1250 = vadd.f32 %v1069, %v1176
      %v1251 = vadd.f32 %v1070, %v1181
      %v1252 = vadd.f32 %v1071, %v1186
      %v1253 = vadd.f32 %v1072, %v1191
      %v1254 = vadd.f32 %v1073, %v1196
      %v1255 = vadd.f32 %v1074, %v1201
      %v1256 = vadd.f32 %v1075, %v1206
      %v1257 = vadd.f32 %v1076, %v1211
      %v1258 = vadd.f32 %v1077, %v1216
      %v1259 = vadd.f32 %v1078, %v1221
      %v1260 = vadd.f32 %v1079, %v1226
      %v1261 = vadd.f32 %v1080, %v1231
      %v1262 = vadd.f32 %v1081, %v1236
      %v1263 = vadd.f32 %v1082, %v1241
      %v1264 = vadd.f32 %v1083, %v1246
      %v1265 = vld [vmem:[#allocation2 + $0x4] sm:$0xff]
      %v1266 = vld [vmem:[#allocation2 + $0xc] sm:$0xff]
      %v1267 = vld [vmem:[#allocation2 + $0x14] sm:$0xff]
      %v1268 = vld [vmem:[#allocation2 + $0x1c] sm:$0xff]
      %v1269 = vld [vmem:[#allocation2 + $0x24] sm:$0xff]
      %v1270 = vld [vmem:[#allocation2 + $0x2c] sm:$0xff]
      %v1271 = vld [vmem:[#allocation2 + $0x34] sm:$0xff]
      %v1272 = vld [vmem:[#allocation2 + $0x3c] sm:$0xff]
      %v1273 = vld [vmem:[#allocation2 + $0x44] sm:$0xff]
      %v1274 = vld [vmem:[#allocation2 + $0x4c] sm:$0xff]
      %v1275 = vld [vmem:[#allocation2 + $0x54] sm:$0xff]
      %v1276 = vld [vmem:[#allocation2 + $0x5c] sm:$0xff]
      %v1277 = vld [vmem:[#allocation2 + $0x64] sm:$0xff]
      %v1278 = vld [vmem:[#allocation2 + $0x6c] sm:$0xff]
      %v1279 = vld [vmem:[#allocation2 + $0x74] sm:$0xff]
      %v1280 = vld [vmem:[#allocation2 + $0x7c] sm:$0xff]
      %s1281 = scalar_lea.vmem %s3, 96
      %v1282 = vld [vmem:[%s1281] sm:$0xff]
      %v1283 = vld [vmem:[%s1281 + $0x8] sm:$0xff]
      %v1284 = vld [vmem:[%s1281 + $0x10] sm:$0xff]
      %1285 = vmatprep.subr.mxu0 0.0
      %1286 = vmatpush1.msra.mxu0 %v1282
      %1287 = vmatprep.subr.mxu0 0.0
      %1288 = vmatpush1.msra.mxu0 %v1283
      %1289 = vmatprep.subr.mxu0 0.0
      %1290 = vmatpush1.msra.mxu0 %v1284
      %1291 = vmatprep.subr.mxu0 0.0
      %1292 = vmatpush1.msra.mxu0 0.0
      %1293 = vmatprep.subr.mxu0 0.0
      %1294 = vmatpush1.msra.mxu0 0.0
      %1295 = vmatprep.subr.mxu0 0.0
      %1296 = vmatpush1.msra.mxu0 0.0
      %1297 = vmatprep.subr.mxu0 0.0
      %1298 = vmatpush1.msra.mxu0 0.0
      %1299 = vmatprep.subr.mxu0 0.0
      %1300 = vmatpush1.msra.mxu0 0.0
      %1301 = vmatprep.subr.mxu0 0.0
      %1302 = vmatpush1.msra.mxu0 0.0
      %1303 = vmatprep.subr.mxu0 0.0
      %1304 = vmatpush1.msra.mxu0 0.0
      %1305 = vmatprep.subr.mxu0 0.0
      %1306 = vmatpush1.msra.mxu0 0.0
      %1307 = vmatprep.subr.mxu0 0.0
      %1308 = vmatpush1.msra.mxu0 0.0
      %1309 = vmatprep.subr.mxu0 0.0
      %1310 = vmatpush1.msra.mxu0 0.0
      %1311 = vmatprep.subr.mxu0 0.0
      %1312 = vmatpush1.msra.mxu0 0.0
      %1313 = vmatprep.subr.mxu0 0.0
      %1314 = vmatpush1.msra.mxu0 0.0
      %1315 = vmatprep.subr.mxu0 0.0
      %1316 = vmatpush1.msra.mxu0 0.0
      %1317 = vmatprep.subr.mxu0 0.0
      %1318 = vmatpush1.msra.mxu0 0.0
      %1319 = vmatprep.subr.mxu0 0.0
      %1320 = vmatpush1.msra.mxu0 0.0
      %1321 = vmatprep.subr.mxu0 0.0
      %1322 = vmatpush1.msra.mxu0 0.0
      %1323 = vmatprep.subr.mxu0 0.0
      %1324 = vmatpush1.msra.mxu0 0.0
      %1325 = vmatprep.subr.mxu0 0.0
      %1326 = vmatpush1.msra.mxu0 0.0
      %1327 = vmatprep.subr.mxu0 0.0
      %1328 = vmatpush1.msra.mxu0 0.0
      %1329 = vmatprep.subr.mxu0 0.0
      %1330 = vmatpush1.msra.mxu0 0.0
      %1331 = vmatprep.subr.mxu0 0.0
      %1332 = vmatpush1.msra.mxu0 0.0
      %1333 = vmatprep.subr.mxu0 0.0
      %1334 = vmatpush1.msra.mxu0 0.0
      %1335 = vmatprep.subr.mxu0 0.0
      %1336 = vmatpush1.msra.mxu0 0.0
      %1337 = vmatprep.subr.mxu0 0.0
      %1338 = vmatpush1.msra.mxu0 0.0
      %1339 = vmatprep.subr.mxu0 0.0
      %1340 = vmatpush1.msra.mxu0 0.0
      %1341 = vmatprep.subr.mxu0 0.0
      %1342 = vmatpush1.msra.mxu0 0.0
      %1343 = vmatprep.subr.mxu0 0.0
      %1344 = vmatpush1.msra.mxu0 0.0
      %1345 = vmatprep.subr.mxu0 0.0
      %1346 = vmatpush1.msra.mxu0 0.0
      %1347 = vmatprep.subr.mxu0 0.0
      %1348 = vmatpush1.msra.mxu0 0.0
      %1349 = vmatprep.mubr.f32.mxu0 0.0
      %1350 = vmatmul.mubr.f32.gmra.mrb[0].mxu0 %v1265
      %v1351 = vpop.f32.mrb[0].mxu0
      %v1352 = vadd.f32 0.0, %v1351
      %v1353 = vpop.f32.mrb[0].mxu0
      %1354 = vmatprep.mubr.f32.mxu0 0.0
      %1355 = vmatmul.mubr.f32.gmra.mrb[0].mxu0 %v1266
      %v1356 = vpop.f32.mrb[0].mxu0
      %v1357 = vadd.f32 0.0, %v1356
      %v1358 = vpop.f32.mrb[0].mxu0
      %1359 = vmatprep.mubr.f32.mxu0 0.0
      %1360 = vmatmul.mubr.f32.gmra.mrb[0].mxu0 %v1267
      %v1361 = vpop.f32.mrb[0].mxu0
      %v1362 = vadd.f32 0.0, %v1361
      %v1363 = vpop.f32.mrb[0].mxu0
      %1364 = vmatprep.mubr.f32.mxu0 0.0
      %1365 = vmatmul.mubr.f32.gmra.mrb[0].mxu0 %v1268
      %v1366 = vpop.f32.mrb[0].mxu0
      %v1367 = vadd.f32 0.0, %v1366
      %v1368 = vpop.f32.mrb[0].mxu0
      %1369 = vmatprep.mubr.f32.mxu0 0.0
      %1370 = vmatmul.mubr.f32.gmra.mrb[0].mxu0 %v1269
      %v1371 = vpop.f32.mrb[0].mxu0
      %v1372 = vadd.f32 0.0, %v1371
      %v1373 = vpop.f32.mrb[0].mxu0
      %1374 = vmatprep.mubr.f32.mxu0 0.0
      %1375 = vmatmul.mubr.f32.gmra.mrb[0].mxu0 %v1270
      %v1376 = vpop.f32.mrb[0].mxu0
      %v1377 = vadd.f32 0.0, %v1376
      %v1378 = vpop.f32.mrb[0].mxu0
      %1379 = vmatprep.mubr.f32.mxu0 0.0
      %1380 = vmatmul.mubr.f32.gmra.mrb[0].mxu0 %v1271
      %v1381 = vpop.f32.mrb[0].mxu0
      %v1382 = vadd.f32 0.0, %v1381
      %v1383 = vpop.f32.mrb[0].mxu0
      %1384 = vmatprep.mubr.f32.mxu0 0.0
      %1385 = vmatmul.mubr.f32.gmra.mrb[0].mxu0 %v1272
      %v1386 = vpop.f32.mrb[0].mxu0
      %v1387 = vadd.f32 0.0, %v1386
      %v1388 = vpop.f32.mrb[0].mxu0
      %1389 = vmatprep.mubr.f32.mxu0 0.0
      %1390 = vmatmul.mubr.f32.gmra.mrb[0].mxu0 %v1273
      %v1391 = vpop.f32.mrb[0].mxu0
      %v1392 = vadd.f32 0.0, %v1391
      %v1393 = vpop.f32.mrb[0].mxu0
      %1394 = vmatprep.mubr.f32.mxu0 0.0
      %1395 = vmatmul.mubr.f32.gmra.mrb[0].mxu0 %v1274
      %v1396 = vpop.f32.mrb[0].mxu0
      %v1397 = vadd.f32 0.0, %v1396
      %v1398 = vpop.f32.mrb[0].mxu0
      %1399 = vmatprep.mubr.f32.mxu0 0.0
      %1400 = vmatmul.mubr.f32.gmra.mrb[0].mxu0 %v1275
      %v1401 = vpop.f32.mrb[0].mxu0
      %v1402 = vadd.f32 0.0, %v1401
      %v1403 = vpop.f32.mrb[0].mxu0
      %1404 = vmatprep.mubr.f32.mxu0 0.0
      %1405 = vmatmul.mubr.f32.gmra.mrb[0].mxu0 %v1276
      %v1406 = vpop.f32.mrb[0].mxu0
      %v1407 = vadd.f32 0.0, %v1406
      %v1408 = vpop.f32.mrb[0].mxu0
      %1409 = vmatprep.mubr.f32.mxu0 0.0
      %1410 = vmatmul.mubr.f32.gmra.mrb[0].mxu0 %v1277
      %v1411 = vpop.f32.mrb[0].mxu0
      %v1412 = vadd.f32 0.0, %v1411
      %v1413 = vpop.f32.mrb[0].mxu0
      %1414 = vmatprep.mubr.f32.mxu0 0.0
      %1415 = vmatmul.mubr.f32.gmra.mrb[0].mxu0 %v1278
      %v1416 = vpop.f32.mrb[0].mxu0
      %v1417 = vadd.f32 0.0, %v1416
      %v1418 = vpop.f32.mrb[0].mxu0
      %1419 = vmatprep.mubr.f32.mxu0 0.0
      %1420 = vmatmul.mubr.f32.gmra.mrb[0].mxu0 %v1279
      %v1421 = vpop.f32.mrb[0].mxu0
      %v1422 = vadd.f32 0.0, %v1421
      %v1423 = vpop.f32.mrb[0].mxu0
      %1424 = vmatprep.mubr.f32.mxu0 0.0
      %1425 = vmatmul.mubr.f32.gmra.mrb[0].mxu0 %v1280
      %v1426 = vpop.f32.mrb[0].mxu0
      %v1427 = vadd.f32 0.0, %v1426
      %v1428 = vpop.f32.mrb[0].mxu0
      %1429 = vdwg.mxu0
      %v1430 = vadd.f32 %v1249, %v1352
      %v1431 = vadd.f32 %v1250, %v1357
      %v1432 = vadd.f32 %v1251, %v1362
      %v1433 = vadd.f32 %v1252, %v1367
      %v1434 = vadd.f32 %v1253, %v1372
      %v1435 = vadd.f32 %v1254, %v1377
      %v1436 = vadd.f32 %v1255, %v1382
      %v1437 = vadd.f32 %v1256, %v1387
      %v1438 = vadd.f32 %v1257, %v1392
      %v1439 = vadd.f32 %v1258, %v1397
      %v1440 = vadd.f32 %v1259, %v1402
      %v1441 = vadd.f32 %v1260, %v1407
      %v1442 = vadd.f32 %v1261, %v1412
      %v1443 = vadd.f32 %v1262, %v1417
      %v1444 = vadd.f32 %v1263, %v1422
      %v1445 = vadd.f32 %v1264, %v1427
      %v1446 = vld [vmem:[#allocation2 + $0x10] sm:$0xff]
      %v1447 = vld [vmem:[#allocation2 + $0x18] sm:$0xff]
      %v1448 = vld [vmem:[#allocation2 + $0x20] sm:$0xff]
      %v1449 = vld [vmem:[#allocation2 + $0x28] sm:$0xff]
      %v1450 = vld [vmem:[#allocation2 + $0x30] sm:$0xff]
      %v1451 = vld [vmem:[#allocation2 + $0x38] sm:$0xff]
      %v1452 = vld [vmem:[#allocation2 + $0x40] sm:$0xff]
      %v1453 = vld [vmem:[#allocation2 + $0x48] sm:$0xff]
      %v1454 = vld [vmem:[#allocation2 + $0x50] sm:$0xff]
      %v1455 = vld [vmem:[#allocation2 + $0x58] sm:$0xff]
      %v1456 = vld [vmem:[#allocation2 + $0x60] sm:$0xff]
      %v1457 = vld [vmem:[#allocation2 + $0x68] sm:$0xff]
      %v1458 = vld [vmem:[#allocation2 + $0x70] sm:$0xff]
      %v1459 = vld [vmem:[#allocation2 + $0x78] sm:$0xff]
      %v1460 = vld [vmem:[#allocation2 + $0x80] sm:$0xff]
      %v1461 = vld [vmem:[#allocation2 + $0x88] sm:$0xff]
      %s1462 = scalar_lea.vmem %s3, 120
      %v1463 = vld [vmem:[%s1462] sm:$0xff]
      %v1464 = vld [vmem:[%s1462 + $0x8] sm:$0xff]
      %v1465 = vld [vmem:[%s1462 + $0x10] sm:$0xff]
      %1466 = vmatprep.subr.mxu0 0.0
      %1467 = vmatpush1.msra.mxu0 %v1463
      %1468 = vmatprep.subr.mxu0 0.0
      %1469 = vmatpush1.msra.mxu0 %v1464
      %1470 = vmatprep.subr.mxu0 0.0
      %1471 = vmatpush1.msra.mxu0 %v1465
      %1472 = vmatprep.subr.mxu0 0.0
      %1473 = vmatpush1.msra.mxu0 0.0
      %1474 = vmatprep.subr.mxu0 0.0
      %1475 = vmatpush1.msra.mxu0 0.0
      %1476 = vmatprep.subr.mxu0 0.0
      %1477 = vmatpush1.msra.mxu0 0.0
      %1478 = vmatprep.subr.mxu0 0.0
      %1479 = vmatpush1.msra.mxu0 0.0
      %1480 = vmatprep.subr.mxu0 0.0
      %1481 = vmatpush1.msra.mxu0 0.0
      %1482 = vmatprep.subr.mxu0 0.0
      %1483 = vmatpush1.msra.mxu0 0.0
      %1484 = vmatprep.subr.mxu0 0.0
      %1485 = vmatpush1.msra.mxu0 0.0
      %1486 = vmatprep.subr.mxu0 0.0
      %1487 = vmatpush1.msra.mxu0 0.0
      %1488 = vmatprep.subr.mxu0 0.0
      %1489 = vmatpush1.msra.mxu0 0.0
      %1490 = vmatprep.subr.mxu0 0.0
      %1491 = vmatpush1.msra.mxu0 0.0
      %1492 = vmatprep.subr.mxu0 0.0
      %1493 = vmatpush1.msra.mxu0 0.0
      %1494 = vmatprep.subr.mxu0 0.0
      %1495 = vmatpush1.msra.mxu0 0.0
      %1496 = vmatprep.subr.mxu0 0.0
      %1497 = vmatpush1.msra.mxu0 0.0
      %1498 = vmatprep.subr.mxu0 0.0
      %1499 = vmatpush1.msra.mxu0 0.0
      %1500 = vmatprep.subr.mxu0 0.0
      %1501 = vmatpush1.msra.mxu0 0.0
      %1502 = vmatprep.subr.mxu0 0.0
      %1503 = vmatpush1.msra.mxu0 0.0
      %1504 = vmatprep.subr.mxu0 0.0
      %1505 = vmatpush1.msra.mxu0 0.0
      %1506 = vmatprep.subr.mxu0 0.0
      %1507 = vmatpush1.msra.mxu0 0.0
      %1508 = vmatprep.subr.mxu0 0.0
      %1509 = vmatpush1.msra.mxu0 0.0
      %1510 = vmatprep.subr.mxu0 0.0
      %1511 = vmatpush1.msra.mxu0 0.0
      %1512 = vmatprep.subr.mxu0 0.0
      %1513 = vmatpush1.msra.mxu0 0.0
      %1514 = vmatprep.subr.mxu0 0.0
      %1515 = vmatpush1.msra.mxu0 0.0
      %1516 = vmatprep.subr.mxu0 0.0
      %1517 = vmatpush1.msra.mxu0 0.0
      %1518 = vmatprep.subr.mxu0 0.0
      %1519 = vmatpush1.msra.mxu0 0.0
      %1520 = vmatprep.subr.mxu0 0.0
      %1521 = vmatpush1.msra.mxu0 0.0
      %1522 = vmatprep.subr.mxu0 0.0
      %1523 = vmatpush1.msra.mxu0 0.0
      %1524 = vmatprep.subr.mxu0 0.0
      %1525 = vmatpush1.msra.mxu0 0.0
      %1526 = vmatprep.subr.mxu0 0.0
      %1527 = vmatpush1.msra.mxu0 0.0
      %1528 = vmatprep.subr.mxu0 0.0
      %1529 = vmatpush1.msra.mxu0 0.0
      %1530 = vmatprep.mubr.f32.mxu0 0.0
      %1531 = vmatmul.mubr.f32.gmra.mrb[0].mxu0 %v1446
      %v1532 = vpop.f32.mrb[0].mxu0
      %v1533 = vadd.f32 0.0, %v1532
      %v1534 = vpop.f32.mrb[0].mxu0
      %1535 = vmatprep.mubr.f32.mxu0 0.0
      %1536 = vmatmul.mubr.f32.gmra.mrb[0].mxu0 %v1447
      %v1537 = vpop.f32.mrb[0].mxu0
      %v1538 = vadd.f32 0.0, %v1537
      %v1539 = vpop.f32.mrb[0].mxu0
      %1540 = vmatprep.mubr.f32.mxu0 0.0
      %1541 = vmatmul.mubr.f32.gmra.mrb[0].mxu0 %v1448
      %v1542 = vpop.f32.mrb[0].mxu0
      %v1543 = vadd.f32 0.0, %v1542
      %v1544 = vpop.f32.mrb[0].mxu0
      %1545 = vmatprep.mubr.f32.mxu0 0.0
      %1546 = vmatmul.mubr.f32.gmra.mrb[0].mxu0 %v1449
      %v1547 = vpop.f32.mrb[0].mxu0
      %v1548 = vadd.f32 0.0, %v1547
      %v1549 = vpop.f32.mrb[0].mxu0
      %1550 = vmatprep.mubr.f32.mxu0 0.0
      %1551 = vmatmul.mubr.f32.gmra.mrb[0].mxu0 %v1450
      %v1552 = vpop.f32.mrb[0].mxu0
      %v1553 = vadd.f32 0.0, %v1552
      %v1554 = vpop.f32.mrb[0].mxu0
      %1555 = vmatprep.mubr.f32.mxu0 0.0
      %1556 = vmatmul.mubr.f32.gmra.mrb[0].mxu0 %v1451
      %v1557 = vpop.f32.mrb[0].mxu0
      %v1558 = vadd.f32 0.0, %v1557
      %v1559 = vpop.f32.mrb[0].mxu0
      %1560 = vmatprep.mubr.f32.mxu0 0.0
      %1561 = vmatmul.mubr.f32.gmra.mrb[0].mxu0 %v1452
      %v1562 = vpop.f32.mrb[0].mxu0
      %v1563 = vadd.f32 0.0, %v1562
      %v1564 = vpop.f32.mrb[0].mxu0
      %1565 = vmatprep.mubr.f32.mxu0 0.0
      %1566 = vmatmul.mubr.f32.gmra.mrb[0].mxu0 %v1453
      %v1567 = vpop.f32.mrb[0].mxu0
      %v1568 = vadd.f32 0.0, %v1567
      %v1569 = vpop.f32.mrb[0].mxu0
      %1570 = vmatprep.mubr.f32.mxu0 0.0
      %1571 = vmatmul.mubr.f32.gmra.mrb[0].mxu0 %v1454
      %v1572 = vpop.f32.mrb[0].mxu0
      %v1573 = vadd.f32 0.0, %v1572
      %v1574 = vpop.f32.mrb[0].mxu0
      %1575 = vmatprep.mubr.f32.mxu0 0.0
      %1576 = vmatmul.mubr.f32.gmra.mrb[0].mxu0 %v1455
      %v1577 = vpop.f32.mrb[0].mxu0
      %v1578 = vadd.f32 0.0, %v1577
      %v1579 = vpop.f32.mrb[0].mxu0
      %1580 = vmatprep.mubr.f32.mxu0 0.0
      %1581 = vmatmul.mubr.f32.gmra.mrb[0].mxu0 %v1456
      %v1582 = vpop.f32.mrb[0].mxu0
      %v1583 = vadd.f32 0.0, %v1582
      %v1584 = vpop.f32.mrb[0].mxu0
      %1585 = vmatprep.mubr.f32.mxu0 0.0
      %1586 = vmatmul.mubr.f32.gmra.mrb[0].mxu0 %v1457
      %v1587 = vpop.f32.mrb[0].mxu0
      %v1588 = vadd.f32 0.0, %v1587
      %v1589 = vpop.f32.mrb[0].mxu0
      %1590 = vmatprep.mubr.f32.mxu0 0.0
      %1591 = vmatmul.mubr.f32.gmra.mrb[0].mxu0 %v1458
      %v1592 = vpop.f32.mrb[0].mxu0
      %v1593 = vadd.f32 0.0, %v1592
      %v1594 = vpop.f32.mrb[0].mxu0
      %1595 = vmatprep.mubr.f32.mxu0 0.0
      %1596 = vmatmul.mubr.f32.gmra.mrb[0].mxu0 %v1459
      %v1597 = vpop.f32.mrb[0].mxu0
      %v1598 = vadd.f32 0.0, %v1597
      %v1599 = vpop.f32.mrb[0].mxu0
      %1600 = vmatprep.mubr.f32.mxu0 0.0
      %1601 = vmatmul.mubr.f32.gmra.mrb[0].mxu0 %v1460
      %v1602 = vpop.f32.mrb[0].mxu0
      %v1603 = vadd.f32 0.0, %v1602
      %v1604 = vpop.f32.mrb[0].mxu0
      %1605 = vmatprep.mubr.f32.mxu0 0.0
      %1606 = vmatmul.mubr.f32.gmra.mrb[0].mxu0 %v1461
      %v1607 = vpop.f32.mrb[0].mxu0
      %v1608 = vadd.f32 0.0, %v1607
      %v1609 = vpop.f32.mrb[0].mxu0
      %1610 = vdwg.mxu0
      %v1611 = vadd.f32 %v1430, %v1533
      %v1612 = vadd.f32 %v1431, %v1538
      %v1613 = vadd.f32 %v1432, %v1543
      %v1614 = vadd.f32 %v1433, %v1548
      %v1615 = vadd.f32 %v1434, %v1553
      %v1616 = vadd.f32 %v1435, %v1558
      %v1617 = vadd.f32 %v1436, %v1563
      %v1618 = vadd.f32 %v1437, %v1568
      %v1619 = vadd.f32 %v1438, %v1573
      %v1620 = vadd.f32 %v1439, %v1578
      %v1621 = vadd.f32 %v1440, %v1583
      %v1622 = vadd.f32 %v1441, %v1588
      %v1623 = vadd.f32 %v1442, %v1593
      %v1624 = vadd.f32 %v1443, %v1598
      %v1625 = vadd.f32 %v1444, %v1603
      %v1626 = vadd.f32 %v1445, %v1608
      %v1627 = vld [vmem:[#allocation2 + $0x11] sm:$0xff]
      %v1628 = vld [vmem:[#allocation2 + $0x19] sm:$0xff]
      %v1629 = vld [vmem:[#allocation2 + $0x21] sm:$0xff]
      %v1630 = vld [vmem:[#allocation2 + $0x29] sm:$0xff]
      %v1631 = vld [vmem:[#allocation2 + $0x31] sm:$0xff]
      %v1632 = vld [vmem:[#allocation2 + $0x39] sm:$0xff]
      %v1633 = vld [vmem:[#allocation2 + $0x41] sm:$0xff]
      %v1634 = vld [vmem:[#allocation2 + $0x49] sm:$0xff]
      %v1635 = vld [vmem:[#allocation2 + $0x51] sm:$0xff]
      %v1636 = vld [vmem:[#allocation2 + $0x59] sm:$0xff]
      %v1637 = vld [vmem:[#allocation2 + $0x61] sm:$0xff]
      %v1638 = vld [vmem:[#allocation2 + $0x69] sm:$0xff]
      %v1639 = vld [vmem:[#allocation2 + $0x71] sm:$0xff]
      %v1640 = vld [vmem:[#allocation2 + $0x79] sm:$0xff]
      %v1641 = vld [vmem:[#allocation2 + $0x81] sm:$0xff]
      %v1642 = vld [vmem:[#allocation2 + $0x89] sm:$0xff]
      %s1643 = scalar_lea.vmem %s3, 144
      %v1644 = vld [vmem:[%s1643] sm:$0xff]
      %v1645 = vld [vmem:[%s1643 + $0x8] sm:$0xff]
      %v1646 = vld [vmem:[%s1643 + $0x10] sm:$0xff]
      %1647 = vmatprep.subr.mxu0 0.0
      %1648 = vmatpush1.msra.mxu0 %v1644
      %1649 = vmatprep.subr.mxu0 0.0
      %1650 = vmatpush1.msra.mxu0 %v1645
      %1651 = vmatprep.subr.mxu0 0.0
      %1652 = vmatpush1.msra.mxu0 %v1646
      %1653 = vmatprep.subr.mxu0 0.0
      %1654 = vmatpush1.msra.mxu0 0.0
      %1655 = vmatprep.subr.mxu0 0.0
      %1656 = vmatpush1.msra.mxu0 0.0
      %1657 = vmatprep.subr.mxu0 0.0
      %1658 = vmatpush1.msra.mxu0 0.0
      %1659 = vmatprep.subr.mxu0 0.0
      %1660 = vmatpush1.msra.mxu0 0.0
      %1661 = vmatprep.subr.mxu0 0.0
      %1662 = vmatpush1.msra.mxu0 0.0
      %1663 = vmatprep.subr.mxu0 0.0
      %1664 = vmatpush1.msra.mxu0 0.0
      %1665 = vmatprep.subr.mxu0 0.0
      %1666 = vmatpush1.msra.mxu0 0.0
      %1667 = vmatprep.subr.mxu0 0.0
      %1668 = vmatpush1.msra.mxu0 0.0
      %1669 = vmatprep.subr.mxu0 0.0
      %1670 = vmatpush1.msra.mxu0 0.0
      %1671 = vmatprep.subr.mxu0 0.0
      %1672 = vmatpush1.msra.mxu0 0.0
      %1673 = vmatprep.subr.mxu0 0.0
      %1674 = vmatpush1.msra.mxu0 0.0
      %1675 = vmatprep.subr.mxu0 0.0
      %1676 = vmatpush1.msra.mxu0 0.0
      %1677 = vmatprep.subr.mxu0 0.0
      %1678 = vmatpush1.msra.mxu0 0.0
      %1679 = vmatprep.subr.mxu0 0.0
      %1680 = vmatpush1.msra.mxu0 0.0
      %1681 = vmatprep.subr.mxu0 0.0
      %1682 = vmatpush1.msra.mxu0 0.0
      %1683 = vmatprep.subr.mxu0 0.0
      %1684 = vmatpush1.msra.mxu0 0.0
      %1685 = vmatprep.subr.mxu0 0.0
      %1686 = vmatpush1.msra.mxu0 0.0
      %1687 = vmatprep.subr.mxu0 0.0
      %1688 = vmatpush1.msra.mxu0 0.0
      %1689 = vmatprep.subr.mxu0 0.0
      %1690 = vmatpush1.msra.mxu0 0.0
      %1691 = vmatprep.subr.mxu0 0.0
      %1692 = vmatpush1.msra.mxu0 0.0
      %1693 = vmatprep.subr.mxu0 0.0
      %1694 = vmatpush1.msra.mxu0 0.0
      %1695 = vmatprep.subr.mxu0 0.0
      %1696 = vmatpush1.msra.mxu0 0.0
      %1697 = vmatprep.subr.mxu0 0.0
      %1698 = vmatpush1.msra.mxu0 0.0
      %1699 = vmatprep.subr.mxu0 0.0
      %1700 = vmatpush1.msra.mxu0 0.0
      %1701 = vmatprep.subr.mxu0 0.0
      %1702 = vmatpush1.msra.mxu0 0.0
      %1703 = vmatprep.subr.mxu0 0.0
      %1704 = vmatpush1.msra.mxu0 0.0
      %1705 = vmatprep.subr.mxu0 0.0
      %1706 = vmatpush1.msra.mxu0 0.0
      %1707 = vmatprep.subr.mxu0 0.0
      %1708 = vmatpush1.msra.mxu0 0.0
      %1709 = vmatprep.subr.mxu0 0.0
      %1710 = vmatpush1.msra.mxu0 0.0
      %1711 = vmatprep.mubr.f32.mxu0 0.0
      %1712 = vmatmul.mubr.f32.gmra.mrb[0].mxu0 %v1627
      %v1713 = vpop.f32.mrb[0].mxu0
      %v1714 = vadd.f32 0.0, %v1713
      %v1715 = vpop.f32.mrb[0].mxu0
      %1716 = vmatprep.mubr.f32.mxu0 0.0
      %1717 = vmatmul.mubr.f32.gmra.mrb[0].mxu0 %v1628
      %v1718 = vpop.f32.mrb[0].mxu0
      %v1719 = vadd.f32 0.0, %v1718
      %v1720 = vpop.f32.mrb[0].mxu0
      %1721 = vmatprep.mubr.f32.mxu0 0.0
      %1722 = vmatmul.mubr.f32.gmra.mrb[0].mxu0 %v1629
      %v1723 = vpop.f32.mrb[0].mxu0
      %v1724 = vadd.f32 0.0, %v1723
      %v1725 = vpop.f32.mrb[0].mxu0
      %1726 = vmatprep.mubr.f32.mxu0 0.0
      %1727 = vmatmul.mubr.f32.gmra.mrb[0].mxu0 %v1630
      %v1728 = vpop.f32.mrb[0].mxu0
      %v1729 = vadd.f32 0.0, %v1728
      %v1730 = vpop.f32.mrb[0].mxu0
      %1731 = vmatprep.mubr.f32.mxu0 0.0
      %1732 = vmatmul.mubr.f32.gmra.mrb[0].mxu0 %v1631
      %v1733 = vpop.f32.mrb[0].mxu0
      %v1734 = vadd.f32 0.0, %v1733
      %v1735 = vpop.f32.mrb[0].mxu0
      %1736 = vmatprep.mubr.f32.mxu0 0.0
      %1737 = vmatmul.mubr.f32.gmra.mrb[0].mxu0 %v1632
      %v1738 = vpop.f32.mrb[0].mxu0
      %v1739 = vadd.f32 0.0, %v1738
      %v1740 = vpop.f32.mrb[0].mxu0
      %1741 = vmatprep.mubr.f32.mxu0 0.0
      %1742 = vmatmul.mubr.f32.gmra.mrb[0].mxu0 %v1633
      %v1743 = vpop.f32.mrb[0].mxu0
      %v1744 = vadd.f32 0.0, %v1743
      %v1745 = vpop.f32.mrb[0].mxu0
      %1746 = vmatprep.mubr.f32.mxu0 0.0
      %1747 = vmatmul.mubr.f32.gmra.mrb[0].mxu0 %v1634
      %v1748 = vpop.f32.mrb[0].mxu0
      %v1749 = vadd.f32 0.0, %v1748
      %v1750 = vpop.f32.mrb[0].mxu0
      %1751 = vmatprep.mubr.f32.mxu0 0.0
      %1752 = vmatmul.mubr.f32.gmra.mrb[0].mxu0 %v1635
      %v1753 = vpop.f32.mrb[0].mxu0
      %v1754 = vadd.f32 0.0, %v1753
      %v1755 = vpop.f32.mrb[0].mxu0
      %1756 = vmatprep.mubr.f32.mxu0 0.0
      %1757 = vmatmul.mubr.f32.gmra.mrb[0].mxu0 %v1636
      %v1758 = vpop.f32.mrb[0].mxu0
      %v1759 = vadd.f32 0.0, %v1758
      %v1760 = vpop.f32.mrb[0].mxu0
      %1761 = vmatprep.mubr.f32.mxu0 0.0
      %1762 = vmatmul.mubr.f32.gmra.mrb[0].mxu0 %v1637
      %v1763 = vpop.f32.mrb[0].mxu0
      %v1764 = vadd.f32 0.0, %v1763
      %v1765 = vpop.f32.mrb[0].mxu0
      %1766 = vmatprep.mubr.f32.mxu0 0.0
      %1767 = vmatmul.mubr.f32.gmra.mrb[0].mxu0 %v1638
      %v1768 = vpop.f32.mrb[0].mxu0
      %v1769 = vadd.f32 0.0, %v1768
      %v1770 = vpop.f32.mrb[0].mxu0
      %1771 = vmatprep.mubr.f32.mxu0 0.0
      %1772 = vmatmul.mubr.f32.gmra.mrb[0].mxu0 %v1639
      %v1773 = vpop.f32.mrb[0].mxu0
      %v1774 = vadd.f32 0.0, %v1773
      %v1775 = vpop.f32.mrb[0].mxu0
      %1776 = vmatprep.mubr.f32.mxu0 0.0
      %1777 = vmatmul.mubr.f32.gmra.mrb[0].mxu0 %v1640
      %v1778 = vpop.f32.mrb[0].mxu0
      %v1779 = vadd.f32 0.0, %v1778
      %v1780 = vpop.f32.mrb[0].mxu0
      %1781 = vmatprep.mubr.f32.mxu0 0.0
      %1782 = vmatmul.mubr.f32.gmra.mrb[0].mxu0 %v1641
      %v1783 = vpop.f32.mrb[0].mxu0
      %v1784 = vadd.f32 0.0, %v1783
      %v1785 = vpop.f32.mrb[0].mxu0
      %1786 = vmatprep.mubr.f32.mxu0 0.0
      %1787 = vmatmul.mubr.f32.gmra.mrb[0].mxu0 %v1642
      %v1788 = vpop.f32.mrb[0].mxu0
      %v1789 = vadd.f32 0.0, %v1788
      %v1790 = vpop.f32.mrb[0].mxu0
      %1791 = vdwg.mxu0
      %v1792 = vadd.f32 %v1611, %v1714
      %v1793 = vadd.f32 %v1612, %v1719
      %v1794 = vadd.f32 %v1613, %v1724
      %v1795 = vadd.f32 %v1614, %v1729
      %v1796 = vadd.f32 %v1615, %v1734
      %v1797 = vadd.f32 %v1616, %v1739
      %v1798 = vadd.f32 %v1617, %v1744
      %v1799 = vadd.f32 %v1618, %v1749
      %v1800 = vadd.f32 %v1619, %v1754
      %v1801 = vadd.f32 %v1620, %v1759
      %v1802 = vadd.f32 %v1621, %v1764
      %v1803 = vadd.f32 %v1622, %v1769
      %v1804 = vadd.f32 %v1623, %v1774
      %v1805 = vadd.f32 %v1624, %v1779
      %v1806 = vadd.f32 %v1625, %v1784
      %v1807 = vadd.f32 %v1626, %v1789
      %v1808 = vld [vmem:[#allocation2 + $0x12] sm:$0xff]
      %v1809 = vld [vmem:[#allocation2 + $0x1a] sm:$0xff]
      %v1810 = vld [vmem:[#allocation2 + $0x22] sm:$0xff]
      %v1811 = vld [vmem:[#allocation2 + $0x2a] sm:$0xff]
      %v1812 = vld [vmem:[#allocation2 + $0x32] sm:$0xff]
      %v1813 = vld [vmem:[#allocation2 + $0x3a] sm:$0xff]
      %v1814 = vld [vmem:[#allocation2 + $0x42] sm:$0xff]
      %v1815 = vld [vmem:[#allocation2 + $0x4a] sm:$0xff]
      %v1816 = vld [vmem:[#allocation2 + $0x52] sm:$0xff]
      %v1817 = vld [vmem:[#allocation2 + $0x5a] sm:$0xff]
      %v1818 = vld [vmem:[#allocation2 + $0x62] sm:$0xff]
      %v1819 = vld [vmem:[#allocation2 + $0x6a] sm:$0xff]
      %v1820 = vld [vmem:[#allocation2 + $0x72] sm:$0xff]
      %v1821 = vld [vmem:[#allocation2 + $0x7a] sm:$0xff]
      %v1822 = vld [vmem:[#allocation2 + $0x82] sm:$0xff]
      %v1823 = vld [vmem:[#allocation2 + $0x8a] sm:$0xff]
      %s1824 = scalar_lea.vmem %s3, 168
      %v1825 = vld [vmem:[%s1824] sm:$0xff]
      %v1826 = vld [vmem:[%s1824 + $0x8] sm:$0xff]
      %v1827 = vld [vmem:[%s1824 + $0x10] sm:$0xff]
      %1828 = vmatprep.subr.mxu0 0.0
      %1829 = vmatpush1.msra.mxu0 %v1825
      %1830 = vmatprep.subr.mxu0 0.0
      %1831 = vmatpush1.msra.mxu0 %v1826
      %1832 = vmatprep.subr.mxu0 0.0
      %1833 = vmatpush1.msra.mxu0 %v1827
      %1834 = vmatprep.subr.mxu0 0.0
      %1835 = vmatpush1.msra.mxu0 0.0
      %1836 = vmatprep.subr.mxu0 0.0
      %1837 = vmatpush1.msra.mxu0 0.0
      %1838 = vmatprep.subr.mxu0 0.0
      %1839 = vmatpush1.msra.mxu0 0.0
      %1840 = vmatprep.subr.mxu0 0.0
      %1841 = vmatpush1.msra.mxu0 0.0
      %1842 = vmatprep.subr.mxu0 0.0
      %1843 = vmatpush1.msra.mxu0 0.0
      %1844 = vmatprep.subr.mxu0 0.0
      %1845 = vmatpush1.msra.mxu0 0.0
      %1846 = vmatprep.subr.mxu0 0.0
      %1847 = vmatpush1.msra.mxu0 0.0
      %1848 = vmatprep.subr.mxu0 0.0
      %1849 = vmatpush1.msra.mxu0 0.0
      %1850 = vmatprep.subr.mxu0 0.0
      %1851 = vmatpush1.msra.mxu0 0.0
      %1852 = vmatprep.subr.mxu0 0.0
      %1853 = vmatpush1.msra.mxu0 0.0
      %1854 = vmatprep.subr.mxu0 0.0
      %1855 = vmatpush1.msra.mxu0 0.0
      %1856 = vmatprep.subr.mxu0 0.0
      %1857 = vmatpush1.msra.mxu0 0.0
      %1858 = vmatprep.subr.mxu0 0.0
      %1859 = vmatpush1.msra.mxu0 0.0
      %1860 = vmatprep.subr.mxu0 0.0
      %1861 = vmatpush1.msra.mxu0 0.0
      %1862 = vmatprep.subr.mxu0 0.0
      %1863 = vmatpush1.msra.mxu0 0.0
      %1864 = vmatprep.subr.mxu0 0.0
      %1865 = vmatpush1.msra.mxu0 0.0
      %1866 = vmatprep.subr.mxu0 0.0
      %1867 = vmatpush1.msra.mxu0 0.0
      %1868 = vmatprep.subr.mxu0 0.0
      %1869 = vmatpush1.msra.mxu0 0.0
      %1870 = vmatprep.subr.mxu0 0.0
      %1871 = vmatpush1.msra.mxu0 0.0
      %1872 = vmatprep.subr.mxu0 0.0
      %1873 = vmatpush1.msra.mxu0 0.0
      %1874 = vmatprep.subr.mxu0 0.0
      %1875 = vmatpush1.msra.mxu0 0.0
      %1876 = vmatprep.subr.mxu0 0.0
      %1877 = vmatpush1.msra.mxu0 0.0
      %1878 = vmatprep.subr.mxu0 0.0
      %1879 = vmatpush1.msra.mxu0 0.0
      %1880 = vmatprep.subr.mxu0 0.0
      %1881 = vmatpush1.msra.mxu0 0.0
      %1882 = vmatprep.subr.mxu0 0.0
      %1883 = vmatpush1.msra.mxu0 0.0
      %1884 = vmatprep.subr.mxu0 0.0
      %1885 = vmatpush1.msra.mxu0 0.0
      %1886 = vmatprep.subr.mxu0 0.0
      %1887 = vmatpush1.msra.mxu0 0.0
      %1888 = vmatprep.subr.mxu0 0.0
      %1889 = vmatpush1.msra.mxu0 0.0
      %1890 = vmatprep.subr.mxu0 0.0
      %1891 = vmatpush1.msra.mxu0 0.0
      %1892 = vmatprep.mubr.f32.mxu0 0.0
      %1893 = vmatmul.mubr.f32.gmra.mrb[0].mxu0 %v1808
      %v1894 = vpop.f32.mrb[0].mxu0
      %v1895 = vadd.f32 0.0, %v1894
      %v1896 = vpop.f32.mrb[0].mxu0
      %1897 = vmatprep.mubr.f32.mxu0 0.0
      %1898 = vmatmul.mubr.f32.gmra.mrb[0].mxu0 %v1809
      %v1899 = vpop.f32.mrb[0].mxu0
      %v1900 = vadd.f32 0.0, %v1899
      %v1901 = vpop.f32.mrb[0].mxu0
      %1902 = vmatprep.mubr.f32.mxu0 0.0
      %1903 = vmatmul.mubr.f32.gmra.mrb[0].mxu0 %v1810
      %v1904 = vpop.f32.mrb[0].mxu0
      %v1905 = vadd.f32 0.0, %v1904
      %v1906 = vpop.f32.mrb[0].mxu0
      %1907 = vmatprep.mubr.f32.mxu0 0.0
      %1908 = vmatmul.mubr.f32.gmra.mrb[0].mxu0 %v1811
      %v1909 = vpop.f32.mrb[0].mxu0
      %v1910 = vadd.f32 0.0, %v1909
      %v1911 = vpop.f32.mrb[0].mxu0
      %1912 = vmatprep.mubr.f32.mxu0 0.0
      %1913 = vmatmul.mubr.f32.gmra.mrb[0].mxu0 %v1812
      %v1914 = vpop.f32.mrb[0].mxu0
      %v1915 = vadd.f32 0.0, %v1914
      %v1916 = vpop.f32.mrb[0].mxu0
      %1917 = vmatprep.mubr.f32.mxu0 0.0
      %1918 = vmatmul.mubr.f32.gmra.mrb[0].mxu0 %v1813
      %v1919 = vpop.f32.mrb[0].mxu0
      %v1920 = vadd.f32 0.0, %v1919
      %v1921 = vpop.f32.mrb[0].mxu0
      %1922 = vmatprep.mubr.f32.mxu0 0.0
      %1923 = vmatmul.mubr.f32.gmra.mrb[0].mxu0 %v1814
      %v1924 = vpop.f32.mrb[0].mxu0
      %v1925 = vadd.f32 0.0, %v1924
      %v1926 = vpop.f32.mrb[0].mxu0
      %1927 = vmatprep.mubr.f32.mxu0 0.0
      %1928 = vmatmul.mubr.f32.gmra.mrb[0].mxu0 %v1815
      %v1929 = vpop.f32.mrb[0].mxu0
      %v1930 = vadd.f32 0.0, %v1929
      %v1931 = vpop.f32.mrb[0].mxu0
      %1932 = vmatprep.mubr.f32.mxu0 0.0
      %1933 = vmatmul.mubr.f32.gmra.mrb[0].mxu0 %v1816
      %v1934 = vpop.f32.mrb[0].mxu0
      %v1935 = vadd.f32 0.0, %v1934
      %v1936 = vpop.f32.mrb[0].mxu0
      %1937 = vmatprep.mubr.f32.mxu0 0.0
      %1938 = vmatmul.mubr.f32.gmra.mrb[0].mxu0 %v1817
      %v1939 = vpop.f32.mrb[0].mxu0
      %v1940 = vadd.f32 0.0, %v1939
      %v1941 = vpop.f32.mrb[0].mxu0
      %1942 = vmatprep.mubr.f32.mxu0 0.0
      %1943 = vmatmul.mubr.f32.gmra.mrb[0].mxu0 %v1818
      %v1944 = vpop.f32.mrb[0].mxu0
      %v1945 = vadd.f32 0.0, %v1944
      %v1946 = vpop.f32.mrb[0].mxu0
      %1947 = vmatprep.mubr.f32.mxu0 0.0
      %1948 = vmatmul.mubr.f32.gmra.mrb[0].mxu0 %v1819
      %v1949 = vpop.f32.mrb[0].mxu0
      %v1950 = vadd.f32 0.0, %v1949
      %v1951 = vpop.f32.mrb[0].mxu0
      %1952 = vmatprep.mubr.f32.mxu0 0.0
      %1953 = vmatmul.mubr.f32.gmra.mrb[0].mxu0 %v1820
      %v1954 = vpop.f32.mrb[0].mxu0
      %v1955 = vadd.f32 0.0, %v1954
      %v1956 = vpop.f32.mrb[0].mxu0
      %1957 = vmatprep.mubr.f32.mxu0 0.0
      %1958 = vmatmul.mubr.f32.gmra.mrb[0].mxu0 %v1821
      %v1959 = vpop.f32.mrb[0].mxu0
      %v1960 = vadd.f32 0.0, %v1959
      %v1961 = vpop.f32.mrb[0].mxu0
      %1962 = vmatprep.mubr.f32.mxu0 0.0
      %1963 = vmatmul.mubr.f32.gmra.mrb[0].mxu0 %v1822
      %v1964 = vpop.f32.mrb[0].mxu0
      %v1965 = vadd.f32 0.0, %v1964
      %v1966 = vpop.f32.mrb[0].mxu0
      %1967 = vmatprep.mubr.f32.mxu0 0.0
      %1968 = vmatmul.mubr.f32.gmra.mrb[0].mxu0 %v1823
      %v1969 = vpop.f32.mrb[0].mxu0
      %v1970 = vadd.f32 0.0, %v1969
      %v1971 = vpop.f32.mrb[0].mxu0
      %1972 = vdwg.mxu0
      %v1973 = vadd.f32 %v1792, %v1895
      %v1974 = vadd.f32 %v1793, %v1900
      %v1975 = vadd.f32 %v1794, %v1905
      %v1976 = vadd.f32 %v1795, %v1910
      %v1977 = vadd.f32 %v1796, %v1915
      %v1978 = vadd.f32 %v1797, %v1920
      %v1979 = vadd.f32 %v1798, %v1925
      %v1980 = vadd.f32 %v1799, %v1930
      %v1981 = vadd.f32 %v1800, %v1935
      %v1982 = vadd.f32 %v1801, %v1940
      %v1983 = vadd.f32 %v1802, %v1945
      %v1984 = vadd.f32 %v1803, %v1950
      %v1985 = vadd.f32 %v1804, %v1955
      %v1986 = vadd.f32 %v1805, %v1960
      %v1987 = vadd.f32 %v1806, %v1965
      %v1988 = vadd.f32 %v1807, %v1970
      %v1989 = vld [vmem:[#allocation2 + $0x13] sm:$0xff]
      %v1990 = vld [vmem:[#allocation2 + $0x1b] sm:$0xff]
      %v1991 = vld [vmem:[#allocation2 + $0x23] sm:$0xff]
      %v1992 = vld [vmem:[#allocation2 + $0x2b] sm:$0xff]
      %v1993 = vld [vmem:[#allocation2 + $0x33] sm:$0xff]
      %v1994 = vld [vmem:[#allocation2 + $0x3b] sm:$0xff]
      %v1995 = vld [vmem:[#allocation2 + $0x43] sm:$0xff]
      %v1996 = vld [vmem:[#allocation2 + $0x4b] sm:$0xff]
      %v1997 = vld [vmem:[#allocation2 + $0x53] sm:$0xff]
      %v1998 = vld [vmem:[#allocation2 + $0x5b] sm:$0xff]
      %v1999 = vld [vmem:[#allocation2 + $0x63] sm:$0xff]
      %v2000 = vld [vmem:[#allocation2 + $0x6b] sm:$0xff]
      %v2001 = vld [vmem:[#allocation2 + $0x73] sm:$0xff]
      %v2002 = vld [vmem:[#allocation2 + $0x7b] sm:$0xff]
      %v2003 = vld [vmem:[#allocation2 + $0x83] sm:$0xff]
      %v2004 = vld [vmem:[#allocation2 + $0x8b] sm:$0xff]
      %s2005 = scalar_lea.vmem %s3, 192
      %v2006 = vld [vmem:[%s2005] sm:$0xff]
      %v2007 = vld [vmem:[%s2005 + $0x8] sm:$0xff]
      %v2008 = vld [vmem:[%s2005 + $0x10] sm:$0xff]
      %2009 = vmatprep.subr.mxu0 0.0
      %2010 = vmatpush1.msra.mxu0 %v2006
      %2011 = vmatprep.subr.mxu0 0.0
      %2012 = vmatpush1.msra.mxu0 %v2007
      %2013 = vmatprep.subr.mxu0 0.0
      %2014 = vmatpush1.msra.mxu0 %v2008
      %2015 = vmatprep.subr.mxu0 0.0
      %2016 = vmatpush1.msra.mxu0 0.0
      %2017 = vmatprep.subr.mxu0 0.0
      %2018 = vmatpush1.msra.mxu0 0.0
      %2019 = vmatprep.subr.mxu0 0.0
      %2020 = vmatpush1.msra.mxu0 0.0
      %2021 = vmatprep.subr.mxu0 0.0
      %2022 = vmatpush1.msra.mxu0 0.0
      %2023 = vmatprep.subr.mxu0 0.0
      %2024 = vmatpush1.msra.mxu0 0.0
      %2025 = vmatprep.subr.mxu0 0.0
      %2026 = vmatpush1.msra.mxu0 0.0
      %2027 = vmatprep.subr.mxu0 0.0
      %2028 = vmatpush1.msra.mxu0 0.0
      %2029 = vmatprep.subr.mxu0 0.0
      %2030 = vmatpush1.msra.mxu0 0.0
      %2031 = vmatprep.subr.mxu0 0.0
      %2032 = vmatpush1.msra.mxu0 0.0
      %2033 = vmatprep.subr.mxu0 0.0
      %2034 = vmatpush1.msra.mxu0 0.0
      %2035 = vmatprep.subr.mxu0 0.0
      %2036 = vmatpush1.msra.mxu0 0.0
      %2037 = vmatprep.subr.mxu0 0.0
      %2038 = vmatpush1.msra.mxu0 0.0
      %2039 = vmatprep.subr.mxu0 0.0
      %2040 = vmatpush1.msra.mxu0 0.0
      %2041 = vmatprep.subr.mxu0 0.0
      %2042 = vmatpush1.msra.mxu0 0.0
      %2043 = vmatprep.subr.mxu0 0.0
      %2044 = vmatpush1.msra.mxu0 0.0
      %2045 = vmatprep.subr.mxu0 0.0
      %2046 = vmatpush1.msra.mxu0 0.0
      %2047 = vmatprep.subr.mxu0 0.0
      %2048 = vmatpush1.msra.mxu0 0.0
      %2049 = vmatprep.subr.mxu0 0.0
      %2050 = vmatpush1.msra.mxu0 0.0
      %2051 = vmatprep.subr.mxu0 0.0
      %2052 = vmatpush1.msra.mxu0 0.0
      %2053 = vmatprep.subr.mxu0 0.0
      %2054 = vmatpush1.msra.mxu0 0.0
      %2055 = vmatprep.subr.mxu0 0.0
      %2056 = vmatpush1.msra.mxu0 0.0
      %2057 = vmatprep.subr.mxu0 0.0
      %2058 = vmatpush1.msra.mxu0 0.0
      %2059 = vmatprep.subr.mxu0 0.0
      %2060 = vmatpush1.msra.mxu0 0.0
      %2061 = vmatprep.subr.mxu0 0.0
      %2062 = vmatpush1.msra.mxu0 0.0
      %2063 = vmatprep.subr.mxu0 0.0
      %2064 = vmatpush1.msra.mxu0 0.0
      %2065 = vmatprep.subr.mxu0 0.0
      %2066 = vmatpush1.msra.mxu0 0.0
      %2067 = vmatprep.subr.mxu0 0.0
      %2068 = vmatpush1.msra.mxu0 0.0
      %2069 = vmatprep.subr.mxu0 0.0
      %2070 = vmatpush1.msra.mxu0 0.0
      %2071 = vmatprep.subr.mxu0 0.0
      %2072 = vmatpush1.msra.mxu0 0.0
      %2073 = vmatprep.mubr.f32.mxu0 0.0
      %2074 = vmatmul.mubr.f32.gmra.mrb[0].mxu0 %v1989
      %v2075 = vpop.f32.mrb[0].mxu0
      %v2076 = vadd.f32 0.0, %v2075
      %v2077 = vpop.f32.mrb[0].mxu0
      %2078 = vmatprep.mubr.f32.mxu0 0.0
      %2079 = vmatmul.mubr.f32.gmra.mrb[0].mxu0 %v1990
      %v2080 = vpop.f32.mrb[0].mxu0
      %v2081 = vadd.f32 0.0, %v2080
      %v2082 = vpop.f32.mrb[0].mxu0
      %2083 = vmatprep.mubr.f32.mxu0 0.0
      %2084 = vmatmul.mubr.f32.gmra.mrb[0].mxu0 %v1991
      %v2085 = vpop.f32.mrb[0].mxu0
      %v2086 = vadd.f32 0.0, %v2085
      %v2087 = vpop.f32.mrb[0].mxu0
      %2088 = vmatprep.mubr.f32.mxu0 0.0
      %2089 = vmatmul.mubr.f32.gmra.mrb[0].mxu0 %v1992
      %v2090 = vpop.f32.mrb[0].mxu0
      %v2091 = vadd.f32 0.0, %v2090
      %v2092 = vpop.f32.mrb[0].mxu0
      %2093 = vmatprep.mubr.f32.mxu0 0.0
      %2094 = vmatmul.mubr.f32.gmra.mrb[0].mxu0 %v1993
      %v2095 = vpop.f32.mrb[0].mxu0
      %v2096 = vadd.f32 0.0, %v2095
      %v2097 = vpop.f32.mrb[0].mxu0
      %2098 = vmatprep.mubr.f32.mxu0 0.0
      %2099 = vmatmul.mubr.f32.gmra.mrb[0].mxu0 %v1994
      %v2100 = vpop.f32.mrb[0].mxu0
      %v2101 = vadd.f32 0.0, %v2100
      %v2102 = vpop.f32.mrb[0].mxu0
      %2103 = vmatprep.mubr.f32.mxu0 0.0
      %2104 = vmatmul.mubr.f32.gmra.mrb[0].mxu0 %v1995
      %v2105 = vpop.f32.mrb[0].mxu0
      %v2106 = vadd.f32 0.0, %v2105
      %v2107 = vpop.f32.mrb[0].mxu0
      %2108 = vmatprep.mubr.f32.mxu0 0.0
      %2109 = vmatmul.mubr.f32.gmra.mrb[0].mxu0 %v1996
      %v2110 = vpop.f32.mrb[0].mxu0
      %v2111 = vadd.f32 0.0, %v2110
      %v2112 = vpop.f32.mrb[0].mxu0
      %2113 = vmatprep.mubr.f32.mxu0 0.0
      %2114 = vmatmul.mubr.f32.gmra.mrb[0].mxu0 %v1997
      %v2115 = vpop.f32.mrb[0].mxu0
      %v2116 = vadd.f32 0.0, %v2115
      %v2117 = vpop.f32.mrb[0].mxu0
      %2118 = vmatprep.mubr.f32.mxu0 0.0
      %2119 = vmatmul.mubr.f32.gmra.mrb[0].mxu0 %v1998
      %v2120 = vpop.f32.mrb[0].mxu0
      %v2121 = vadd.f32 0.0, %v2120
      %v2122 = vpop.f32.mrb[0].mxu0
      %2123 = vmatprep.mubr.f32.mxu0 0.0
      %2124 = vmatmul.mubr.f32.gmra.mrb[0].mxu0 %v1999
      %v2125 = vpop.f32.mrb[0].mxu0
      %v2126 = vadd.f32 0.0, %v2125
      %v2127 = vpop.f32.mrb[0].mxu0
      %2128 = vmatprep.mubr.f32.mxu0 0.0
      %2129 = vmatmul.mubr.f32.gmra.mrb[0].mxu0 %v2000
      %v2130 = vpop.f32.mrb[0].mxu0
      %v2131 = vadd.f32 0.0, %v2130
      %v2132 = vpop.f32.mrb[0].mxu0
      %2133 = vmatprep.mubr.f32.mxu0 0.0
      %2134 = vmatmul.mubr.f32.gmra.mrb[0].mxu0 %v2001
      %v2135 = vpop.f32.mrb[0].mxu0
      %v2136 = vadd.f32 0.0, %v2135
      %v2137 = vpop.f32.mrb[0].mxu0
      %2138 = vmatprep.mubr.f32.mxu0 0.0
      %2139 = vmatmul.mubr.f32.gmra.mrb[0].mxu0 %v2002
      %v2140 = vpop.f32.mrb[0].mxu0
      %v2141 = vadd.f32 0.0, %v2140
      %v2142 = vpop.f32.mrb[0].mxu0
      %2143 = vmatprep.mubr.f32.mxu0 0.0
      %2144 = vmatmul.mubr.f32.gmra.mrb[0].mxu0 %v2003
      %v2145 = vpop.f32.mrb[0].mxu0
      %v2146 = vadd.f32 0.0, %v2145
      %v2147 = vpop.f32.mrb[0].mxu0
      %2148 = vmatprep.mubr.f32.mxu0 0.0
      %2149 = vmatmul.mubr.f32.gmra.mrb[0].mxu0 %v2004
      %v2150 = vpop.f32.mrb[0].mxu0
      %v2151 = vadd.f32 0.0, %v2150
      %v2152 = vpop.f32.mrb[0].mxu0
      %2153 = vdwg.mxu0
      %v2154 = vadd.f32 %v1973, %v2076
      %v2155 = vadd.f32 %v1974, %v2081
      %v2156 = vadd.f32 %v1975, %v2086
      %v2157 = vadd.f32 %v1976, %v2091
      %v2158 = vadd.f32 %v1977, %v2096
      %v2159 = vadd.f32 %v1978, %v2101
      %v2160 = vadd.f32 %v1979, %v2106
      %v2161 = vadd.f32 %v1980, %v2111
      %v2162 = vadd.f32 %v1981, %v2116
      %v2163 = vadd.f32 %v1982, %v2121
      %v2164 = vadd.f32 %v1983, %v2126
      %v2165 = vadd.f32 %v1984, %v2131
      %v2166 = vadd.f32 %v1985, %v2136
      %v2167 = vadd.f32 %v1986, %v2141
      %v2168 = vadd.f32 %v1987, %v2146
      %v2169 = vadd.f32 %v1988, %v2151
      %v2170 = vld [vmem:[#allocation2 + $0x14] sm:$0xff]
      %v2171 = vld [vmem:[#allocation2 + $0x1c] sm:$0xff]
      %v2172 = vld [vmem:[#allocation2 + $0x24] sm:$0xff]
      %v2173 = vld [vmem:[#allocation2 + $0x2c] sm:$0xff]
      %v2174 = vld [vmem:[#allocation2 + $0x34] sm:$0xff]
      %v2175 = vld [vmem:[#allocation2 + $0x3c] sm:$0xff]
      %v2176 = vld [vmem:[#allocation2 + $0x44] sm:$0xff]
      %v2177 = vld [vmem:[#allocation2 + $0x4c] sm:$0xff]
      %v2178 = vld [vmem:[#allocation2 + $0x54] sm:$0xff]
      %v2179 = vld [vmem:[#allocation2 + $0x5c] sm:$0xff]
      %v2180 = vld [vmem:[#allocation2 + $0x64] sm:$0xff]
      %v2181 = vld [vmem:[#allocation2 + $0x6c] sm:$0xff]
      %v2182 = vld [vmem:[#allocation2 + $0x74] sm:$0xff]
      %v2183 = vld [vmem:[#allocation2 + $0x7c] sm:$0xff]
      %v2184 = vld [vmem:[#allocation2 + $0x84] sm:$0xff]
      %v2185 = vld [vmem:[#allocation2 + $0x8c] sm:$0xff]
      %s2186 = scalar_lea.vmem %s3, 216
      %v2187 = vld [vmem:[%s2186] sm:$0xff]
      %v2188 = vld [vmem:[%s2186 + $0x8] sm:$0xff]
      %v2189 = vld [vmem:[%s2186 + $0x10] sm:$0xff]
      %2190 = vmatprep.subr.mxu0 0.0
      %2191 = vmatpush1.msra.mxu0 %v2187
      %2192 = vmatprep.subr.mxu0 0.0
      %2193 = vmatpush1.msra.mxu0 %v2188
      %2194 = vmatprep.subr.mxu0 0.0
      %2195 = vmatpush1.msra.mxu0 %v2189
      %2196 = vmatprep.subr.mxu0 0.0
      %2197 = vmatpush1.msra.mxu0 0.0
      %2198 = vmatprep.subr.mxu0 0.0
      %2199 = vmatpush1.msra.mxu0 0.0
      %2200 = vmatprep.subr.mxu0 0.0
      %2201 = vmatpush1.msra.mxu0 0.0
      %2202 = vmatprep.subr.mxu0 0.0
      %2203 = vmatpush1.msra.mxu0 0.0
      %2204 = vmatprep.subr.mxu0 0.0
      %2205 = vmatpush1.msra.mxu0 0.0
      %2206 = vmatprep.subr.mxu0 0.0
      %2207 = vmatpush1.msra.mxu0 0.0
      %2208 = vmatprep.subr.mxu0 0.0
      %2209 = vmatpush1.msra.mxu0 0.0
      %2210 = vmatprep.subr.mxu0 0.0
      %2211 = vmatpush1.msra.mxu0 0.0
      %2212 = vmatprep.subr.mxu0 0.0
      %2213 = vmatpush1.msra.mxu0 0.0
      %2214 = vmatprep.subr.mxu0 0.0
      %2215 = vmatpush1.msra.mxu0 0.0
      %2216 = vmatprep.subr.mxu0 0.0
      %2217 = vmatpush1.msra.mxu0 0.0
      %2218 = vmatprep.subr.mxu0 0.0
      %2219 = vmatpush1.msra.mxu0 0.0
      %2220 = vmatprep.subr.mxu0 0.0
      %2221 = vmatpush1.msra.mxu0 0.0
      %2222 = vmatprep.subr.mxu0 0.0
      %2223 = vmatpush1.msra.mxu0 0.0
      %2224 = vmatprep.subr.mxu0 0.0
      %2225 = vmatpush1.msra.mxu0 0.0
      %2226 = vmatprep.subr.mxu0 0.0
      %2227 = vmatpush1.msra.mxu0 0.0
      %2228 = vmatprep.subr.mxu0 0.0
      %2229 = vmatpush1.msra.mxu0 0.0
      %2230 = vmatprep.subr.mxu0 0.0
      %2231 = vmatpush1.msra.mxu0 0.0
      %2232 = vmatprep.subr.mxu0 0.0
      %2233 = vmatpush1.msra.mxu0 0.0
      %2234 = vmatprep.subr.mxu0 0.0
      %2235 = vmatpush1.msra.mxu0 0.0
      %2236 = vmatprep.subr.mxu0 0.0
      %2237 = vmatpush1.msra.mxu0 0.0
      %2238 = vmatprep.subr.mxu0 0.0
      %2239 = vmatpush1.msra.mxu0 0.0
      %2240 = vmatprep.subr.mxu0 0.0
      %2241 = vmatpush1.msra.mxu0 0.0
      %2242 = vmatprep.subr.mxu0 0.0
      %2243 = vmatpush1.msra.mxu0 0.0
      %2244 = vmatprep.subr.mxu0 0.0
      %2245 = vmatpush1.msra.mxu0 0.0
      %2246 = vmatprep.subr.mxu0 0.0
      %2247 = vmatpush1.msra.mxu0 0.0
      %2248 = vmatprep.subr.mxu0 0.0
      %2249 = vmatpush1.msra.mxu0 0.0
      %2250 = vmatprep.subr.mxu0 0.0
      %2251 = vmatpush1.msra.mxu0 0.0
      %2252 = vmatprep.subr.mxu0 0.0
      %2253 = vmatpush1.msra.mxu0 0.0
      %2254 = vmatprep.mubr.f32.mxu0 0.0
      %2255 = vmatmul.mubr.f32.gmra.mrb[0].mxu0 %v2170
      %v2256 = vpop.f32.mrb[0].mxu0
      %v2257 = vadd.f32 0.0, %v2256
      %v2258 = vpop.f32.mrb[0].mxu0
      %2259 = vmatprep.mubr.f32.mxu0 0.0
      %2260 = vmatmul.mubr.f32.gmra.mrb[0].mxu0 %v2171
      %v2261 = vpop.f32.mrb[0].mxu0
      %v2262 = vadd.f32 0.0, %v2261
      %v2263 = vpop.f32.mrb[0].mxu0
      %2264 = vmatprep.mubr.f32.mxu0 0.0
      %2265 = vmatmul.mubr.f32.gmra.mrb[0].mxu0 %v2172
      %v2266 = vpop.f32.mrb[0].mxu0
      %v2267 = vadd.f32 0.0, %v2266
      %v2268 = vpop.f32.mrb[0].mxu0
      %2269 = vmatprep.mubr.f32.mxu0 0.0
      %2270 = vmatmul.mubr.f32.gmra.mrb[0].mxu0 %v2173
      %v2271 = vpop.f32.mrb[0].mxu0
      %v2272 = vadd.f32 0.0, %v2271
      %v2273 = vpop.f32.mrb[0].mxu0
      %2274 = vmatprep.mubr.f32.mxu0 0.0
      %2275 = vmatmul.mubr.f32.gmra.mrb[0].mxu0 %v2174
      %v2276 = vpop.f32.mrb[0].mxu0
      %v2277 = vadd.f32 0.0, %v2276
      %v2278 = vpop.f32.mrb[0].mxu0
      %2279 = vmatprep.mubr.f32.mxu0 0.0
      %2280 = vmatmul.mubr.f32.gmra.mrb[0].mxu0 %v2175
      %v2281 = vpop.f32.mrb[0].mxu0
      %v2282 = vadd.f32 0.0, %v2281
      %v2283 = vpop.f32.mrb[0].mxu0
      %2284 = vmatprep.mubr.f32.mxu0 0.0
      %2285 = vmatmul.mubr.f32.gmra.mrb[0].mxu0 %v2176
      %v2286 = vpop.f32.mrb[0].mxu0
      %v2287 = vadd.f32 0.0, %v2286
      %v2288 = vpop.f32.mrb[0].mxu0
      %2289 = vmatprep.mubr.f32.mxu0 0.0
      %2290 = vmatmul.mubr.f32.gmra.mrb[0].mxu0 %v2177
      %v2291 = vpop.f32.mrb[0].mxu0
      %v2292 = vadd.f32 0.0, %v2291
      %v2293 = vpop.f32.mrb[0].mxu0
      %2294 = vmatprep.mubr.f32.mxu0 0.0
      %2295 = vmatmul.mubr.f32.gmra.mrb[0].mxu0 %v2178
      %v2296 = vpop.f32.mrb[0].mxu0
      %v2297 = vadd.f32 0.0, %v2296
      %v2298 = vpop.f32.mrb[0].mxu0
      %2299 = vmatprep.mubr.f32.mxu0 0.0
      %2300 = vmatmul.mubr.f32.gmra.mrb[0].mxu0 %v2179
      %v2301 = vpop.f32.mrb[0].mxu0
      %v2302 = vadd.f32 0.0, %v2301
      %v2303 = vpop.f32.mrb[0].mxu0
      %2304 = vmatprep.mubr.f32.mxu0 0.0
      %2305 = vmatmul.mubr.f32.gmra.mrb[0].mxu0 %v2180
      %v2306 = vpop.f32.mrb[0].mxu0
      %v2307 = vadd.f32 0.0, %v2306
      %v2308 = vpop.f32.mrb[0].mxu0
      %2309 = vmatprep.mubr.f32.mxu0 0.0
      %2310 = vmatmul.mubr.f32.gmra.mrb[0].mxu0 %v2181
      %v2311 = vpop.f32.mrb[0].mxu0
      %v2312 = vadd.f32 0.0, %v2311
      %v2313 = vpop.f32.mrb[0].mxu0
      %2314 = vmatprep.mubr.f32.mxu0 0.0
      %2315 = vmatmul.mubr.f32.gmra.mrb[0].mxu0 %v2182
      %v2316 = vpop.f32.mrb[0].mxu0
      %v2317 = vadd.f32 0.0, %v2316
      %v2318 = vpop.f32.mrb[0].mxu0
      %2319 = vmatprep.mubr.f32.mxu0 0.0
      %2320 = vmatmul.mubr.f32.gmra.mrb[0].mxu0 %v2183
      %v2321 = vpop.f32.mrb[0].mxu0
      %v2322 = vadd.f32 0.0, %v2321
      %v2323 = vpop.f32.mrb[0].mxu0
      %2324 = vmatprep.mubr.f32.mxu0 0.0
      %2325 = vmatmul.mubr.f32.gmra.mrb[0].mxu0 %v2184
      %v2326 = vpop.f32.mrb[0].mxu0
      %v2327 = vadd.f32 0.0, %v2326
      %v2328 = vpop.f32.mrb[0].mxu0
      %2329 = vmatprep.mubr.f32.mxu0 0.0
      %2330 = vmatmul.mubr.f32.gmra.mrb[0].mxu0 %v2185
      %v2331 = vpop.f32.mrb[0].mxu0
      %v2332 = vadd.f32 0.0, %v2331
      %v2333 = vpop.f32.mrb[0].mxu0
      %2334 = vdwg.mxu0
      %v2335 = vadd.f32 %v2154, %v2257
      %v2336 = vadd.f32 %v2155, %v2262
      %v2337 = vadd.f32 %v2156, %v2267
      %v2338 = vadd.f32 %v2157, %v2272
      %v2339 = vadd.f32 %v2158, %v2277
      %v2340 = vadd.f32 %v2159, %v2282
      %v2341 = vadd.f32 %v2160, %v2287
      %v2342 = vadd.f32 %v2161, %v2292
      %v2343 = vadd.f32 %v2162, %v2297
      %v2344 = vadd.f32 %v2163, %v2302
      %v2345 = vadd.f32 %v2164, %v2307
      %v2346 = vadd.f32 %v2165, %v2312
      %v2347 = vadd.f32 %v2166, %v2317
      %v2348 = vadd.f32 %v2167, %v2322
      %v2349 = vadd.f32 %v2168, %v2327
      %v2350 = vadd.f32 %v2169, %v2332
      %v2351 = vld [vmem:[#allocation2 + $0x20] sm:$0xff]
      %v2352 = vld [vmem:[#allocation2 + $0x28] sm:$0xff]
      %v2353 = vld [vmem:[#allocation2 + $0x30] sm:$0xff]
      %v2354 = vld [vmem:[#allocation2 + $0x38] sm:$0xff]
      %v2355 = vld [vmem:[#allocation2 + $0x40] sm:$0xff]
      %v2356 = vld [vmem:[#allocation2 + $0x48] sm:$0xff]
      %v2357 = vld [vmem:[#allocation2 + $0x50] sm:$0xff]
      %v2358 = vld [vmem:[#allocation2 + $0x58] sm:$0xff]
      %v2359 = vld [vmem:[#allocation2 + $0x60] sm:$0xff]
      %v2360 = vld [vmem:[#allocation2 + $0x68] sm:$0xff]
      %v2361 = vld [vmem:[#allocation2 + $0x70] sm:$0xff]
      %v2362 = vld [vmem:[#allocation2 + $0x78] sm:$0xff]
      %v2363 = vld [vmem:[#allocation2 + $0x80] sm:$0xff]
      %v2364 = vld [vmem:[#allocation2 + $0x88] sm:$0xff]
      %v2365 = vld [vmem:[#allocation2 + $0x90] sm:$0xff]
      %v2366 = vld [vmem:[#allocation2 + $0x98] sm:$0xff]
      %s2367 = scalar_lea.vmem %s3, 240
      %v2368 = vld [vmem:[%s2367] sm:$0xff]
      %v2369 = vld [vmem:[%s2367 + $0x8] sm:$0xff]
      %v2370 = vld [vmem:[%s2367 + $0x10] sm:$0xff]
      %2371 = vmatprep.subr.mxu0 0.0
      %2372 = vmatpush1.msra.mxu0 %v2368
      %2373 = vmatprep.subr.mxu0 0.0
      %2374 = vmatpush1.msra.mxu0 %v2369
      %2375 = vmatprep.subr.mxu0 0.0
      %2376 = vmatpush1.msra.mxu0 %v2370
      %2377 = vmatprep.subr.mxu0 0.0
      %2378 = vmatpush1.msra.mxu0 0.0
      %2379 = vmatprep.subr.mxu0 0.0
      %2380 = vmatpush1.msra.mxu0 0.0
      %2381 = vmatprep.subr.mxu0 0.0
      %2382 = vmatpush1.msra.mxu0 0.0
      %2383 = vmatprep.subr.mxu0 0.0
      %2384 = vmatpush1.msra.mxu0 0.0
      %2385 = vmatprep.subr.mxu0 0.0
      %2386 = vmatpush1.msra.mxu0 0.0
      %2387 = vmatprep.subr.mxu0 0.0
      %2388 = vmatpush1.msra.mxu0 0.0
      %2389 = vmatprep.subr.mxu0 0.0
      %2390 = vmatpush1.msra.mxu0 0.0
      %2391 = vmatprep.subr.mxu0 0.0
      %2392 = vmatpush1.msra.mxu0 0.0
      %2393 = vmatprep.subr.mxu0 0.0
      %2394 = vmatpush1.msra.mxu0 0.0
      %2395 = vmatprep.subr.mxu0 0.0
      %2396 = vmatpush1.msra.mxu0 0.0
      %2397 = vmatprep.subr.mxu0 0.0
      %2398 = vmatpush1.msra.mxu0 0.0
      %2399 = vmatprep.subr.mxu0 0.0
      %2400 = vmatpush1.msra.mxu0 0.0
      %2401 = vmatprep.subr.mxu0 0.0
      %2402 = vmatpush1.msra.mxu0 0.0
      %2403 = vmatprep.subr.mxu0 0.0
      %2404 = vmatpush1.msra.mxu0 0.0
      %2405 = vmatprep.subr.mxu0 0.0
      %2406 = vmatpush1.msra.mxu0 0.0
      %2407 = vmatprep.subr.mxu0 0.0
      %2408 = vmatpush1.msra.mxu0 0.0
      %2409 = vmatprep.subr.mxu0 0.0
      %2410 = vmatpush1.msra.mxu0 0.0
      %2411 = vmatprep.subr.mxu0 0.0
      %2412 = vmatpush1.msra.mxu0 0.0
      %2413 = vmatprep.subr.mxu0 0.0
      %2414 = vmatpush1.msra.mxu0 0.0
      %2415 = vmatprep.subr.mxu0 0.0
      %2416 = vmatpush1.msra.mxu0 0.0
      %2417 = vmatprep.subr.mxu0 0.0
      %2418 = vmatpush1.msra.mxu0 0.0
      %2419 = vmatprep.subr.mxu0 0.0
      %2420 = vmatpush1.msra.mxu0 0.0
      %2421 = vmatprep.subr.mxu0 0.0
      %2422 = vmatpush1.msra.mxu0 0.0
      %2423 = vmatprep.subr.mxu0 0.0
      %2424 = vmatpush1.msra.mxu0 0.0
      %2425 = vmatprep.subr.mxu0 0.0
      %2426 = vmatpush1.msra.mxu0 0.0
      %2427 = vmatprep.subr.mxu0 0.0
      %2428 = vmatpush1.msra.mxu0 0.0
      %2429 = vmatprep.subr.mxu0 0.0
      %2430 = vmatpush1.msra.mxu0 0.0
      %2431 = vmatprep.subr.mxu0 0.0
      %2432 = vmatpush1.msra.mxu0 0.0
      %2433 = vmatprep.subr.mxu0 0.0
      %2434 = vmatpush1.msra.mxu0 0.0
      %2435 = vmatprep.mubr.f32.mxu0 0.0
      %2436 = vmatmul.mubr.f32.gmra.mrb[0].mxu0 %v2351
      %v2437 = vpop.f32.mrb[0].mxu0
      %v2438 = vadd.f32 0.0, %v2437
      %v2439 = vpop.f32.mrb[0].mxu0
      %2440 = vmatprep.mubr.f32.mxu0 0.0
      %2441 = vmatmul.mubr.f32.gmra.mrb[0].mxu0 %v2352
      %v2442 = vpop.f32.mrb[0].mxu0
      %v2443 = vadd.f32 0.0, %v2442
      %v2444 = vpop.f32.mrb[0].mxu0
      %2445 = vmatprep.mubr.f32.mxu0 0.0
      %2446 = vmatmul.mubr.f32.gmra.mrb[0].mxu0 %v2353
      %v2447 = vpop.f32.mrb[0].mxu0
      %v2448 = vadd.f32 0.0, %v2447
      %v2449 = vpop.f32.mrb[0].mxu0
      %2450 = vmatprep.mubr.f32.mxu0 0.0
      %2451 = vmatmul.mubr.f32.gmra.mrb[0].mxu0 %v2354
      %v2452 = vpop.f32.mrb[0].mxu0
      %v2453 = vadd.f32 0.0, %v2452
      %v2454 = vpop.f32.mrb[0].mxu0
      %2455 = vmatprep.mubr.f32.mxu0 0.0
      %2456 = vmatmul.mubr.f32.gmra.mrb[0].mxu0 %v2355
      %v2457 = vpop.f32.mrb[0].mxu0
      %v2458 = vadd.f32 0.0, %v2457
      %v2459 = vpop.f32.mrb[0].mxu0
      %2460 = vmatprep.mubr.f32.mxu0 0.0
      %2461 = vmatmul.mubr.f32.gmra.mrb[0].mxu0 %v2356
      %v2462 = vpop.f32.mrb[0].mxu0
      %v2463 = vadd.f32 0.0, %v2462
      %v2464 = vpop.f32.mrb[0].mxu0
      %2465 = vmatprep.mubr.f32.mxu0 0.0
      %2466 = vmatmul.mubr.f32.gmra.mrb[0].mxu0 %v2357
      %v2467 = vpop.f32.mrb[0].mxu0
      %v2468 = vadd.f32 0.0, %v2467
      %v2469 = vpop.f32.mrb[0].mxu0
      %2470 = vmatprep.mubr.f32.mxu0 0.0
      %2471 = vmatmul.mubr.f32.gmra.mrb[0].mxu0 %v2358
      %v2472 = vpop.f32.mrb[0].mxu0
      %v2473 = vadd.f32 0.0, %v2472
      %v2474 = vpop.f32.mrb[0].mxu0
      %2475 = vmatprep.mubr.f32.mxu0 0.0
      %2476 = vmatmul.mubr.f32.gmra.mrb[0].mxu0 %v2359
      %v2477 = vpop.f32.mrb[0].mxu0
      %v2478 = vadd.f32 0.0, %v2477
      %v2479 = vpop.f32.mrb[0].mxu0
      %2480 = vmatprep.mubr.f32.mxu0 0.0
      %2481 = vmatmul.mubr.f32.gmra.mrb[0].mxu0 %v2360
      %v2482 = vpop.f32.mrb[0].mxu0
      %v2483 = vadd.f32 0.0, %v2482
      %v2484 = vpop.f32.mrb[0].mxu0
      %2485 = vmatprep.mubr.f32.mxu0 0.0
      %2486 = vmatmul.mubr.f32.gmra.mrb[0].mxu0 %v2361
      %v2487 = vpop.f32.mrb[0].mxu0
      %v2488 = vadd.f32 0.0, %v2487
      %v2489 = vpop.f32.mrb[0].mxu0
      %2490 = vmatprep.mubr.f32.mxu0 0.0
      %2491 = vmatmul.mubr.f32.gmra.mrb[0].mxu0 %v2362
      %v2492 = vpop.f32.mrb[0].mxu0
      %v2493 = vadd.f32 0.0, %v2492
      %v2494 = vpop.f32.mrb[0].mxu0
      %2495 = vmatprep.mubr.f32.mxu0 0.0
      %2496 = vmatmul.mubr.f32.gmra.mrb[0].mxu0 %v2363
      %v2497 = vpop.f32.mrb[0].mxu0
      %v2498 = vadd.f32 0.0, %v2497
      %v2499 = vpop.f32.mrb[0].mxu0
      %2500 = vmatprep.mubr.f32.mxu0 0.0
      %2501 = vmatmul.mubr.f32.gmra.mrb[0].mxu0 %v2364
      %v2502 = vpop.f32.mrb[0].mxu0
      %v2503 = vadd.f32 0.0, %v2502
      %v2504 = vpop.f32.mrb[0].mxu0
      %2505 = vmatprep.mubr.f32.mxu0 0.0
      %2506 = vmatmul.mubr.f32.gmra.mrb[0].mxu0 %v2365
      %v2507 = vpop.f32.mrb[0].mxu0
      %v2508 = vadd.f32 0.0, %v2507
      %v2509 = vpop.f32.mrb[0].mxu0
      %2510 = vmatprep.mubr.f32.mxu0 0.0
      %2511 = vmatmul.mubr.f32.gmra.mrb[0].mxu0 %v2366
      %v2512 = vpop.f32.mrb[0].mxu0
      %v2513 = vadd.f32 0.0, %v2512
      %v2514 = vpop.f32.mrb[0].mxu0
      %2515 = vdwg.mxu0
      %v2516 = vadd.f32 %v2335, %v2438
      %v2517 = vadd.f32 %v2336, %v2443
      %v2518 = vadd.f32 %v2337, %v2448
      %v2519 = vadd.f32 %v2338, %v2453
      %v2520 = vadd.f32 %v2339, %v2458
      %v2521 = vadd.f32 %v2340, %v2463
      %v2522 = vadd.f32 %v2341, %v2468
      %v2523 = vadd.f32 %v2342, %v2473
      %v2524 = vadd.f32 %v2343, %v2478
      %v2525 = vadd.f32 %v2344, %v2483
      %v2526 = vadd.f32 %v2345, %v2488
      %v2527 = vadd.f32 %v2346, %v2493
      %v2528 = vadd.f32 %v2347, %v2498
      %v2529 = vadd.f32 %v2348, %v2503
      %v2530 = vadd.f32 %v2349, %v2508
      %v2531 = vadd.f32 %v2350, %v2513
      %v2532 = vld [vmem:[#allocation2 + $0x21] sm:$0xff]
      %v2533 = vld [vmem:[#allocation2 + $0x29] sm:$0xff]
      %v2534 = vld [vmem:[#allocation2 + $0x31] sm:$0xff]
      %v2535 = vld [vmem:[#allocation2 + $0x39] sm:$0xff]
      %v2536 = vld [vmem:[#allocation2 + $0x41] sm:$0xff]
      %v2537 = vld [vmem:[#allocation2 + $0x49] sm:$0xff]
      %v2538 = vld [vmem:[#allocation2 + $0x51] sm:$0xff]
      %v2539 = vld [vmem:[#allocation2 + $0x59] sm:$0xff]
      %v2540 = vld [vmem:[#allocation2 + $0x61] sm:$0xff]
      %v2541 = vld [vmem:[#allocation2 + $0x69] sm:$0xff]
      %v2542 = vld [vmem:[#allocation2 + $0x71] sm:$0xff]
      %v2543 = vld [vmem:[#allocation2 + $0x79] sm:$0xff]
      %v2544 = vld [vmem:[#allocation2 + $0x81] sm:$0xff]
      %v2545 = vld [vmem:[#allocation2 + $0x89] sm:$0xff]
      %v2546 = vld [vmem:[#allocation2 + $0x91] sm:$0xff]
      %v2547 = vld [vmem:[#allocation2 + $0x99] sm:$0xff]
      %s2548 = scalar_lea.vmem %s3, 264
      %v2549 = vld [vmem:[%s2548] sm:$0xff]
      %v2550 = vld [vmem:[%s2548 + $0x8] sm:$0xff]
      %v2551 = vld [vmem:[%s2548 + $0x10] sm:$0xff]
      %2552 = vmatprep.subr.mxu0 0.0
      %2553 = vmatpush1.msra.mxu0 %v2549
      %2554 = vmatprep.subr.mxu0 0.0
      %2555 = vmatpush1.msra.mxu0 %v2550
      %2556 = vmatprep.subr.mxu0 0.0
      %2557 = vmatpush1.msra.mxu0 %v2551
      %2558 = vmatprep.subr.mxu0 0.0
      %2559 = vmatpush1.msra.mxu0 0.0
      %2560 = vmatprep.subr.mxu0 0.0
      %2561 = vmatpush1.msra.mxu0 0.0
      %2562 = vmatprep.subr.mxu0 0.0
      %2563 = vmatpush1.msra.mxu0 0.0
      %2564 = vmatprep.subr.mxu0 0.0
      %2565 = vmatpush1.msra.mxu0 0.0
      %2566 = vmatprep.subr.mxu0 0.0
      %2567 = vmatpush1.msra.mxu0 0.0
      %2568 = vmatprep.subr.mxu0 0.0
      %2569 = vmatpush1.msra.mxu0 0.0
      %2570 = vmatprep.subr.mxu0 0.0
      %2571 = vmatpush1.msra.mxu0 0.0
      %2572 = vmatprep.subr.mxu0 0.0
      %2573 = vmatpush1.msra.mxu0 0.0
      %2574 = vmatprep.subr.mxu0 0.0
      %2575 = vmatpush1.msra.mxu0 0.0
      %2576 = vmatprep.subr.mxu0 0.0
      %2577 = vmatpush1.msra.mxu0 0.0
      %2578 = vmatprep.subr.mxu0 0.0
      %2579 = vmatpush1.msra.mxu0 0.0
      %2580 = vmatprep.subr.mxu0 0.0
      %2581 = vmatpush1.msra.mxu0 0.0
      %2582 = vmatprep.subr.mxu0 0.0
      %2583 = vmatpush1.msra.mxu0 0.0
      %2584 = vmatprep.subr.mxu0 0.0
      %2585 = vmatpush1.msra.mxu0 0.0
      %2586 = vmatprep.subr.mxu0 0.0
      %2587 = vmatpush1.msra.mxu0 0.0
      %2588 = vmatprep.subr.mxu0 0.0
      %2589 = vmatpush1.msra.mxu0 0.0
      %2590 = vmatprep.subr.mxu0 0.0
      %2591 = vmatpush1.msra.mxu0 0.0
      %2592 = vmatprep.subr.mxu0 0.0
      %2593 = vmatpush1.msra.mxu0 0.0
      %2594 = vmatprep.subr.mxu0 0.0
      %2595 = vmatpush1.msra.mxu0 0.0
      %2596 = vmatprep.subr.mxu0 0.0
      %2597 = vmatpush1.msra.mxu0 0.0
      %2598 = vmatprep.subr.mxu0 0.0
      %2599 = vmatpush1.msra.mxu0 0.0
      %2600 = vmatprep.subr.mxu0 0.0
      %2601 = vmatpush1.msra.mxu0 0.0
      %2602 = vmatprep.subr.mxu0 0.0
      %2603 = vmatpush1.msra.mxu0 0.0
      %2604 = vmatprep.subr.mxu0 0.0
      %2605 = vmatpush1.msra.mxu0 0.0
      %2606 = vmatprep.subr.mxu0 0.0
      %2607 = vmatpush1.msra.mxu0 0.0
      %2608 = vmatprep.subr.mxu0 0.0
      %2609 = vmatpush1.msra.mxu0 0.0
      %2610 = vmatprep.subr.mxu0 0.0
      %2611 = vmatpush1.msra.mxu0 0.0
      %2612 = vmatprep.subr.mxu0 0.0
      %2613 = vmatpush1.msra.mxu0 0.0
      %2614 = vmatprep.subr.mxu0 0.0
      %2615 = vmatpush1.msra.mxu0 0.0
      %2616 = vmatprep.mubr.f32.mxu0 0.0
      %2617 = vmatmul.mubr.f32.gmra.mrb[0].mxu0 %v2532
      %v2618 = vpop.f32.mrb[0].mxu0
      %v2619 = vadd.f32 0.0, %v2618
      %v2620 = vpop.f32.mrb[0].mxu0
      %2621 = vmatprep.mubr.f32.mxu0 0.0
      %2622 = vmatmul.mubr.f32.gmra.mrb[0].mxu0 %v2533
      %v2623 = vpop.f32.mrb[0].mxu0
      %v2624 = vadd.f32 0.0, %v2623
      %v2625 = vpop.f32.mrb[0].mxu0
      %2626 = vmatprep.mubr.f32.mxu0 0.0
      %2627 = vmatmul.mubr.f32.gmra.mrb[0].mxu0 %v2534
      %v2628 = vpop.f32.mrb[0].mxu0
      %v2629 = vadd.f32 0.0, %v2628
      %v2630 = vpop.f32.mrb[0].mxu0
      %2631 = vmatprep.mubr.f32.mxu0 0.0
      %2632 = vmatmul.mubr.f32.gmra.mrb[0].mxu0 %v2535
      %v2633 = vpop.f32.mrb[0].mxu0
      %v2634 = vadd.f32 0.0, %v2633
      %v2635 = vpop.f32.mrb[0].mxu0
      %2636 = vmatprep.mubr.f32.mxu0 0.0
      %2637 = vmatmul.mubr.f32.gmra.mrb[0].mxu0 %v2536
      %v2638 = vpop.f32.mrb[0].mxu0
      %v2639 = vadd.f32 0.0, %v2638
      %v2640 = vpop.f32.mrb[0].mxu0
      %2641 = vmatprep.mubr.f32.mxu0 0.0
      %2642 = vmatmul.mubr.f32.gmra.mrb[0].mxu0 %v2537
      %v2643 = vpop.f32.mrb[0].mxu0
      %v2644 = vadd.f32 0.0, %v2643
      %v2645 = vpop.f32.mrb[0].mxu0
      %2646 = vmatprep.mubr.f32.mxu0 0.0
      %2647 = vmatmul.mubr.f32.gmra.mrb[0].mxu0 %v2538
      %v2648 = vpop.f32.mrb[0].mxu0
      %v2649 = vadd.f32 0.0, %v2648
      %v2650 = vpop.f32.mrb[0].mxu0
      %2651 = vmatprep.mubr.f32.mxu0 0.0
      %2652 = vmatmul.mubr.f32.gmra.mrb[0].mxu0 %v2539
      %v2653 = vpop.f32.mrb[0].mxu0
      %v2654 = vadd.f32 0.0, %v2653
      %v2655 = vpop.f32.mrb[0].mxu0
      %2656 = vmatprep.mubr.f32.mxu0 0.0
      %2657 = vmatmul.mubr.f32.gmra.mrb[0].mxu0 %v2540
      %v2658 = vpop.f32.mrb[0].mxu0
      %v2659 = vadd.f32 0.0, %v2658
      %v2660 = vpop.f32.mrb[0].mxu0
      %2661 = vmatprep.mubr.f32.mxu0 0.0
      %2662 = vmatmul.mubr.f32.gmra.mrb[0].mxu0 %v2541
      %v2663 = vpop.f32.mrb[0].mxu0
      %v2664 = vadd.f32 0.0, %v2663
      %v2665 = vpop.f32.mrb[0].mxu0
      %2666 = vmatprep.mubr.f32.mxu0 0.0
      %2667 = vmatmul.mubr.f32.gmra.mrb[0].mxu0 %v2542
      %v2668 = vpop.f32.mrb[0].mxu0
      %v2669 = vadd.f32 0.0, %v2668
      %v2670 = vpop.f32.mrb[0].mxu0
      %2671 = vmatprep.mubr.f32.mxu0 0.0
      %2672 = vmatmul.mubr.f32.gmra.mrb[0].mxu0 %v2543
      %v2673 = vpop.f32.mrb[0].mxu0
      %v2674 = vadd.f32 0.0, %v2673
      %v2675 = vpop.f32.mrb[0].mxu0
      %2676 = vmatprep.mubr.f32.mxu0 0.0
      %2677 = vmatmul.mubr.f32.gmra.mrb[0].mxu0 %v2544
      %v2678 = vpop.f32.mrb[0].mxu0
      %v2679 = vadd.f32 0.0, %v2678
      %v2680 = vpop.f32.mrb[0].mxu0
      %2681 = vmatprep.mubr.f32.mxu0 0.0
      %2682 = vmatmul.mubr.f32.gmra.mrb[0].mxu0 %v2545
      %v2683 = vpop.f32.mrb[0].mxu0
      %v2684 = vadd.f32 0.0, %v2683
      %v2685 = vpop.f32.mrb[0].mxu0
      %2686 = vmatprep.mubr.f32.mxu0 0.0
      %2687 = vmatmul.mubr.f32.gmra.mrb[0].mxu0 %v2546
      %v2688 = vpop.f32.mrb[0].mxu0
      %v2689 = vadd.f32 0.0, %v2688
      %v2690 = vpop.f32.mrb[0].mxu0
      %2691 = vmatprep.mubr.f32.mxu0 0.0
      %2692 = vmatmul.mubr.f32.gmra.mrb[0].mxu0 %v2547
      %v2693 = vpop.f32.mrb[0].mxu0
      %v2694 = vadd.f32 0.0, %v2693
      %v2695 = vpop.f32.mrb[0].mxu0
      %2696 = vdwg.mxu0
      %v2697 = vadd.f32 %v2516, %v2619
      %v2698 = vadd.f32 %v2517, %v2624
      %v2699 = vadd.f32 %v2518, %v2629
      %v2700 = vadd.f32 %v2519, %v2634
      %v2701 = vadd.f32 %v2520, %v2639
      %v2702 = vadd.f32 %v2521, %v2644
      %v2703 = vadd.f32 %v2522, %v2649
      %v2704 = vadd.f32 %v2523, %v2654
      %v2705 = vadd.f32 %v2524, %v2659
      %v2706 = vadd.f32 %v2525, %v2664
      %v2707 = vadd.f32 %v2526, %v2669
      %v2708 = vadd.f32 %v2527, %v2674
      %v2709 = vadd.f32 %v2528, %v2679
      %v2710 = vadd.f32 %v2529, %v2684
      %v2711 = vadd.f32 %v2530, %v2689
      %v2712 = vadd.f32 %v2531, %v2694
      %v2713 = vld [vmem:[#allocation2 + $0x22] sm:$0xff]
      %v2714 = vld [vmem:[#allocation2 + $0x2a] sm:$0xff]
      %v2715 = vld [vmem:[#allocation2 + $0x32] sm:$0xff]
      %v2716 = vld [vmem:[#allocation2 + $0x3a] sm:$0xff]
      %v2717 = vld [vmem:[#allocation2 + $0x42] sm:$0xff]
      %v2718 = vld [vmem:[#allocation2 + $0x4a] sm:$0xff]
      %v2719 = vld [vmem:[#allocation2 + $0x52] sm:$0xff]
      %v2720 = vld [vmem:[#allocation2 + $0x5a] sm:$0xff]
      %v2721 = vld [vmem:[#allocation2 + $0x62] sm:$0xff]
      %v2722 = vld [vmem:[#allocation2 + $0x6a] sm:$0xff]
      %v2723 = vld [vmem:[#allocation2 + $0x72] sm:$0xff]
      %v2724 = vld [vmem:[#allocation2 + $0x7a] sm:$0xff]
      %v2725 = vld [vmem:[#allocation2 + $0x82] sm:$0xff]
      %v2726 = vld [vmem:[#allocation2 + $0x8a] sm:$0xff]
      %v2727 = vld [vmem:[#allocation2 + $0x92] sm:$0xff]
      %v2728 = vld [vmem:[#allocation2 + $0x9a] sm:$0xff]
      %s2729 = scalar_lea.vmem %s3, 288
      %v2730 = vld [vmem:[%s2729] sm:$0xff]
      %v2731 = vld [vmem:[%s2729 + $0x8] sm:$0xff]
      %v2732 = vld [vmem:[%s2729 + $0x10] sm:$0xff]
      %2733 = vmatprep.subr.mxu0 0.0
      %2734 = vmatpush1.msra.mxu0 %v2730
      %2735 = vmatprep.subr.mxu0 0.0
      %2736 = vmatpush1.msra.mxu0 %v2731
      %2737 = vmatprep.subr.mxu0 0.0
      %2738 = vmatpush1.msra.mxu0 %v2732
      %2739 = vmatprep.subr.mxu0 0.0
      %2740 = vmatpush1.msra.mxu0 0.0
      %2741 = vmatprep.subr.mxu0 0.0
      %2742 = vmatpush1.msra.mxu0 0.0
      %2743 = vmatprep.subr.mxu0 0.0
      %2744 = vmatpush1.msra.mxu0 0.0
      %2745 = vmatprep.subr.mxu0 0.0
      %2746 = vmatpush1.msra.mxu0 0.0
      %2747 = vmatprep.subr.mxu0 0.0
      %2748 = vmatpush1.msra.mxu0 0.0
      %2749 = vmatprep.subr.mxu0 0.0
      %2750 = vmatpush1.msra.mxu0 0.0
      %2751 = vmatprep.subr.mxu0 0.0
      %2752 = vmatpush1.msra.mxu0 0.0
      %2753 = vmatprep.subr.mxu0 0.0
      %2754 = vmatpush1.msra.mxu0 0.0
      %2755 = vmatprep.subr.mxu0 0.0
      %2756 = vmatpush1.msra.mxu0 0.0
      %2757 = vmatprep.subr.mxu0 0.0
      %2758 = vmatpush1.msra.mxu0 0.0
      %2759 = vmatprep.subr.mxu0 0.0
      %2760 = vmatpush1.msra.mxu0 0.0
      %2761 = vmatprep.subr.mxu0 0.0
      %2762 = vmatpush1.msra.mxu0 0.0
      %2763 = vmatprep.subr.mxu0 0.0
      %2764 = vmatpush1.msra.mxu0 0.0
      %2765 = vmatprep.subr.mxu0 0.0
      %2766 = vmatpush1.msra.mxu0 0.0
      %2767 = vmatprep.subr.mxu0 0.0
      %2768 = vmatpush1.msra.mxu0 0.0
      %2769 = vmatprep.subr.mxu0 0.0
      %2770 = vmatpush1.msra.mxu0 0.0
      %2771 = vmatprep.subr.mxu0 0.0
      %2772 = vmatpush1.msra.mxu0 0.0
      %2773 = vmatprep.subr.mxu0 0.0
      %2774 = vmatpush1.msra.mxu0 0.0
      %2775 = vmatprep.subr.mxu0 0.0
      %2776 = vmatpush1.msra.mxu0 0.0
      %2777 = vmatprep.subr.mxu0 0.0
      %2778 = vmatpush1.msra.mxu0 0.0
      %2779 = vmatprep.subr.mxu0 0.0
      %2780 = vmatpush1.msra.mxu0 0.0
      %2781 = vmatprep.subr.mxu0 0.0
      %2782 = vmatpush1.msra.mxu0 0.0
      %2783 = vmatprep.subr.mxu0 0.0
      %2784 = vmatpush1.msra.mxu0 0.0
      %2785 = vmatprep.subr.mxu0 0.0
      %2786 = vmatpush1.msra.mxu0 0.0
      %2787 = vmatprep.subr.mxu0 0.0
      %2788 = vmatpush1.msra.mxu0 0.0
      %2789 = vmatprep.subr.mxu0 0.0
      %2790 = vmatpush1.msra.mxu0 0.0
      %2791 = vmatprep.subr.mxu0 0.0
      %2792 = vmatpush1.msra.mxu0 0.0
      %2793 = vmatprep.subr.mxu0 0.0
      %2794 = vmatpush1.msra.mxu0 0.0
      %2795 = vmatprep.subr.mxu0 0.0
      %2796 = vmatpush1.msra.mxu0 0.0
      %2797 = vmatprep.mubr.f32.mxu0 0.0
      %2798 = vmatmul.mubr.f32.gmra.mrb[0].mxu0 %v2713
      %v2799 = vpop.f32.mrb[0].mxu0
      %v2800 = vadd.f32 0.0, %v2799
      %v2801 = vpop.f32.mrb[0].mxu0
      %2802 = vmatprep.mubr.f32.mxu0 0.0
      %2803 = vmatmul.mubr.f32.gmra.mrb[0].mxu0 %v2714
      %v2804 = vpop.f32.mrb[0].mxu0
      %v2805 = vadd.f32 0.0, %v2804
      %v2806 = vpop.f32.mrb[0].mxu0
      %2807 = vmatprep.mubr.f32.mxu0 0.0
      %2808 = vmatmul.mubr.f32.gmra.mrb[0].mxu0 %v2715
      %v2809 = vpop.f32.mrb[0].mxu0
      %v2810 = vadd.f32 0.0, %v2809
      %v2811 = vpop.f32.mrb[0].mxu0
      %2812 = vmatprep.mubr.f32.mxu0 0.0
      %2813 = vmatmul.mubr.f32.gmra.mrb[0].mxu0 %v2716
      %v2814 = vpop.f32.mrb[0].mxu0
      %v2815 = vadd.f32 0.0, %v2814
      %v2816 = vpop.f32.mrb[0].mxu0
      %2817 = vmatprep.mubr.f32.mxu0 0.0
      %2818 = vmatmul.mubr.f32.gmra.mrb[0].mxu0 %v2717
      %v2819 = vpop.f32.mrb[0].mxu0
      %v2820 = vadd.f32 0.0, %v2819
      %v2821 = vpop.f32.mrb[0].mxu0
      %2822 = vmatprep.mubr.f32.mxu0 0.0
      %2823 = vmatmul.mubr.f32.gmra.mrb[0].mxu0 %v2718
      %v2824 = vpop.f32.mrb[0].mxu0
      %v2825 = vadd.f32 0.0, %v2824
      %v2826 = vpop.f32.mrb[0].mxu0
      %2827 = vmatprep.mubr.f32.mxu0 0.0
      %2828 = vmatmul.mubr.f32.gmra.mrb[0].mxu0 %v2719
      %v2829 = vpop.f32.mrb[0].mxu0
      %v2830 = vadd.f32 0.0, %v2829
      %v2831 = vpop.f32.mrb[0].mxu0
      %2832 = vmatprep.mubr.f32.mxu0 0.0
      %2833 = vmatmul.mubr.f32.gmra.mrb[0].mxu0 %v2720
      %v2834 = vpop.f32.mrb[0].mxu0
      %v2835 = vadd.f32 0.0, %v2834
      %v2836 = vpop.f32.mrb[0].mxu0
      %2837 = vmatprep.mubr.f32.mxu0 0.0
      %2838 = vmatmul.mubr.f32.gmra.mrb[0].mxu0 %v2721
      %v2839 = vpop.f32.mrb[0].mxu0
      %v2840 = vadd.f32 0.0, %v2839
      %v2841 = vpop.f32.mrb[0].mxu0
      %2842 = vmatprep.mubr.f32.mxu0 0.0
      %2843 = vmatmul.mubr.f32.gmra.mrb[0].mxu0 %v2722
      %v2844 = vpop.f32.mrb[0].mxu0
      %v2845 = vadd.f32 0.0, %v2844
      %v2846 = vpop.f32.mrb[0].mxu0
      %2847 = vmatprep.mubr.f32.mxu0 0.0
      %2848 = vmatmul.mubr.f32.gmra.mrb[0].mxu0 %v2723
      %v2849 = vpop.f32.mrb[0].mxu0
      %v2850 = vadd.f32 0.0, %v2849
      %v2851 = vpop.f32.mrb[0].mxu0
      %2852 = vmatprep.mubr.f32.mxu0 0.0
      %2853 = vmatmul.mubr.f32.gmra.mrb[0].mxu0 %v2724
      %v2854 = vpop.f32.mrb[0].mxu0
      %v2855 = vadd.f32 0.0, %v2854
      %v2856 = vpop.f32.mrb[0].mxu0
      %2857 = vmatprep.mubr.f32.mxu0 0.0
      %2858 = vmatmul.mubr.f32.gmra.mrb[0].mxu0 %v2725
      %v2859 = vpop.f32.mrb[0].mxu0
      %v2860 = vadd.f32 0.0, %v2859
      %v2861 = vpop.f32.mrb[0].mxu0
      %2862 = vmatprep.mubr.f32.mxu0 0.0
      %2863 = vmatmul.mubr.f32.gmra.mrb[0].mxu0 %v2726
      %v2864 = vpop.f32.mrb[0].mxu0
      %v2865 = vadd.f32 0.0, %v2864
      %v2866 = vpop.f32.mrb[0].mxu0
      %2867 = vmatprep.mubr.f32.mxu0 0.0
      %2868 = vmatmul.mubr.f32.gmra.mrb[0].mxu0 %v2727
      %v2869 = vpop.f32.mrb[0].mxu0
      %v2870 = vadd.f32 0.0, %v2869
      %v2871 = vpop.f32.mrb[0].mxu0
      %2872 = vmatprep.mubr.f32.mxu0 0.0
      %2873 = vmatmul.mubr.f32.gmra.mrb[0].mxu0 %v2728
      %v2874 = vpop.f32.mrb[0].mxu0
      %v2875 = vadd.f32 0.0, %v2874
      %v2876 = vpop.f32.mrb[0].mxu0
      %2877 = vdwg.mxu0
      %v2878 = vadd.f32 %v2697, %v2800
      %v2879 = vadd.f32 %v2698, %v2805
      %v2880 = vadd.f32 %v2699, %v2810
      %v2881 = vadd.f32 %v2700, %v2815
      %v2882 = vadd.f32 %v2701, %v2820
      %v2883 = vadd.f32 %v2702, %v2825
      %v2884 = vadd.f32 %v2703, %v2830
      %v2885 = vadd.f32 %v2704, %v2835
      %v2886 = vadd.f32 %v2705, %v2840
      %v2887 = vadd.f32 %v2706, %v2845
      %v2888 = vadd.f32 %v2707, %v2850
      %v2889 = vadd.f32 %v2708, %v2855
      %v2890 = vadd.f32 %v2709, %v2860
      %v2891 = vadd.f32 %v2710, %v2865
      %v2892 = vadd.f32 %v2711, %v2870
      %v2893 = vadd.f32 %v2712, %v2875
      %v2894 = vld [vmem:[#allocation2 + $0x23] sm:$0xff]
      %v2895 = vld [vmem:[#allocation2 + $0x2b] sm:$0xff]
      %v2896 = vld [vmem:[#allocation2 + $0x33] sm:$0xff]
      %v2897 = vld [vmem:[#allocation2 + $0x3b] sm:$0xff]
      %v2898 = vld [vmem:[#allocation2 + $0x43] sm:$0xff]
      %v2899 = vld [vmem:[#allocation2 + $0x4b] sm:$0xff]
      %v2900 = vld [vmem:[#allocation2 + $0x53] sm:$0xff]
      %v2901 = vld [vmem:[#allocation2 + $0x5b] sm:$0xff]
      %v2902 = vld [vmem:[#allocation2 + $0x63] sm:$0xff]
      %v2903 = vld [vmem:[#allocation2 + $0x6b] sm:$0xff]
      %v2904 = vld [vmem:[#allocation2 + $0x73] sm:$0xff]
      %v2905 = vld [vmem:[#allocation2 + $0x7b] sm:$0xff]
      %v2906 = vld [vmem:[#allocation2 + $0x83] sm:$0xff]
      %v2907 = vld [vmem:[#allocation2 + $0x8b] sm:$0xff]
      %v2908 = vld [vmem:[#allocation2 + $0x93] sm:$0xff]
      %v2909 = vld [vmem:[#allocation2 + $0x9b] sm:$0xff]
      %s2910 = scalar_lea.vmem %s3, 312
      %v2911 = vld [vmem:[%s2910] sm:$0xff]
      %v2912 = vld [vmem:[%s2910 + $0x8] sm:$0xff]
      %v2913 = vld [vmem:[%s2910 + $0x10] sm:$0xff]
      %2914 = vmatprep.subr.mxu0 0.0
      %2915 = vmatpush1.msra.mxu0 %v2911
      %2916 = vmatprep.subr.mxu0 0.0
      %2917 = vmatpush1.msra.mxu0 %v2912
      %2918 = vmatprep.subr.mxu0 0.0
      %2919 = vmatpush1.msra.mxu0 %v2913
      %2920 = vmatprep.subr.mxu0 0.0
      %2921 = vmatpush1.msra.mxu0 0.0
      %2922 = vmatprep.subr.mxu0 0.0
      %2923 = vmatpush1.msra.mxu0 0.0
      %2924 = vmatprep.subr.mxu0 0.0
      %2925 = vmatpush1.msra.mxu0 0.0
      %2926 = vmatprep.subr.mxu0 0.0
      %2927 = vmatpush1.msra.mxu0 0.0
      %2928 = vmatprep.subr.mxu0 0.0
      %2929 = vmatpush1.msra.mxu0 0.0
      %2930 = vmatprep.subr.mxu0 0.0
      %2931 = vmatpush1.msra.mxu0 0.0
      %2932 = vmatprep.subr.mxu0 0.0
      %2933 = vmatpush1.msra.mxu0 0.0
      %2934 = vmatprep.subr.mxu0 0.0
      %2935 = vmatpush1.msra.mxu0 0.0
      %2936 = vmatprep.subr.mxu0 0.0
      %2937 = vmatpush1.msra.mxu0 0.0
      %2938 = vmatprep.subr.mxu0 0.0
      %2939 = vmatpush1.msra.mxu0 0.0
      %2940 = vmatprep.subr.mxu0 0.0
      %2941 = vmatpush1.msra.mxu0 0.0
      %2942 = vmatprep.subr.mxu0 0.0
      %2943 = vmatpush1.msra.mxu0 0.0
      %2944 = vmatprep.subr.mxu0 0.0
      %2945 = vmatpush1.msra.mxu0 0.0
      %2946 = vmatprep.subr.mxu0 0.0
      %2947 = vmatpush1.msra.mxu0 0.0
      %2948 = vmatprep.subr.mxu0 0.0
      %2949 = vmatpush1.msra.mxu0 0.0
      %2950 = vmatprep.subr.mxu0 0.0
      %2951 = vmatpush1.msra.mxu0 0.0
      %2952 = vmatprep.subr.mxu0 0.0
      %2953 = vmatpush1.msra.mxu0 0.0
      %2954 = vmatprep.subr.mxu0 0.0
      %2955 = vmatpush1.msra.mxu0 0.0
      %2956 = vmatprep.subr.mxu0 0.0
      %2957 = vmatpush1.msra.mxu0 0.0
      %2958 = vmatprep.subr.mxu0 0.0
      %2959 = vmatpush1.msra.mxu0 0.0
      %2960 = vmatprep.subr.mxu0 0.0
      %2961 = vmatpush1.msra.mxu0 0.0
      %2962 = vmatprep.subr.mxu0 0.0
      %2963 = vmatpush1.msra.mxu0 0.0
      %2964 = vmatprep.subr.mxu0 0.0
      %2965 = vmatpush1.msra.mxu0 0.0
      %2966 = vmatprep.subr.mxu0 0.0
      %2967 = vmatpush1.msra.mxu0 0.0
      %2968 = vmatprep.subr.mxu0 0.0
      %2969 = vmatpush1.msra.mxu0 0.0
      %2970 = vmatprep.subr.mxu0 0.0
      %2971 = vmatpush1.msra.mxu0 0.0
      %2972 = vmatprep.subr.mxu0 0.0
      %2973 = vmatpush1.msra.mxu0 0.0
      %2974 = vmatprep.subr.mxu0 0.0
      %2975 = vmatpush1.msra.mxu0 0.0
      %2976 = vmatprep.subr.mxu0 0.0
      %2977 = vmatpush1.msra.mxu0 0.0
      %2978 = vmatprep.mubr.f32.mxu0 0.0
      %2979 = vmatmul.mubr.f32.gmra.mrb[0].mxu0 %v2894
      %v2980 = vpop.f32.mrb[0].mxu0
      %v2981 = vadd.f32 0.0, %v2980
      %v2982 = vpop.f32.mrb[0].mxu0
      %2983 = vmatprep.mubr.f32.mxu0 0.0
      %2984 = vmatmul.mubr.f32.gmra.mrb[0].mxu0 %v2895
      %v2985 = vpop.f32.mrb[0].mxu0
      %v2986 = vadd.f32 0.0, %v2985
      %v2987 = vpop.f32.mrb[0].mxu0
      %2988 = vmatprep.mubr.f32.mxu0 0.0
      %2989 = vmatmul.mubr.f32.gmra.mrb[0].mxu0 %v2896
      %v2990 = vpop.f32.mrb[0].mxu0
      %v2991 = vadd.f32 0.0, %v2990
      %v2992 = vpop.f32.mrb[0].mxu0
      %2993 = vmatprep.mubr.f32.mxu0 0.0
      %2994 = vmatmul.mubr.f32.gmra.mrb[0].mxu0 %v2897
      %v2995 = vpop.f32.mrb[0].mxu0
      %v2996 = vadd.f32 0.0, %v2995
      %v2997 = vpop.f32.mrb[0].mxu0
      %2998 = vmatprep.mubr.f32.mxu0 0.0
      %2999 = vmatmul.mubr.f32.gmra.mrb[0].mxu0 %v2898
      %v3000 = vpop.f32.mrb[0].mxu0
      %v3001 = vadd.f32 0.0, %v3000
      %v3002 = vpop.f32.mrb[0].mxu0
      %3003 = vmatprep.mubr.f32.mxu0 0.0
      %3004 = vmatmul.mubr.f32.gmra.mrb[0].mxu0 %v2899
      %v3005 = vpop.f32.mrb[0].mxu0
      %v3006 = vadd.f32 0.0, %v3005
      %v3007 = vpop.f32.mrb[0].mxu0
      %3008 = vmatprep.mubr.f32.mxu0 0.0
      %3009 = vmatmul.mubr.f32.gmra.mrb[0].mxu0 %v2900
      %v3010 = vpop.f32.mrb[0].mxu0
      %v3011 = vadd.f32 0.0, %v3010
      %v3012 = vpop.f32.mrb[0].mxu0
      %3013 = vmatprep.mubr.f32.mxu0 0.0
      %3014 = vmatmul.mubr.f32.gmra.mrb[0].mxu0 %v2901
      %v3015 = vpop.f32.mrb[0].mxu0
      %v3016 = vadd.f32 0.0, %v3015
      %v3017 = vpop.f32.mrb[0].mxu0
      %3018 = vmatprep.mubr.f32.mxu0 0.0
      %3019 = vmatmul.mubr.f32.gmra.mrb[0].mxu0 %v2902
      %v3020 = vpop.f32.mrb[0].mxu0
      %v3021 = vadd.f32 0.0, %v3020
      %v3022 = vpop.f32.mrb[0].mxu0
      %3023 = vmatprep.mubr.f32.mxu0 0.0
      %3024 = vmatmul.mubr.f32.gmra.mrb[0].mxu0 %v2903
      %v3025 = vpop.f32.mrb[0].mxu0
      %v3026 = vadd.f32 0.0, %v3025
      %v3027 = vpop.f32.mrb[0].mxu0
      %3028 = vmatprep.mubr.f32.mxu0 0.0
      %3029 = vmatmul.mubr.f32.gmra.mrb[0].mxu0 %v2904
      %v3030 = vpop.f32.mrb[0].mxu0
      %v3031 = vadd.f32 0.0, %v3030
      %v3032 = vpop.f32.mrb[0].mxu0
      %3033 = vmatprep.mubr.f32.mxu0 0.0
      %3034 = vmatmul.mubr.f32.gmra.mrb[0].mxu0 %v2905
      %v3035 = vpop.f32.mrb[0].mxu0
      %v3036 = vadd.f32 0.0, %v3035
      %v3037 = vpop.f32.mrb[0].mxu0
      %3038 = vmatprep.mubr.f32.mxu0 0.0
      %3039 = vmatmul.mubr.f32.gmra.mrb[0].mxu0 %v2906
      %v3040 = vpop.f32.mrb[0].mxu0
      %v3041 = vadd.f32 0.0, %v3040
      %v3042 = vpop.f32.mrb[0].mxu0
      %3043 = vmatprep.mubr.f32.mxu0 0.0
      %3044 = vmatmul.mubr.f32.gmra.mrb[0].mxu0 %v2907
      %v3045 = vpop.f32.mrb[0].mxu0
      %v3046 = vadd.f32 0.0, %v3045
      %v3047 = vpop.f32.mrb[0].mxu0
      %3048 = vmatprep.mubr.f32.mxu0 0.0
      %3049 = vmatmul.mubr.f32.gmra.mrb[0].mxu0 %v2908
      %v3050 = vpop.f32.mrb[0].mxu0
      %v3051 = vadd.f32 0.0, %v3050
      %v3052 = vpop.f32.mrb[0].mxu0
      %3053 = vmatprep.mubr.f32.mxu0 0.0
      %3054 = vmatmul.mubr.f32.gmra.mrb[0].mxu0 %v2909
      %v3055 = vpop.f32.mrb[0].mxu0
      %v3056 = vadd.f32 0.0, %v3055
      %v3057 = vpop.f32.mrb[0].mxu0
      %3058 = vdwg.mxu0
      %v3059 = vadd.f32 %v2878, %v2981
      %v3060 = vadd.f32 %v2879, %v2986
      %v3061 = vadd.f32 %v2880, %v2991
      %v3062 = vadd.f32 %v2881, %v2996
      %v3063 = vadd.f32 %v2882, %v3001
      %v3064 = vadd.f32 %v2883, %v3006
      %v3065 = vadd.f32 %v2884, %v3011
      %v3066 = vadd.f32 %v2885, %v3016
      %v3067 = vadd.f32 %v2886, %v3021
      %v3068 = vadd.f32 %v2887, %v3026
      %v3069 = vadd.f32 %v2888, %v3031
      %v3070 = vadd.f32 %v2889, %v3036
      %v3071 = vadd.f32 %v2890, %v3041
      %v3072 = vadd.f32 %v2891, %v3046
      %v3073 = vadd.f32 %v2892, %v3051
      %v3074 = vadd.f32 %v2893, %v3056
      %v3075 = vld [vmem:[#allocation2 + $0x24] sm:$0xff]
      %v3076 = vld [vmem:[#allocation2 + $0x2c] sm:$0xff]
      %v3077 = vld [vmem:[#allocation2 + $0x34] sm:$0xff]
      %v3078 = vld [vmem:[#allocation2 + $0x3c] sm:$0xff]
      %v3079 = vld [vmem:[#allocation2 + $0x44] sm:$0xff]
      %v3080 = vld [vmem:[#allocation2 + $0x4c] sm:$0xff]
      %v3081 = vld [vmem:[#allocation2 + $0x54] sm:$0xff]
      %v3082 = vld [vmem:[#allocation2 + $0x5c] sm:$0xff]
      %v3083 = vld [vmem:[#allocation2 + $0x64] sm:$0xff]
      %v3084 = vld [vmem:[#allocation2 + $0x6c] sm:$0xff]
      %v3085 = vld [vmem:[#allocation2 + $0x74] sm:$0xff]
      %v3086 = vld [vmem:[#allocation2 + $0x7c] sm:$0xff]
      %v3087 = vld [vmem:[#allocation2 + $0x84] sm:$0xff]
      %v3088 = vld [vmem:[#allocation2 + $0x8c] sm:$0xff]
      %v3089 = vld [vmem:[#allocation2 + $0x94] sm:$0xff]
      %v3090 = vld [vmem:[#allocation2 + $0x9c] sm:$0xff]
      %s3091 = scalar_lea.vmem %s3, 336
      %v3092 = vld [vmem:[%s3091] sm:$0xff]
      %v3093 = vld [vmem:[%s3091 + $0x8] sm:$0xff]
      %v3094 = vld [vmem:[%s3091 + $0x10] sm:$0xff]
      %3095 = vmatprep.subr.mxu0 0.0
      %3096 = vmatpush1.msra.mxu0 %v3092
      %3097 = vmatprep.subr.mxu0 0.0
      %3098 = vmatpush1.msra.mxu0 %v3093
      %3099 = vmatprep.subr.mxu0 0.0
      %3100 = vmatpush1.msra.mxu0 %v3094
      %3101 = vmatprep.subr.mxu0 0.0
      %3102 = vmatpush1.msra.mxu0 0.0
      %3103 = vmatprep.subr.mxu0 0.0
      %3104 = vmatpush1.msra.mxu0 0.0
      %3105 = vmatprep.subr.mxu0 0.0
      %3106 = vmatpush1.msra.mxu0 0.0
      %3107 = vmatprep.subr.mxu0 0.0
      %3108 = vmatpush1.msra.mxu0 0.0
      %3109 = vmatprep.subr.mxu0 0.0
      %3110 = vmatpush1.msra.mxu0 0.0
      %3111 = vmatprep.subr.mxu0 0.0
      %3112 = vmatpush1.msra.mxu0 0.0
      %3113 = vmatprep.subr.mxu0 0.0
      %3114 = vmatpush1.msra.mxu0 0.0
      %3115 = vmatprep.subr.mxu0 0.0
      %3116 = vmatpush1.msra.mxu0 0.0
      %3117 = vmatprep.subr.mxu0 0.0
      %3118 = vmatpush1.msra.mxu0 0.0
      %3119 = vmatprep.subr.mxu0 0.0
      %3120 = vmatpush1.msra.mxu0 0.0
      %3121 = vmatprep.subr.mxu0 0.0
      %3122 = vmatpush1.msra.mxu0 0.0
      %3123 = vmatprep.subr.mxu0 0.0
      %3124 = vmatpush1.msra.mxu0 0.0
      %3125 = vmatprep.subr.mxu0 0.0
      %3126 = vmatpush1.msra.mxu0 0.0
      %3127 = vmatprep.subr.mxu0 0.0
      %3128 = vmatpush1.msra.mxu0 0.0
      %3129 = vmatprep.subr.mxu0 0.0
      %3130 = vmatpush1.msra.mxu0 0.0
      %3131 = vmatprep.subr.mxu0 0.0
      %3132 = vmatpush1.msra.mxu0 0.0
      %3133 = vmatprep.subr.mxu0 0.0
      %3134 = vmatpush1.msra.mxu0 0.0
      %3135 = vmatprep.subr.mxu0 0.0
      %3136 = vmatpush1.msra.mxu0 0.0
      %3137 = vmatprep.subr.mxu0 0.0
      %3138 = vmatpush1.msra.mxu0 0.0
      %3139 = vmatprep.subr.mxu0 0.0
      %3140 = vmatpush1.msra.mxu0 0.0
      %3141 = vmatprep.subr.mxu0 0.0
      %3142 = vmatpush1.msra.mxu0 0.0
      %3143 = vmatprep.subr.mxu0 0.0
      %3144 = vmatpush1.msra.mxu0 0.0
      %3145 = vmatprep.subr.mxu0 0.0
      %3146 = vmatpush1.msra.mxu0 0.0
      %3147 = vmatprep.subr.mxu0 0.0
      %3148 = vmatpush1.msra.mxu0 0.0
      %3149 = vmatprep.subr.mxu0 0.0
      %3150 = vmatpush1.msra.mxu0 0.0
      %3151 = vmatprep.subr.mxu0 0.0
      %3152 = vmatpush1.msra.mxu0 0.0
      %3153 = vmatprep.subr.mxu0 0.0
      %3154 = vmatpush1.msra.mxu0 0.0
      %3155 = vmatprep.subr.mxu0 0.0
      %3156 = vmatpush1.msra.mxu0 0.0
      %3157 = vmatprep.subr.mxu0 0.0
      %3158 = vmatpush1.msra.mxu0 0.0
      %3159 = vmatprep.mubr.f32.mxu0 0.0
      %3160 = vmatmul.mubr.f32.gmra.mrb[0].mxu0 %v3075
      %v3161 = vpop.f32.mrb[0].mxu0
      %v3162 = vadd.f32 0.0, %v3161
      %v3163 = vpop.f32.mrb[0].mxu0
      %3164 = vmatprep.mubr.f32.mxu0 0.0
      %3165 = vmatmul.mubr.f32.gmra.mrb[0].mxu0 %v3076
      %v3166 = vpop.f32.mrb[0].mxu0
      %v3167 = vadd.f32 0.0, %v3166
      %v3168 = vpop.f32.mrb[0].mxu0
      %3169 = vmatprep.mubr.f32.mxu0 0.0
      %3170 = vmatmul.mubr.f32.gmra.mrb[0].mxu0 %v3077
      %v3171 = vpop.f32.mrb[0].mxu0
      %v3172 = vadd.f32 0.0, %v3171
      %v3173 = vpop.f32.mrb[0].mxu0
      %3174 = vmatprep.mubr.f32.mxu0 0.0
      %3175 = vmatmul.mubr.f32.gmra.mrb[0].mxu0 %v3078
      %v3176 = vpop.f32.mrb[0].mxu0
      %v3177 = vadd.f32 0.0, %v3176
      %v3178 = vpop.f32.mrb[0].mxu0
      %3179 = vmatprep.mubr.f32.mxu0 0.0
      %3180 = vmatmul.mubr.f32.gmra.mrb[0].mxu0 %v3079
      %v3181 = vpop.f32.mrb[0].mxu0
      %v3182 = vadd.f32 0.0, %v3181
      %v3183 = vpop.f32.mrb[0].mxu0
      %3184 = vmatprep.mubr.f32.mxu0 0.0
      %3185 = vmatmul.mubr.f32.gmra.mrb[0].mxu0 %v3080
      %v3186 = vpop.f32.mrb[0].mxu0
      %v3187 = vadd.f32 0.0, %v3186
      %v3188 = vpop.f32.mrb[0].mxu0
      %3189 = vmatprep.mubr.f32.mxu0 0.0
      %3190 = vmatmul.mubr.f32.gmra.mrb[0].mxu0 %v3081
      %v3191 = vpop.f32.mrb[0].mxu0
      %v3192 = vadd.f32 0.0, %v3191
      %v3193 = vpop.f32.mrb[0].mxu0
      %3194 = vmatprep.mubr.f32.mxu0 0.0
      %3195 = vmatmul.mubr.f32.gmra.mrb[0].mxu0 %v3082
      %v3196 = vpop.f32.mrb[0].mxu0
      %v3197 = vadd.f32 0.0, %v3196
      %v3198 = vpop.f32.mrb[0].mxu0
      %3199 = vmatprep.mubr.f32.mxu0 0.0
      %3200 = vmatmul.mubr.f32.gmra.mrb[0].mxu0 %v3083
      %v3201 = vpop.f32.mrb[0].mxu0
      %v3202 = vadd.f32 0.0, %v3201
      %v3203 = vpop.f32.mrb[0].mxu0
      %3204 = vmatprep.mubr.f32.mxu0 0.0
      %3205 = vmatmul.mubr.f32.gmra.mrb[0].mxu0 %v3084
      %v3206 = vpop.f32.mrb[0].mxu0
      %v3207 = vadd.f32 0.0, %v3206
      %v3208 = vpop.f32.mrb[0].mxu0
      %3209 = vmatprep.mubr.f32.mxu0 0.0
      %3210 = vmatmul.mubr.f32.gmra.mrb[0].mxu0 %v3085
      %v3211 = vpop.f32.mrb[0].mxu0
      %v3212 = vadd.f32 0.0, %v3211
      %v3213 = vpop.f32.mrb[0].mxu0
      %3214 = vmatprep.mubr.f32.mxu0 0.0
      %3215 = vmatmul.mubr.f32.gmra.mrb[0].mxu0 %v3086
      %v3216 = vpop.f32.mrb[0].mxu0
      %v3217 = vadd.f32 0.0, %v3216
      %v3218 = vpop.f32.mrb[0].mxu0
      %3219 = vmatprep.mubr.f32.mxu0 0.0
      %3220 = vmatmul.mubr.f32.gmra.mrb[0].mxu0 %v3087
      %v3221 = vpop.f32.mrb[0].mxu0
      %v3222 = vadd.f32 0.0, %v3221
      %v3223 = vpop.f32.mrb[0].mxu0
      %3224 = vmatprep.mubr.f32.mxu0 0.0
      %3225 = vmatmul.mubr.f32.gmra.mrb[0].mxu0 %v3088
      %v3226 = vpop.f32.mrb[0].mxu0
      %v3227 = vadd.f32 0.0, %v3226
      %v3228 = vpop.f32.mrb[0].mxu0
      %3229 = vmatprep.mubr.f32.mxu0 0.0
      %3230 = vmatmul.mubr.f32.gmra.mrb[0].mxu0 %v3089
      %v3231 = vpop.f32.mrb[0].mxu0
      %v3232 = vadd.f32 0.0, %v3231
      %v3233 = vpop.f32.mrb[0].mxu0
      %3234 = vmatprep.mubr.f32.mxu0 0.0
      %3235 = vmatmul.mubr.f32.gmra.mrb[0].mxu0 %v3090
      %v3236 = vpop.f32.mrb[0].mxu0
      %v3237 = vadd.f32 0.0, %v3236
      %v3238 = vpop.f32.mrb[0].mxu0
      %3239 = vdwg.mxu0
      %v3240 = vadd.f32 %v3059, %v3162
      %v3241 = vadd.f32 %v3060, %v3167
      %v3242 = vadd.f32 %v3061, %v3172
      %v3243 = vadd.f32 %v3062, %v3177
      %v3244 = vadd.f32 %v3063, %v3182
      %v3245 = vadd.f32 %v3064, %v3187
      %v3246 = vadd.f32 %v3065, %v3192
      %v3247 = vadd.f32 %v3066, %v3197
      %v3248 = vadd.f32 %v3067, %v3202
      %v3249 = vadd.f32 %v3068, %v3207
      %v3250 = vadd.f32 %v3069, %v3212
      %v3251 = vadd.f32 %v3070, %v3217
      %v3252 = vadd.f32 %v3071, %v3222
      %v3253 = vadd.f32 %v3072, %v3227
      %v3254 = vadd.f32 %v3073, %v3232
      %v3255 = vadd.f32 %v3074, %v3237
      %v3256 = vld [vmem:[#allocation2 + $0x30] sm:$0xff]
      %v3257 = vld [vmem:[#allocation2 + $0x38] sm:$0xff]
      %v3258 = vld [vmem:[#allocation2 + $0x40] sm:$0xff]
      %v3259 = vld [vmem:[#allocation2 + $0x48] sm:$0xff]
      %v3260 = vld [vmem:[#allocation2 + $0x50] sm:$0xff]
      %v3261 = vld [vmem:[#allocation2 + $0x58] sm:$0xff]
      %v3262 = vld [vmem:[#allocation2 + $0x60] sm:$0xff]
      %v3263 = vld [vmem:[#allocation2 + $0x68] sm:$0xff]
      %v3264 = vld [vmem:[#allocation2 + $0x70] sm:$0xff]
      %v3265 = vld [vmem:[#allocation2 + $0x78] sm:$0xff]
      %v3266 = vld [vmem:[#allocation2 + $0x80] sm:$0xff]
      %v3267 = vld [vmem:[#allocation2 + $0x88] sm:$0xff]
      %v3268 = vld [vmem:[#allocation2 + $0x90] sm:$0xff]
      %v3269 = vld [vmem:[#allocation2 + $0x98] sm:$0xff]
      %v3270 = vld [vmem:[#allocation2 + $0xa0] sm:$0xff]
      %v3271 = vld [vmem:[#allocation2 + $0xa8] sm:$0xff]
      %s3272 = scalar_lea.vmem %s3, 360
      %v3273 = vld [vmem:[%s3272] sm:$0xff]
      %v3274 = vld [vmem:[%s3272 + $0x8] sm:$0xff]
      %v3275 = vld [vmem:[%s3272 + $0x10] sm:$0xff]
      %3276 = vmatprep.subr.mxu0 0.0
      %3277 = vmatpush1.msra.mxu0 %v3273
      %3278 = vmatprep.subr.mxu0 0.0
      %3279 = vmatpush1.msra.mxu0 %v3274
      %3280 = vmatprep.subr.mxu0 0.0
      %3281 = vmatpush1.msra.mxu0 %v3275
      %3282 = vmatprep.subr.mxu0 0.0
      %3283 = vmatpush1.msra.mxu0 0.0
      %3284 = vmatprep.subr.mxu0 0.0
      %3285 = vmatpush1.msra.mxu0 0.0
      %3286 = vmatprep.subr.mxu0 0.0
      %3287 = vmatpush1.msra.mxu0 0.0
      %3288 = vmatprep.subr.mxu0 0.0
      %3289 = vmatpush1.msra.mxu0 0.0
      %3290 = vmatprep.subr.mxu0 0.0
      %3291 = vmatpush1.msra.mxu0 0.0
      %3292 = vmatprep.subr.mxu0 0.0
      %3293 = vmatpush1.msra.mxu0 0.0
      %3294 = vmatprep.subr.mxu0 0.0
      %3295 = vmatpush1.msra.mxu0 0.0
      %3296 = vmatprep.subr.mxu0 0.0
      %3297 = vmatpush1.msra.mxu0 0.0
      %3298 = vmatprep.subr.mxu0 0.0
      %3299 = vmatpush1.msra.mxu0 0.0
      %3300 = vmatprep.subr.mxu0 0.0
      %3301 = vmatpush1.msra.mxu0 0.0
      %3302 = vmatprep.subr.mxu0 0.0
      %3303 = vmatpush1.msra.mxu0 0.0
      %3304 = vmatprep.subr.mxu0 0.0
      %3305 = vmatpush1.msra.mxu0 0.0
      %3306 = vmatprep.subr.mxu0 0.0
      %3307 = vmatpush1.msra.mxu0 0.0
      %3308 = vmatprep.subr.mxu0 0.0
      %3309 = vmatpush1.msra.mxu0 0.0
      %3310 = vmatprep.subr.mxu0 0.0
      %3311 = vmatpush1.msra.mxu0 0.0
      %3312 = vmatprep.subr.mxu0 0.0
      %3313 = vmatpush1.msra.mxu0 0.0
      %3314 = vmatprep.subr.mxu0 0.0
      %3315 = vmatpush1.msra.mxu0 0.0
      %3316 = vmatprep.subr.mxu0 0.0
      %3317 = vmatpush1.msra.mxu0 0.0
      %3318 = vmatprep.subr.mxu0 0.0
      %3319 = vmatpush1.msra.mxu0 0.0
      %3320 = vmatprep.subr.mxu0 0.0
      %3321 = vmatpush1.msra.mxu0 0.0
      %3322 = vmatprep.subr.mxu0 0.0
      %3323 = vmatpush1.msra.mxu0 0.0
      %3324 = vmatprep.subr.mxu0 0.0
      %3325 = vmatpush1.msra.mxu0 0.0
      %3326 = vmatprep.subr.mxu0 0.0
      %3327 = vmatpush1.msra.mxu0 0.0
      %3328 = vmatprep.subr.mxu0 0.0
      %3329 = vmatpush1.msra.mxu0 0.0
      %3330 = vmatprep.subr.mxu0 0.0
      %3331 = vmatpush1.msra.mxu0 0.0
      %3332 = vmatprep.subr.mxu0 0.0
      %3333 = vmatpush1.msra.mxu0 0.0
      %3334 = vmatprep.subr.mxu0 0.0
      %3335 = vmatpush1.msra.mxu0 0.0
      %3336 = vmatprep.subr.mxu0 0.0
      %3337 = vmatpush1.msra.mxu0 0.0
      %3338 = vmatprep.subr.mxu0 0.0
      %3339 = vmatpush1.msra.mxu0 0.0
      %3340 = vmatprep.mubr.f32.mxu0 0.0
      %3341 = vmatmul.mubr.f32.gmra.mrb[0].mxu0 %v3256
      %v3342 = vpop.f32.mrb[0].mxu0
      %v3343 = vadd.f32 0.0, %v3342
      %v3344 = vpop.f32.mrb[0].mxu0
      %3345 = vmatprep.mubr.f32.mxu0 0.0
      %3346 = vmatmul.mubr.f32.gmra.mrb[0].mxu0 %v3257
      %v3347 = vpop.f32.mrb[0].mxu0
      %v3348 = vadd.f32 0.0, %v3347
      %v3349 = vpop.f32.mrb[0].mxu0
      %3350 = vmatprep.mubr.f32.mxu0 0.0
      %3351 = vmatmul.mubr.f32.gmra.mrb[0].mxu0 %v3258
      %v3352 = vpop.f32.mrb[0].mxu0
      %v3353 = vadd.f32 0.0, %v3352
      %v3354 = vpop.f32.mrb[0].mxu0
      %3355 = vmatprep.mubr.f32.mxu0 0.0
      %3356 = vmatmul.mubr.f32.gmra.mrb[0].mxu0 %v3259
      %v3357 = vpop.f32.mrb[0].mxu0
      %v3358 = vadd.f32 0.0, %v3357
      %v3359 = vpop.f32.mrb[0].mxu0
      %3360 = vmatprep.mubr.f32.mxu0 0.0
      %3361 = vmatmul.mubr.f32.gmra.mrb[0].mxu0 %v3260
      %v3362 = vpop.f32.mrb[0].mxu0
      %v3363 = vadd.f32 0.0, %v3362
      %v3364 = vpop.f32.mrb[0].mxu0
      %3365 = vmatprep.mubr.f32.mxu0 0.0
      %3366 = vmatmul.mubr.f32.gmra.mrb[0].mxu0 %v3261
      %v3367 = vpop.f32.mrb[0].mxu0
      %v3368 = vadd.f32 0.0, %v3367
      %v3369 = vpop.f32.mrb[0].mxu0
      %3370 = vmatprep.mubr.f32.mxu0 0.0
      %3371 = vmatmul.mubr.f32.gmra.mrb[0].mxu0 %v3262
      %v3372 = vpop.f32.mrb[0].mxu0
      %v3373 = vadd.f32 0.0, %v3372
      %v3374 = vpop.f32.mrb[0].mxu0
      %3375 = vmatprep.mubr.f32.mxu0 0.0
      %3376 = vmatmul.mubr.f32.gmra.mrb[0].mxu0 %v3263
      %v3377 = vpop.f32.mrb[0].mxu0
      %v3378 = vadd.f32 0.0, %v3377
      %v3379 = vpop.f32.mrb[0].mxu0
      %3380 = vmatprep.mubr.f32.mxu0 0.0
      %3381 = vmatmul.mubr.f32.gmra.mrb[0].mxu0 %v3264
      %v3382 = vpop.f32.mrb[0].mxu0
      %v3383 = vadd.f32 0.0, %v3382
      %v3384 = vpop.f32.mrb[0].mxu0
      %3385 = vmatprep.mubr.f32.mxu0 0.0
      %3386 = vmatmul.mubr.f32.gmra.mrb[0].mxu0 %v3265
      %v3387 = vpop.f32.mrb[0].mxu0
      %v3388 = vadd.f32 0.0, %v3387
      %v3389 = vpop.f32.mrb[0].mxu0
      %3390 = vmatprep.mubr.f32.mxu0 0.0
      %3391 = vmatmul.mubr.f32.gmra.mrb[0].mxu0 %v3266
      %v3392 = vpop.f32.mrb[0].mxu0
      %v3393 = vadd.f32 0.0, %v3392
      %v3394 = vpop.f32.mrb[0].mxu0
      %3395 = vmatprep.mubr.f32.mxu0 0.0
      %3396 = vmatmul.mubr.f32.gmra.mrb[0].mxu0 %v3267
      %v3397 = vpop.f32.mrb[0].mxu0
      %v3398 = vadd.f32 0.0, %v3397
      %v3399 = vpop.f32.mrb[0].mxu0
      %3400 = vmatprep.mubr.f32.mxu0 0.0
      %3401 = vmatmul.mubr.f32.gmra.mrb[0].mxu0 %v3268
      %v3402 = vpop.f32.mrb[0].mxu0
      %v3403 = vadd.f32 0.0, %v3402
      %v3404 = vpop.f32.mrb[0].mxu0
      %3405 = vmatprep.mubr.f32.mxu0 0.0
      %3406 = vmatmul.mubr.f32.gmra.mrb[0].mxu0 %v3269
      %v3407 = vpop.f32.mrb[0].mxu0
      %v3408 = vadd.f32 0.0, %v3407
      %v3409 = vpop.f32.mrb[0].mxu0
      %3410 = vmatprep.mubr.f32.mxu0 0.0
      %3411 = vmatmul.mubr.f32.gmra.mrb[0].mxu0 %v3270
      %v3412 = vpop.f32.mrb[0].mxu0
      %v3413 = vadd.f32 0.0, %v3412
      %v3414 = vpop.f32.mrb[0].mxu0
      %3415 = vmatprep.mubr.f32.mxu0 0.0
      %3416 = vmatmul.mubr.f32.gmra.mrb[0].mxu0 %v3271
      %v3417 = vpop.f32.mrb[0].mxu0
      %v3418 = vadd.f32 0.0, %v3417
      %v3419 = vpop.f32.mrb[0].mxu0
      %3420 = vdwg.mxu0
      %v3421 = vadd.f32 %v3240, %v3343
      %v3422 = vadd.f32 %v3241, %v3348
      %v3423 = vadd.f32 %v3242, %v3353
      %v3424 = vadd.f32 %v3243, %v3358
      %v3425 = vadd.f32 %v3244, %v3363
      %v3426 = vadd.f32 %v3245, %v3368
      %v3427 = vadd.f32 %v3246, %v3373
      %v3428 = vadd.f32 %v3247, %v3378
      %v3429 = vadd.f32 %v3248, %v3383
      %v3430 = vadd.f32 %v3249, %v3388
      %v3431 = vadd.f32 %v3250, %v3393
      %v3432 = vadd.f32 %v3251, %v3398
      %v3433 = vadd.f32 %v3252, %v3403
      %v3434 = vadd.f32 %v3253, %v3408
      %v3435 = vadd.f32 %v3254, %v3413
      %v3436 = vadd.f32 %v3255, %v3418
      %v3437 = vld [vmem:[#allocation2 + $0x31] sm:$0xff]
      %v3438 = vld [vmem:[#allocation2 + $0x39] sm:$0xff]
      %v3439 = vld [vmem:[#allocation2 + $0x41] sm:$0xff]
      %v3440 = vld [vmem:[#allocation2 + $0x49] sm:$0xff]
      %v3441 = vld [vmem:[#allocation2 + $0x51] sm:$0xff]
      %v3442 = vld [vmem:[#allocation2 + $0x59] sm:$0xff]
      %v3443 = vld [vmem:[#allocation2 + $0x61] sm:$0xff]
      %v3444 = vld [vmem:[#allocation2 + $0x69] sm:$0xff]
      %v3445 = vld [vmem:[#allocation2 + $0x71] sm:$0xff]
      %v3446 = vld [vmem:[#allocation2 + $0x79] sm:$0xff]
      %v3447 = vld [vmem:[#allocation2 + $0x81] sm:$0xff]
      %v3448 = vld [vmem:[#allocation2 + $0x89] sm:$0xff]
      %v3449 = vld [vmem:[#allocation2 + $0x91] sm:$0xff]
      %v3450 = vld [vmem:[#allocation2 + $0x99] sm:$0xff]
      %v3451 = vld [vmem:[#allocation2 + $0xa1] sm:$0xff]
      %v3452 = vld [vmem:[#allocation2 + $0xa9] sm:$0xff]
      %s3453 = scalar_lea.vmem %s3, 384
      %v3454 = vld [vmem:[%s3453] sm:$0xff]
      %v3455 = vld [vmem:[%s3453 + $0x8] sm:$0xff]
      %v3456 = vld [vmem:[%s3453 + $0x10] sm:$0xff]
      %3457 = vmatprep.subr.mxu0 0.0
      %3458 = vmatpush1.msra.mxu0 %v3454
      %3459 = vmatprep.subr.mxu0 0.0
      %3460 = vmatpush1.msra.mxu0 %v3455
      %3461 = vmatprep.subr.mxu0 0.0
      %3462 = vmatpush1.msra.mxu0 %v3456
      %3463 = vmatprep.subr.mxu0 0.0
      %3464 = vmatpush1.msra.mxu0 0.0
      %3465 = vmatprep.subr.mxu0 0.0
      %3466 = vmatpush1.msra.mxu0 0.0
      %3467 = vmatprep.subr.mxu0 0.0
      %3468 = vmatpush1.msra.mxu0 0.0
      %3469 = vmatprep.subr.mxu0 0.0
      %3470 = vmatpush1.msra.mxu0 0.0
      %3471 = vmatprep.subr.mxu0 0.0
      %3472 = vmatpush1.msra.mxu0 0.0
      %3473 = vmatprep.subr.mxu0 0.0
      %3474 = vmatpush1.msra.mxu0 0.0
      %3475 = vmatprep.subr.mxu0 0.0
      %3476 = vmatpush1.msra.mxu0 0.0
      %3477 = vmatprep.subr.mxu0 0.0
      %3478 = vmatpush1.msra.mxu0 0.0
      %3479 = vmatprep.subr.mxu0 0.0
      %3480 = vmatpush1.msra.mxu0 0.0
      %3481 = vmatprep.subr.mxu0 0.0
      %3482 = vmatpush1.msra.mxu0 0.0
      %3483 = vmatprep.subr.mxu0 0.0
      %3484 = vmatpush1.msra.mxu0 0.0
      %3485 = vmatprep.subr.mxu0 0.0
      %3486 = vmatpush1.msra.mxu0 0.0
      %3487 = vmatprep.subr.mxu0 0.0
      %3488 = vmatpush1.msra.mxu0 0.0
      %3489 = vmatprep.subr.mxu0 0.0
      %3490 = vmatpush1.msra.mxu0 0.0
      %3491 = vmatprep.subr.mxu0 0.0
      %3492 = vmatpush1.msra.mxu0 0.0
      %3493 = vmatprep.subr.mxu0 0.0
      %3494 = vmatpush1.msra.mxu0 0.0
      %3495 = vmatprep.subr.mxu0 0.0
      %3496 = vmatpush1.msra.mxu0 0.0
      %3497 = vmatprep.subr.mxu0 0.0
      %3498 = vmatpush1.msra.mxu0 0.0
      %3499 = vmatprep.subr.mxu0 0.0
      %3500 = vmatpush1.msra.mxu0 0.0
      %3501 = vmatprep.subr.mxu0 0.0
      %3502 = vmatpush1.msra.mxu0 0.0
      %3503 = vmatprep.subr.mxu0 0.0
      %3504 = vmatpush1.msra.mxu0 0.0
      %3505 = vmatprep.subr.mxu0 0.0
      %3506 = vmatpush1.msra.mxu0 0.0
      %3507 = vmatprep.subr.mxu0 0.0
      %3508 = vmatpush1.msra.mxu0 0.0
      %3509 = vmatprep.subr.mxu0 0.0
      %3510 = vmatpush1.msra.mxu0 0.0
      %3511 = vmatprep.subr.mxu0 0.0
      %3512 = vmatpush1.msra.mxu0 0.0
      %3513 = vmatprep.subr.mxu0 0.0
      %3514 = vmatpush1.msra.mxu0 0.0
      %3515 = vmatprep.subr.mxu0 0.0
      %3516 = vmatpush1.msra.mxu0 0.0
      %3517 = vmatprep.subr.mxu0 0.0
      %3518 = vmatpush1.msra.mxu0 0.0
      %3519 = vmatprep.subr.mxu0 0.0
      %3520 = vmatpush1.msra.mxu0 0.0
      %3521 = vmatprep.mubr.f32.mxu0 0.0
      %3522 = vmatmul.mubr.f32.gmra.mrb[0].mxu0 %v3437
      %v3523 = vpop.f32.mrb[0].mxu0
      %v3524 = vadd.f32 0.0, %v3523
      %v3525 = vpop.f32.mrb[0].mxu0
      %3526 = vmatprep.mubr.f32.mxu0 0.0
      %3527 = vmatmul.mubr.f32.gmra.mrb[0].mxu0 %v3438
      %v3528 = vpop.f32.mrb[0].mxu0
      %v3529 = vadd.f32 0.0, %v3528
      %v3530 = vpop.f32.mrb[0].mxu0
      %3531 = vmatprep.mubr.f32.mxu0 0.0
      %3532 = vmatmul.mubr.f32.gmra.mrb[0].mxu0 %v3439
      %v3533 = vpop.f32.mrb[0].mxu0
      %v3534 = vadd.f32 0.0, %v3533
      %v3535 = vpop.f32.mrb[0].mxu0
      %3536 = vmatprep.mubr.f32.mxu0 0.0
      %3537 = vmatmul.mubr.f32.gmra.mrb[0].mxu0 %v3440
      %v3538 = vpop.f32.mrb[0].mxu0
      %v3539 = vadd.f32 0.0, %v3538
      %v3540 = vpop.f32.mrb[0].mxu0
      %3541 = vmatprep.mubr.f32.mxu0 0.0
      %3542 = vmatmul.mubr.f32.gmra.mrb[0].mxu0 %v3441
      %v3543 = vpop.f32.mrb[0].mxu0
      %v3544 = vadd.f32 0.0, %v3543
      %v3545 = vpop.f32.mrb[0].mxu0
      %3546 = vmatprep.mubr.f32.mxu0 0.0
      %3547 = vmatmul.mubr.f32.gmra.mrb[0].mxu0 %v3442
      %v3548 = vpop.f32.mrb[0].mxu0
      %v3549 = vadd.f32 0.0, %v3548
      %v3550 = vpop.f32.mrb[0].mxu0
      %3551 = vmatprep.mubr.f32.mxu0 0.0
      %3552 = vmatmul.mubr.f32.gmra.mrb[0].mxu0 %v3443
      %v3553 = vpop.f32.mrb[0].mxu0
      %v3554 = vadd.f32 0.0, %v3553
      %v3555 = vpop.f32.mrb[0].mxu0
      %3556 = vmatprep.mubr.f32.mxu0 0.0
      %3557 = vmatmul.mubr.f32.gmra.mrb[0].mxu0 %v3444
      %v3558 = vpop.f32.mrb[0].mxu0
      %v3559 = vadd.f32 0.0, %v3558
      %v3560 = vpop.f32.mrb[0].mxu0
      %3561 = vmatprep.mubr.f32.mxu0 0.0
      %3562 = vmatmul.mubr.f32.gmra.mrb[0].mxu0 %v3445
      %v3563 = vpop.f32.mrb[0].mxu0
      %v3564 = vadd.f32 0.0, %v3563
      %v3565 = vpop.f32.mrb[0].mxu0
      %3566 = vmatprep.mubr.f32.mxu0 0.0
      %3567 = vmatmul.mubr.f32.gmra.mrb[0].mxu0 %v3446
      %v3568 = vpop.f32.mrb[0].mxu0
      %v3569 = vadd.f32 0.0, %v3568
      %v3570 = vpop.f32.mrb[0].mxu0
      %3571 = vmatprep.mubr.f32.mxu0 0.0
      %3572 = vmatmul.mubr.f32.gmra.mrb[0].mxu0 %v3447
      %v3573 = vpop.f32.mrb[0].mxu0
      %v3574 = vadd.f32 0.0, %v3573
      %v3575 = vpop.f32.mrb[0].mxu0
      %3576 = vmatprep.mubr.f32.mxu0 0.0
      %3577 = vmatmul.mubr.f32.gmra.mrb[0].mxu0 %v3448
      %v3578 = vpop.f32.mrb[0].mxu0
      %v3579 = vadd.f32 0.0, %v3578
      %v3580 = vpop.f32.mrb[0].mxu0
      %3581 = vmatprep.mubr.f32.mxu0 0.0
      %3582 = vmatmul.mubr.f32.gmra.mrb[0].mxu0 %v3449
      %v3583 = vpop.f32.mrb[0].mxu0
      %v3584 = vadd.f32 0.0, %v3583
      %v3585 = vpop.f32.mrb[0].mxu0
      %3586 = vmatprep.mubr.f32.mxu0 0.0
      %3587 = vmatmul.mubr.f32.gmra.mrb[0].mxu0 %v3450
      %v3588 = vpop.f32.mrb[0].mxu0
      %v3589 = vadd.f32 0.0, %v3588
      %v3590 = vpop.f32.mrb[0].mxu0
      %3591 = vmatprep.mubr.f32.mxu0 0.0
      %3592 = vmatmul.mubr.f32.gmra.mrb[0].mxu0 %v3451
      %v3593 = vpop.f32.mrb[0].mxu0
      %v3594 = vadd.f32 0.0, %v3593
      %v3595 = vpop.f32.mrb[0].mxu0
      %3596 = vmatprep.mubr.f32.mxu0 0.0
      %3597 = vmatmul.mubr.f32.gmra.mrb[0].mxu0 %v3452
      %v3598 = vpop.f32.mrb[0].mxu0
      %v3599 = vadd.f32 0.0, %v3598
      %v3600 = vpop.f32.mrb[0].mxu0
      %3601 = vdwg.mxu0
      %v3602 = vadd.f32 %v3421, %v3524
      %v3603 = vadd.f32 %v3422, %v3529
      %v3604 = vadd.f32 %v3423, %v3534
      %v3605 = vadd.f32 %v3424, %v3539
      %v3606 = vadd.f32 %v3425, %v3544
      %v3607 = vadd.f32 %v3426, %v3549
      %v3608 = vadd.f32 %v3427, %v3554
      %v3609 = vadd.f32 %v3428, %v3559
      %v3610 = vadd.f32 %v3429, %v3564
      %v3611 = vadd.f32 %v3430, %v3569
      %v3612 = vadd.f32 %v3431, %v3574
      %v3613 = vadd.f32 %v3432, %v3579
      %v3614 = vadd.f32 %v3433, %v3584
      %v3615 = vadd.f32 %v3434, %v3589
      %v3616 = vadd.f32 %v3435, %v3594
      %v3617 = vadd.f32 %v3436, %v3599
      %v3618 = vld [vmem:[#allocation2 + $0x32] sm:$0xff]
      %v3619 = vld [vmem:[#allocation2 + $0x3a] sm:$0xff]
      %v3620 = vld [vmem:[#allocation2 + $0x42] sm:$0xff]
      %v3621 = vld [vmem:[#allocation2 + $0x4a] sm:$0xff]
      %v3622 = vld [vmem:[#allocation2 + $0x52] sm:$0xff]
      %v3623 = vld [vmem:[#allocation2 + $0x5a] sm:$0xff]
      %v3624 = vld [vmem:[#allocation2 + $0x62] sm:$0xff]
      %v3625 = vld [vmem:[#allocation2 + $0x6a] sm:$0xff]
      %v3626 = vld [vmem:[#allocation2 + $0x72] sm:$0xff]
      %v3627 = vld [vmem:[#allocation2 + $0x7a] sm:$0xff]
      %v3628 = vld [vmem:[#allocation2 + $0x82] sm:$0xff]
      %v3629 = vld [vmem:[#allocation2 + $0x8a] sm:$0xff]
      %v3630 = vld [vmem:[#allocation2 + $0x92] sm:$0xff]
      %v3631 = vld [vmem:[#allocation2 + $0x9a] sm:$0xff]
      %v3632 = vld [vmem:[#allocation2 + $0xa2] sm:$0xff]
      %v3633 = vld [vmem:[#allocation2 + $0xaa] sm:$0xff]
      %s3634 = scalar_lea.vmem %s3, 408
      %v3635 = vld [vmem:[%s3634] sm:$0xff]
      %v3636 = vld [vmem:[%s3634 + $0x8] sm:$0xff]
      %v3637 = vld [vmem:[%s3634 + $0x10] sm:$0xff]
      %3638 = vmatprep.subr.mxu0 0.0
      %3639 = vmatpush1.msra.mxu0 %v3635
      %3640 = vmatprep.subr.mxu0 0.0
      %3641 = vmatpush1.msra.mxu0 %v3636
      %3642 = vmatprep.subr.mxu0 0.0
      %3643 = vmatpush1.msra.mxu0 %v3637
      %3644 = vmatprep.subr.mxu0 0.0
      %3645 = vmatpush1.msra.mxu0 0.0
      %3646 = vmatprep.subr.mxu0 0.0
      %3647 = vmatpush1.msra.mxu0 0.0
      %3648 = vmatprep.subr.mxu0 0.0
      %3649 = vmatpush1.msra.mxu0 0.0
      %3650 = vmatprep.subr.mxu0 0.0
      %3651 = vmatpush1.msra.mxu0 0.0
      %3652 = vmatprep.subr.mxu0 0.0
      %3653 = vmatpush1.msra.mxu0 0.0
      %3654 = vmatprep.subr.mxu0 0.0
      %3655 = vmatpush1.msra.mxu0 0.0
      %3656 = vmatprep.subr.mxu0 0.0
      %3657 = vmatpush1.msra.mxu0 0.0
      %3658 = vmatprep.subr.mxu0 0.0
      %3659 = vmatpush1.msra.mxu0 0.0
      %3660 = vmatprep.subr.mxu0 0.0
      %3661 = vmatpush1.msra.mxu0 0.0
      %3662 = vmatprep.subr.mxu0 0.0
      %3663 = vmatpush1.msra.mxu0 0.0
      %3664 = vmatprep.subr.mxu0 0.0
      %3665 = vmatpush1.msra.mxu0 0.0
      %3666 = vmatprep.subr.mxu0 0.0
      %3667 = vmatpush1.msra.mxu0 0.0
      %3668 = vmatprep.subr.mxu0 0.0
      %3669 = vmatpush1.msra.mxu0 0.0
      %3670 = vmatprep.subr.mxu0 0.0
      %3671 = vmatpush1.msra.mxu0 0.0
      %3672 = vmatprep.subr.mxu0 0.0
      %3673 = vmatpush1.msra.mxu0 0.0
      %3674 = vmatprep.subr.mxu0 0.0
      %3675 = vmatpush1.msra.mxu0 0.0
      %3676 = vmatprep.subr.mxu0 0.0
      %3677 = vmatpush1.msra.mxu0 0.0
      %3678 = vmatprep.subr.mxu0 0.0
      %3679 = vmatpush1.msra.mxu0 0.0
      %3680 = vmatprep.subr.mxu0 0.0
      %3681 = vmatpush1.msra.mxu0 0.0
      %3682 = vmatprep.subr.mxu0 0.0
      %3683 = vmatpush1.msra.mxu0 0.0
      %3684 = vmatprep.subr.mxu0 0.0
      %3685 = vmatpush1.msra.mxu0 0.0
      %3686 = vmatprep.subr.mxu0 0.0
      %3687 = vmatpush1.msra.mxu0 0.0
      %3688 = vmatprep.subr.mxu0 0.0
      %3689 = vmatpush1.msra.mxu0 0.0
      %3690 = vmatprep.subr.mxu0 0.0
      %3691 = vmatpush1.msra.mxu0 0.0
      %3692 = vmatprep.subr.mxu0 0.0
      %3693 = vmatpush1.msra.mxu0 0.0
      %3694 = vmatprep.subr.mxu0 0.0
      %3695 = vmatpush1.msra.mxu0 0.0
      %3696 = vmatprep.subr.mxu0 0.0
      %3697 = vmatpush1.msra.mxu0 0.0
      %3698 = vmatprep.subr.mxu0 0.0
      %3699 = vmatpush1.msra.mxu0 0.0
      %3700 = vmatprep.subr.mxu0 0.0
      %3701 = vmatpush1.msra.mxu0 0.0
      %3702 = vmatprep.mubr.f32.mxu0 0.0
      %3703 = vmatmul.mubr.f32.gmra.mrb[0].mxu0 %v3618
      %v3704 = vpop.f32.mrb[0].mxu0
      %v3705 = vadd.f32 0.0, %v3704
      %v3706 = vpop.f32.mrb[0].mxu0
      %3707 = vmatprep.mubr.f32.mxu0 0.0
      %3708 = vmatmul.mubr.f32.gmra.mrb[0].mxu0 %v3619
      %v3709 = vpop.f32.mrb[0].mxu0
      %v3710 = vadd.f32 0.0, %v3709
      %v3711 = vpop.f32.mrb[0].mxu0
      %3712 = vmatprep.mubr.f32.mxu0 0.0
      %3713 = vmatmul.mubr.f32.gmra.mrb[0].mxu0 %v3620
      %v3714 = vpop.f32.mrb[0].mxu0
      %v3715 = vadd.f32 0.0, %v3714
      %v3716 = vpop.f32.mrb[0].mxu0
      %3717 = vmatprep.mubr.f32.mxu0 0.0
      %3718 = vmatmul.mubr.f32.gmra.mrb[0].mxu0 %v3621
      %v3719 = vpop.f32.mrb[0].mxu0
      %v3720 = vadd.f32 0.0, %v3719
      %v3721 = vpop.f32.mrb[0].mxu0
      %3722 = vmatprep.mubr.f32.mxu0 0.0
      %3723 = vmatmul.mubr.f32.gmra.mrb[0].mxu0 %v3622
      %v3724 = vpop.f32.mrb[0].mxu0
      %v3725 = vadd.f32 0.0, %v3724
      %v3726 = vpop.f32.mrb[0].mxu0
      %3727 = vmatprep.mubr.f32.mxu0 0.0
      %3728 = vmatmul.mubr.f32.gmra.mrb[0].mxu0 %v3623
      %v3729 = vpop.f32.mrb[0].mxu0
      %v3730 = vadd.f32 0.0, %v3729
      %v3731 = vpop.f32.mrb[0].mxu0
      %3732 = vmatprep.mubr.f32.mxu0 0.0
      %3733 = vmatmul.mubr.f32.gmra.mrb[0].mxu0 %v3624
      %v3734 = vpop.f32.mrb[0].mxu0
      %v3735 = vadd.f32 0.0, %v3734
      %v3736 = vpop.f32.mrb[0].mxu0
      %3737 = vmatprep.mubr.f32.mxu0 0.0
      %3738 = vmatmul.mubr.f32.gmra.mrb[0].mxu0 %v3625
      %v3739 = vpop.f32.mrb[0].mxu0
      %v3740 = vadd.f32 0.0, %v3739
      %v3741 = vpop.f32.mrb[0].mxu0
      %3742 = vmatprep.mubr.f32.mxu0 0.0
      %3743 = vmatmul.mubr.f32.gmra.mrb[0].mxu0 %v3626
      %v3744 = vpop.f32.mrb[0].mxu0
      %v3745 = vadd.f32 0.0, %v3744
      %v3746 = vpop.f32.mrb[0].mxu0
      %3747 = vmatprep.mubr.f32.mxu0 0.0
      %3748 = vmatmul.mubr.f32.gmra.mrb[0].mxu0 %v3627
      %v3749 = vpop.f32.mrb[0].mxu0
      %v3750 = vadd.f32 0.0, %v3749
      %v3751 = vpop.f32.mrb[0].mxu0
      %3752 = vmatprep.mubr.f32.mxu0 0.0
      %3753 = vmatmul.mubr.f32.gmra.mrb[0].mxu0 %v3628
      %v3754 = vpop.f32.mrb[0].mxu0
      %v3755 = vadd.f32 0.0, %v3754
      %v3756 = vpop.f32.mrb[0].mxu0
      %3757 = vmatprep.mubr.f32.mxu0 0.0
      %3758 = vmatmul.mubr.f32.gmra.mrb[0].mxu0 %v3629
      %v3759 = vpop.f32.mrb[0].mxu0
      %v3760 = vadd.f32 0.0, %v3759
      %v3761 = vpop.f32.mrb[0].mxu0
      %3762 = vmatprep.mubr.f32.mxu0 0.0
      %3763 = vmatmul.mubr.f32.gmra.mrb[0].mxu0 %v3630
      %v3764 = vpop.f32.mrb[0].mxu0
      %v3765 = vadd.f32 0.0, %v3764
      %v3766 = vpop.f32.mrb[0].mxu0
      %3767 = vmatprep.mubr.f32.mxu0 0.0
      %3768 = vmatmul.mubr.f32.gmra.mrb[0].mxu0 %v3631
      %v3769 = vpop.f32.mrb[0].mxu0
      %v3770 = vadd.f32 0.0, %v3769
      %v3771 = vpop.f32.mrb[0].mxu0
      %3772 = vmatprep.mubr.f32.mxu0 0.0
      %3773 = vmatmul.mubr.f32.gmra.mrb[0].mxu0 %v3632
      %v3774 = vpop.f32.mrb[0].mxu0
      %v3775 = vadd.f32 0.0, %v3774
      %v3776 = vpop.f32.mrb[0].mxu0
      %3777 = vmatprep.mubr.f32.mxu0 0.0
      %3778 = vmatmul.mubr.f32.gmra.mrb[0].mxu0 %v3633
      %v3779 = vpop.f32.mrb[0].mxu0
      %v3780 = vadd.f32 0.0, %v3779
      %v3781 = vpop.f32.mrb[0].mxu0
      %3782 = vdwg.mxu0
      %v3783 = vadd.f32 %v3602, %v3705
      %v3784 = vadd.f32 %v3603, %v3710
      %v3785 = vadd.f32 %v3604, %v3715
      %v3786 = vadd.f32 %v3605, %v3720
      %v3787 = vadd.f32 %v3606, %v3725
      %v3788 = vadd.f32 %v3607, %v3730
      %v3789 = vadd.f32 %v3608, %v3735
      %v3790 = vadd.f32 %v3609, %v3740
      %v3791 = vadd.f32 %v3610, %v3745
      %v3792 = vadd.f32 %v3611, %v3750
      %v3793 = vadd.f32 %v3612, %v3755
      %v3794 = vadd.f32 %v3613, %v3760
      %v3795 = vadd.f32 %v3614, %v3765
      %v3796 = vadd.f32 %v3615, %v3770
      %v3797 = vadd.f32 %v3616, %v3775
      %v3798 = vadd.f32 %v3617, %v3780
      %v3799 = vld [vmem:[#allocation2 + $0x33] sm:$0xff]
      %v3800 = vld [vmem:[#allocation2 + $0x3b] sm:$0xff]
      %v3801 = vld [vmem:[#allocation2 + $0x43] sm:$0xff]
      %v3802 = vld [vmem:[#allocation2 + $0x4b] sm:$0xff]
      %v3803 = vld [vmem:[#allocation2 + $0x53] sm:$0xff]
      %v3804 = vld [vmem:[#allocation2 + $0x5b] sm:$0xff]
      %v3805 = vld [vmem:[#allocation2 + $0x63] sm:$0xff]
      %v3806 = vld [vmem:[#allocation2 + $0x6b] sm:$0xff]
      %v3807 = vld [vmem:[#allocation2 + $0x73] sm:$0xff]
      %v3808 = vld [vmem:[#allocation2 + $0x7b] sm:$0xff]
      %v3809 = vld [vmem:[#allocation2 + $0x83] sm:$0xff]
      %v3810 = vld [vmem:[#allocation2 + $0x8b] sm:$0xff]
      %v3811 = vld [vmem:[#allocation2 + $0x93] sm:$0xff]
      %v3812 = vld [vmem:[#allocation2 + $0x9b] sm:$0xff]
      %v3813 = vld [vmem:[#allocation2 + $0xa3] sm:$0xff]
      %v3814 = vld [vmem:[#allocation2 + $0xab] sm:$0xff]
      %s3815 = scalar_lea.vmem %s3, 432
      %v3816 = vld [vmem:[%s3815] sm:$0xff]
      %v3817 = vld [vmem:[%s3815 + $0x8] sm:$0xff]
      %v3818 = vld [vmem:[%s3815 + $0x10] sm:$0xff]
      %3819 = vmatprep.subr.mxu0 0.0
      %3820 = vmatpush1.msra.mxu0 %v3816
      %3821 = vmatprep.subr.mxu0 0.0
      %3822 = vmatpush1.msra.mxu0 %v3817
      %3823 = vmatprep.subr.mxu0 0.0
      %3824 = vmatpush1.msra.mxu0 %v3818
      %3825 = vmatprep.subr.mxu0 0.0
      %3826 = vmatpush1.msra.mxu0 0.0
      %3827 = vmatprep.subr.mxu0 0.0
      %3828 = vmatpush1.msra.mxu0 0.0
      %3829 = vmatprep.subr.mxu0 0.0
      %3830 = vmatpush1.msra.mxu0 0.0
      %3831 = vmatprep.subr.mxu0 0.0
      %3832 = vmatpush1.msra.mxu0 0.0
      %3833 = vmatprep.subr.mxu0 0.0
      %3834 = vmatpush1.msra.mxu0 0.0
      %3835 = vmatprep.subr.mxu0 0.0
      %3836 = vmatpush1.msra.mxu0 0.0
      %3837 = vmatprep.subr.mxu0 0.0
      %3838 = vmatpush1.msra.mxu0 0.0
      %3839 = vmatprep.subr.mxu0 0.0
      %3840 = vmatpush1.msra.mxu0 0.0
      %3841 = vmatprep.subr.mxu0 0.0
      %3842 = vmatpush1.msra.mxu0 0.0
      %3843 = vmatprep.subr.mxu0 0.0
      %3844 = vmatpush1.msra.mxu0 0.0
      %3845 = vmatprep.subr.mxu0 0.0
      %3846 = vmatpush1.msra.mxu0 0.0
      %3847 = vmatprep.subr.mxu0 0.0
      %3848 = vmatpush1.msra.mxu0 0.0
      %3849 = vmatprep.subr.mxu0 0.0
      %3850 = vmatpush1.msra.mxu0 0.0
      %3851 = vmatprep.subr.mxu0 0.0
      %3852 = vmatpush1.msra.mxu0 0.0
      %3853 = vmatprep.subr.mxu0 0.0
      %3854 = vmatpush1.msra.mxu0 0.0
      %3855 = vmatprep.subr.mxu0 0.0
      %3856 = vmatpush1.msra.mxu0 0.0
      %3857 = vmatprep.subr.mxu0 0.0
      %3858 = vmatpush1.msra.mxu0 0.0
      %3859 = vmatprep.subr.mxu0 0.0
      %3860 = vmatpush1.msra.mxu0 0.0
      %3861 = vmatprep.subr.mxu0 0.0
      %3862 = vmatpush1.msra.mxu0 0.0
      %3863 = vmatprep.subr.mxu0 0.0
      %3864 = vmatpush1.msra.mxu0 0.0
      %3865 = vmatprep.subr.mxu0 0.0
      %3866 = vmatpush1.msra.mxu0 0.0
      %3867 = vmatprep.subr.mxu0 0.0
      %3868 = vmatpush1.msra.mxu0 0.0
      %3869 = vmatprep.subr.mxu0 0.0
      %3870 = vmatpush1.msra.mxu0 0.0
      %3871 = vmatprep.subr.mxu0 0.0
      %3872 = vmatpush1.msra.mxu0 0.0
      %3873 = vmatprep.subr.mxu0 0.0
      %3874 = vmatpush1.msra.mxu0 0.0
      %3875 = vmatprep.subr.mxu0 0.0
      %3876 = vmatpush1.msra.mxu0 0.0
      %3877 = vmatprep.subr.mxu0 0.0
      %3878 = vmatpush1.msra.mxu0 0.0
      %3879 = vmatprep.subr.mxu0 0.0
      %3880 = vmatpush1.msra.mxu0 0.0
      %3881 = vmatprep.subr.mxu0 0.0
      %3882 = vmatpush1.msra.mxu0 0.0
      %3883 = vmatprep.mubr.f32.mxu0 0.0
      %3884 = vmatmul.mubr.f32.gmra.mrb[0].mxu0 %v3799
      %v3885 = vpop.f32.mrb[0].mxu0
      %v3886 = vadd.f32 0.0, %v3885
      %v3887 = vpop.f32.mrb[0].mxu0
      %3888 = vmatprep.mubr.f32.mxu0 0.0
      %3889 = vmatmul.mubr.f32.gmra.mrb[0].mxu0 %v3800
      %v3890 = vpop.f32.mrb[0].mxu0
      %v3891 = vadd.f32 0.0, %v3890
      %v3892 = vpop.f32.mrb[0].mxu0
      %3893 = vmatprep.mubr.f32.mxu0 0.0
      %3894 = vmatmul.mubr.f32.gmra.mrb[0].mxu0 %v3801
      %v3895 = vpop.f32.mrb[0].mxu0
      %v3896 = vadd.f32 0.0, %v3895
      %v3897 = vpop.f32.mrb[0].mxu0
      %3898 = vmatprep.mubr.f32.mxu0 0.0
      %3899 = vmatmul.mubr.f32.gmra.mrb[0].mxu0 %v3802
      %v3900 = vpop.f32.mrb[0].mxu0
      %v3901 = vadd.f32 0.0, %v3900
      %v3902 = vpop.f32.mrb[0].mxu0
      %3903 = vmatprep.mubr.f32.mxu0 0.0
      %3904 = vmatmul.mubr.f32.gmra.mrb[0].mxu0 %v3803
      %v3905 = vpop.f32.mrb[0].mxu0
      %v3906 = vadd.f32 0.0, %v3905
      %v3907 = vpop.f32.mrb[0].mxu0
      %3908 = vmatprep.mubr.f32.mxu0 0.0
      %3909 = vmatmul.mubr.f32.gmra.mrb[0].mxu0 %v3804
      %v3910 = vpop.f32.mrb[0].mxu0
      %v3911 = vadd.f32 0.0, %v3910
      %v3912 = vpop.f32.mrb[0].mxu0
      %3913 = vmatprep.mubr.f32.mxu0 0.0
      %3914 = vmatmul.mubr.f32.gmra.mrb[0].mxu0 %v3805
      %v3915 = vpop.f32.mrb[0].mxu0
      %v3916 = vadd.f32 0.0, %v3915
      %v3917 = vpop.f32.mrb[0].mxu0
      %3918 = vmatprep.mubr.f32.mxu0 0.0
      %3919 = vmatmul.mubr.f32.gmra.mrb[0].mxu0 %v3806
      %v3920 = vpop.f32.mrb[0].mxu0
      %v3921 = vadd.f32 0.0, %v3920
      %v3922 = vpop.f32.mrb[0].mxu0
      %3923 = vmatprep.mubr.f32.mxu0 0.0
      %3924 = vmatmul.mubr.f32.gmra.mrb[0].mxu0 %v3807
      %v3925 = vpop.f32.mrb[0].mxu0
      %v3926 = vadd.f32 0.0, %v3925
      %v3927 = vpop.f32.mrb[0].mxu0
      %3928 = vmatprep.mubr.f32.mxu0 0.0
      %3929 = vmatmul.mubr.f32.gmra.mrb[0].mxu0 %v3808
      %v3930 = vpop.f32.mrb[0].mxu0
      %v3931 = vadd.f32 0.0, %v3930
      %v3932 = vpop.f32.mrb[0].mxu0
      %3933 = vmatprep.mubr.f32.mxu0 0.0
      %3934 = vmatmul.mubr.f32.gmra.mrb[0].mxu0 %v3809
      %v3935 = vpop.f32.mrb[0].mxu0
      %v3936 = vadd.f32 0.0, %v3935
      %v3937 = vpop.f32.mrb[0].mxu0
      %3938 = vmatprep.mubr.f32.mxu0 0.0
      %3939 = vmatmul.mubr.f32.gmra.mrb[0].mxu0 %v3810
      %v3940 = vpop.f32.mrb[0].mxu0
      %v3941 = vadd.f32 0.0, %v3940
      %v3942 = vpop.f32.mrb[0].mxu0
      %3943 = vmatprep.mubr.f32.mxu0 0.0
      %3944 = vmatmul.mubr.f32.gmra.mrb[0].mxu0 %v3811
      %v3945 = vpop.f32.mrb[0].mxu0
      %v3946 = vadd.f32 0.0, %v3945
      %v3947 = vpop.f32.mrb[0].mxu0
      %3948 = vmatprep.mubr.f32.mxu0 0.0
      %3949 = vmatmul.mubr.f32.gmra.mrb[0].mxu0 %v3812
      %v3950 = vpop.f32.mrb[0].mxu0
      %v3951 = vadd.f32 0.0, %v3950
      %v3952 = vpop.f32.mrb[0].mxu0
      %3953 = vmatprep.mubr.f32.mxu0 0.0
      %3954 = vmatmul.mubr.f32.gmra.mrb[0].mxu0 %v3813
      %v3955 = vpop.f32.mrb[0].mxu0
      %v3956 = vadd.f32 0.0, %v3955
      %v3957 = vpop.f32.mrb[0].mxu0
      %3958 = vmatprep.mubr.f32.mxu0 0.0
      %3959 = vmatmul.mubr.f32.gmra.mrb[0].mxu0 %v3814
      %v3960 = vpop.f32.mrb[0].mxu0
      %v3961 = vadd.f32 0.0, %v3960
      %v3962 = vpop.f32.mrb[0].mxu0
      %3963 = vdwg.mxu0
      %v3964 = vadd.f32 %v3783, %v3886
      %v3965 = vadd.f32 %v3784, %v3891
      %v3966 = vadd.f32 %v3785, %v3896
      %v3967 = vadd.f32 %v3786, %v3901
      %v3968 = vadd.f32 %v3787, %v3906
      %v3969 = vadd.f32 %v3788, %v3911
      %v3970 = vadd.f32 %v3789, %v3916
      %v3971 = vadd.f32 %v3790, %v3921
      %v3972 = vadd.f32 %v3791, %v3926
      %v3973 = vadd.f32 %v3792, %v3931
      %v3974 = vadd.f32 %v3793, %v3936
      %v3975 = vadd.f32 %v3794, %v3941
      %v3976 = vadd.f32 %v3795, %v3946
      %v3977 = vadd.f32 %v3796, %v3951
      %v3978 = vadd.f32 %v3797, %v3956
      %v3979 = vadd.f32 %v3798, %v3961
      %v3980 = vld [vmem:[#allocation2 + $0x34] sm:$0xff]
      %v3981 = vld [vmem:[#allocation2 + $0x3c] sm:$0xff]
      %v3982 = vld [vmem:[#allocation2 + $0x44] sm:$0xff]
      %v3983 = vld [vmem:[#allocation2 + $0x4c] sm:$0xff]
      %v3984 = vld [vmem:[#allocation2 + $0x54] sm:$0xff]
      %v3985 = vld [vmem:[#allocation2 + $0x5c] sm:$0xff]
      %v3986 = vld [vmem:[#allocation2 + $0x64] sm:$0xff]
      %v3987 = vld [vmem:[#allocation2 + $0x6c] sm:$0xff]
      %v3988 = vld [vmem:[#allocation2 + $0x74] sm:$0xff]
      %v3989 = vld [vmem:[#allocation2 + $0x7c] sm:$0xff]
      %v3990 = vld [vmem:[#allocation2 + $0x84] sm:$0xff]
      %v3991 = vld [vmem:[#allocation2 + $0x8c] sm:$0xff]
      %v3992 = vld [vmem:[#allocation2 + $0x94] sm:$0xff]
      %v3993 = vld [vmem:[#allocation2 + $0x9c] sm:$0xff]
      %v3994 = vld [vmem:[#allocation2 + $0xa4] sm:$0xff]
      %v3995 = vld [vmem:[#allocation2 + $0xac] sm:$0xff]
      %s3996 = scalar_lea.vmem %s3, 456
      %v3997 = vld [vmem:[%s3996] sm:$0xff]
      %v3998 = vld [vmem:[%s3996 + $0x8] sm:$0xff]
      %v3999 = vld [vmem:[%s3996 + $0x10] sm:$0xff]
      %4000 = vmatprep.subr.mxu0 0.0
      %4001 = vmatpush1.msra.mxu0 %v3997
      %4002 = vmatprep.subr.mxu0 0.0
      %4003 = vmatpush1.msra.mxu0 %v3998
      %4004 = vmatprep.subr.mxu0 0.0
      %4005 = vmatpush1.msra.mxu0 %v3999
      %4006 = vmatprep.subr.mxu0 0.0
      %4007 = vmatpush1.msra.mxu0 0.0
      %4008 = vmatprep.subr.mxu0 0.0
      %4009 = vmatpush1.msra.mxu0 0.0
      %4010 = vmatprep.subr.mxu0 0.0
      %4011 = vmatpush1.msra.mxu0 0.0
      %4012 = vmatprep.subr.mxu0 0.0
      %4013 = vmatpush1.msra.mxu0 0.0
      %4014 = vmatprep.subr.mxu0 0.0
      %4015 = vmatpush1.msra.mxu0 0.0
      %4016 = vmatprep.subr.mxu0 0.0
      %4017 = vmatpush1.msra.mxu0 0.0
      %4018 = vmatprep.subr.mxu0 0.0
      %4019 = vmatpush1.msra.mxu0 0.0
      %4020 = vmatprep.subr.mxu0 0.0
      %4021 = vmatpush1.msra.mxu0 0.0
      %4022 = vmatprep.subr.mxu0 0.0
      %4023 = vmatpush1.msra.mxu0 0.0
      %4024 = vmatprep.subr.mxu0 0.0
      %4025 = vmatpush1.msra.mxu0 0.0
      %4026 = vmatprep.subr.mxu0 0.0
      %4027 = vmatpush1.msra.mxu0 0.0
      %4028 = vmatprep.subr.mxu0 0.0
      %4029 = vmatpush1.msra.mxu0 0.0
      %4030 = vmatprep.subr.mxu0 0.0
      %4031 = vmatpush1.msra.mxu0 0.0
      %4032 = vmatprep.subr.mxu0 0.0
      %4033 = vmatpush1.msra.mxu0 0.0
      %4034 = vmatprep.subr.mxu0 0.0
      %4035 = vmatpush1.msra.mxu0 0.0
      %4036 = vmatprep.subr.mxu0 0.0
      %4037 = vmatpush1.msra.mxu0 0.0
      %4038 = vmatprep.subr.mxu0 0.0
      %4039 = vmatpush1.msra.mxu0 0.0
      %4040 = vmatprep.subr.mxu0 0.0
      %4041 = vmatpush1.msra.mxu0 0.0
      %4042 = vmatprep.subr.mxu0 0.0
      %4043 = vmatpush1.msra.mxu0 0.0
      %4044 = vmatprep.subr.mxu0 0.0
      %4045 = vmatpush1.msra.mxu0 0.0
      %4046 = vmatprep.subr.mxu0 0.0
      %4047 = vmatpush1.msra.mxu0 0.0
      %4048 = vmatprep.subr.mxu0 0.0
      %4049 = vmatpush1.msra.mxu0 0.0
      %4050 = vmatprep.subr.mxu0 0.0
      %4051 = vmatpush1.msra.mxu0 0.0
      %4052 = vmatprep.subr.mxu0 0.0
      %4053 = vmatpush1.msra.mxu0 0.0
      %4054 = vmatprep.subr.mxu0 0.0
      %4055 = vmatpush1.msra.mxu0 0.0
      %4056 = vmatprep.subr.mxu0 0.0
      %4057 = vmatpush1.msra.mxu0 0.0
      %4058 = vmatprep.subr.mxu0 0.0
      %4059 = vmatpush1.msra.mxu0 0.0
      %4060 = vmatprep.subr.mxu0 0.0
      %4061 = vmatpush1.msra.mxu0 0.0
      %4062 = vmatprep.subr.mxu0 0.0
      %4063 = vmatpush1.msra.mxu0 0.0
      %4064 = vmatprep.mubr.f32.mxu0 0.0
      %4065 = vmatmul.mubr.f32.gmra.mrb[0].mxu0 %v3980
      %v4066 = vpop.f32.mrb[0].mxu0
      %v4067 = vadd.f32 0.0, %v4066
      %v4068 = vpop.f32.mrb[0].mxu0
      %4069 = vmatprep.mubr.f32.mxu0 0.0
      %4070 = vmatmul.mubr.f32.gmra.mrb[0].mxu0 %v3981
      %v4071 = vpop.f32.mrb[0].mxu0
      %v4072 = vadd.f32 0.0, %v4071
      %v4073 = vpop.f32.mrb[0].mxu0
      %4074 = vmatprep.mubr.f32.mxu0 0.0
      %4075 = vmatmul.mubr.f32.gmra.mrb[0].mxu0 %v3982
      %v4076 = vpop.f32.mrb[0].mxu0
      %v4077 = vadd.f32 0.0, %v4076
      %v4078 = vpop.f32.mrb[0].mxu0
      %4079 = vmatprep.mubr.f32.mxu0 0.0
      %4080 = vmatmul.mubr.f32.gmra.mrb[0].mxu0 %v3983
      %v4081 = vpop.f32.mrb[0].mxu0
      %v4082 = vadd.f32 0.0, %v4081
      %v4083 = vpop.f32.mrb[0].mxu0
      %4084 = vmatprep.mubr.f32.mxu0 0.0
      %4085 = vmatmul.mubr.f32.gmra.mrb[0].mxu0 %v3984
      %v4086 = vpop.f32.mrb[0].mxu0
      %v4087 = vadd.f32 0.0, %v4086
      %v4088 = vpop.f32.mrb[0].mxu0
      %4089 = vmatprep.mubr.f32.mxu0 0.0
      %4090 = vmatmul.mubr.f32.gmra.mrb[0].mxu0 %v3985
      %v4091 = vpop.f32.mrb[0].mxu0
      %v4092 = vadd.f32 0.0, %v4091
      %v4093 = vpop.f32.mrb[0].mxu0
      %4094 = vmatprep.mubr.f32.mxu0 0.0
      %4095 = vmatmul.mubr.f32.gmra.mrb[0].mxu0 %v3986
      %v4096 = vpop.f32.mrb[0].mxu0
      %v4097 = vadd.f32 0.0, %v4096
      %v4098 = vpop.f32.mrb[0].mxu0
      %4099 = vmatprep.mubr.f32.mxu0 0.0
      %4100 = vmatmul.mubr.f32.gmra.mrb[0].mxu0 %v3987
      %v4101 = vpop.f32.mrb[0].mxu0
      %v4102 = vadd.f32 0.0, %v4101
      %v4103 = vpop.f32.mrb[0].mxu0
      %4104 = vmatprep.mubr.f32.mxu0 0.0
      %4105 = vmatmul.mubr.f32.gmra.mrb[0].mxu0 %v3988
      %v4106 = vpop.f32.mrb[0].mxu0
      %v4107 = vadd.f32 0.0, %v4106
      %v4108 = vpop.f32.mrb[0].mxu0
      %4109 = vmatprep.mubr.f32.mxu0 0.0
      %4110 = vmatmul.mubr.f32.gmra.mrb[0].mxu0 %v3989
      %v4111 = vpop.f32.mrb[0].mxu0
      %v4112 = vadd.f32 0.0, %v4111
      %v4113 = vpop.f32.mrb[0].mxu0
      %4114 = vmatprep.mubr.f32.mxu0 0.0
      %4115 = vmatmul.mubr.f32.gmra.mrb[0].mxu0 %v3990
      %v4116 = vpop.f32.mrb[0].mxu0
      %v4117 = vadd.f32 0.0, %v4116
      %v4118 = vpop.f32.mrb[0].mxu0
      %4119 = vmatprep.mubr.f32.mxu0 0.0
      %4120 = vmatmul.mubr.f32.gmra.mrb[0].mxu0 %v3991
      %v4121 = vpop.f32.mrb[0].mxu0
      %v4122 = vadd.f32 0.0, %v4121
      %v4123 = vpop.f32.mrb[0].mxu0
      %4124 = vmatprep.mubr.f32.mxu0 0.0
      %4125 = vmatmul.mubr.f32.gmra.mrb[0].mxu0 %v3992
      %v4126 = vpop.f32.mrb[0].mxu0
      %v4127 = vadd.f32 0.0, %v4126
      %v4128 = vpop.f32.mrb[0].mxu0
      %4129 = vmatprep.mubr.f32.mxu0 0.0
      %4130 = vmatmul.mubr.f32.gmra.mrb[0].mxu0 %v3993
      %v4131 = vpop.f32.mrb[0].mxu0
      %v4132 = vadd.f32 0.0, %v4131
      %v4133 = vpop.f32.mrb[0].mxu0
      %4134 = vmatprep.mubr.f32.mxu0 0.0
      %4135 = vmatmul.mubr.f32.gmra.mrb[0].mxu0 %v3994
      %v4136 = vpop.f32.mrb[0].mxu0
      %v4137 = vadd.f32 0.0, %v4136
      %v4138 = vpop.f32.mrb[0].mxu0
      %4139 = vmatprep.mubr.f32.mxu0 0.0
      %4140 = vmatmul.mubr.f32.gmra.mrb[0].mxu0 %v3995
      %v4141 = vpop.f32.mrb[0].mxu0
      %v4142 = vadd.f32 0.0, %v4141
      %v4143 = vpop.f32.mrb[0].mxu0
      %4144 = vdwg.mxu0
      %v4145 = vadd.f32 %v3964, %v4067
      %v4146 = vadd.f32 %v3965, %v4072
      %v4147 = vadd.f32 %v3966, %v4077
      %v4148 = vadd.f32 %v3967, %v4082
      %v4149 = vadd.f32 %v3968, %v4087
      %v4150 = vadd.f32 %v3969, %v4092
      %v4151 = vadd.f32 %v3970, %v4097
      %v4152 = vadd.f32 %v3971, %v4102
      %v4153 = vadd.f32 %v3972, %v4107
      %v4154 = vadd.f32 %v3973, %v4112
      %v4155 = vadd.f32 %v3974, %v4117
      %v4156 = vadd.f32 %v3975, %v4122
      %v4157 = vadd.f32 %v3976, %v4127
      %v4158 = vadd.f32 %v3977, %v4132
      %v4159 = vadd.f32 %v3978, %v4137
      %v4160 = vadd.f32 %v3979, %v4142
      %v4161 = vld [vmem:[#allocation2 + $0x40] sm:$0xff]
      %v4162 = vld [vmem:[#allocation2 + $0x48] sm:$0xff]
      %v4163 = vld [vmem:[#allocation2 + $0x50] sm:$0xff]
      %v4164 = vld [vmem:[#allocation2 + $0x58] sm:$0xff]
      %v4165 = vld [vmem:[#allocation2 + $0x60] sm:$0xff]
      %v4166 = vld [vmem:[#allocation2 + $0x68] sm:$0xff]
      %v4167 = vld [vmem:[#allocation2 + $0x70] sm:$0xff]
      %v4168 = vld [vmem:[#allocation2 + $0x78] sm:$0xff]
      %v4169 = vld [vmem:[#allocation2 + $0x80] sm:$0xff]
      %v4170 = vld [vmem:[#allocation2 + $0x88] sm:$0xff]
      %v4171 = vld [vmem:[#allocation2 + $0x90] sm:$0xff]
      %v4172 = vld [vmem:[#allocation2 + $0x98] sm:$0xff]
      %v4173 = vld [vmem:[#allocation2 + $0xa0] sm:$0xff]
      %v4174 = vld [vmem:[#allocation2 + $0xa8] sm:$0xff]
      %v4175 = vld [vmem:[#allocation2 + $0xb0] sm:$0xff]
      %v4176 = vld [vmem:[#allocation2 + $0xb8] sm:$0xff]
      %s4177 = scalar_lea.vmem %s3, 480
      %v4178 = vld [vmem:[%s4177] sm:$0xff]
      %v4179 = vld [vmem:[%s4177 + $0x8] sm:$0xff]
      %v4180 = vld [vmem:[%s4177 + $0x10] sm:$0xff]
      %4181 = vmatprep.subr.mxu0 0.0
      %4182 = vmatpush1.msra.mxu0 %v4178
      %4183 = vmatprep.subr.mxu0 0.0
      %4184 = vmatpush1.msra.mxu0 %v4179
      %4185 = vmatprep.subr.mxu0 0.0
      %4186 = vmatpush1.msra.mxu0 %v4180
      %4187 = vmatprep.subr.mxu0 0.0
      %4188 = vmatpush1.msra.mxu0 0.0
      %4189 = vmatprep.subr.mxu0 0.0
      %4190 = vmatpush1.msra.mxu0 0.0
      %4191 = vmatprep.subr.mxu0 0.0
      %4192 = vmatpush1.msra.mxu0 0.0
      %4193 = vmatprep.subr.mxu0 0.0
      %4194 = vmatpush1.msra.mxu0 0.0
      %4195 = vmatprep.subr.mxu0 0.0
      %4196 = vmatpush1.msra.mxu0 0.0
      %4197 = vmatprep.subr.mxu0 0.0
      %4198 = vmatpush1.msra.mxu0 0.0
      %4199 = vmatprep.subr.mxu0 0.0
      %4200 = vmatpush1.msra.mxu0 0.0
      %4201 = vmatprep.subr.mxu0 0.0
      %4202 = vmatpush1.msra.mxu0 0.0
      %4203 = vmatprep.subr.mxu0 0.0
      %4204 = vmatpush1.msra.mxu0 0.0
      %4205 = vmatprep.subr.mxu0 0.0
      %4206 = vmatpush1.msra.mxu0 0.0
      %4207 = vmatprep.subr.mxu0 0.0
      %4208 = vmatpush1.msra.mxu0 0.0
      %4209 = vmatprep.subr.mxu0 0.0
      %4210 = vmatpush1.msra.mxu0 0.0
      %4211 = vmatprep.subr.mxu0 0.0
      %4212 = vmatpush1.msra.mxu0 0.0
      %4213 = vmatprep.subr.mxu0 0.0
      %4214 = vmatpush1.msra.mxu0 0.0
      %4215 = vmatprep.subr.mxu0 0.0
      %4216 = vmatpush1.msra.mxu0 0.0
      %4217 = vmatprep.subr.mxu0 0.0
      %4218 = vmatpush1.msra.mxu0 0.0
      %4219 = vmatprep.subr.mxu0 0.0
      %4220 = vmatpush1.msra.mxu0 0.0
      %4221 = vmatprep.subr.mxu0 0.0
      %4222 = vmatpush1.msra.mxu0 0.0
      %4223 = vmatprep.subr.mxu0 0.0
      %4224 = vmatpush1.msra.mxu0 0.0
      %4225 = vmatprep.subr.mxu0 0.0
      %4226 = vmatpush1.msra.mxu0 0.0
      %4227 = vmatprep.subr.mxu0 0.0
      %4228 = vmatpush1.msra.mxu0 0.0
      %4229 = vmatprep.subr.mxu0 0.0
      %4230 = vmatpush1.msra.mxu0 0.0
      %4231 = vmatprep.subr.mxu0 0.0
      %4232 = vmatpush1.msra.mxu0 0.0
      %4233 = vmatprep.subr.mxu0 0.0
      %4234 = vmatpush1.msra.mxu0 0.0
      %4235 = vmatprep.subr.mxu0 0.0
      %4236 = vmatpush1.msra.mxu0 0.0
      %4237 = vmatprep.subr.mxu0 0.0
      %4238 = vmatpush1.msra.mxu0 0.0
      %4239 = vmatprep.subr.mxu0 0.0
      %4240 = vmatpush1.msra.mxu0 0.0
      %4241 = vmatprep.subr.mxu0 0.0
      %4242 = vmatpush1.msra.mxu0 0.0
      %4243 = vmatprep.subr.mxu0 0.0
      %4244 = vmatpush1.msra.mxu0 0.0
      %4245 = vmatprep.mubr.f32.mxu0 0.0
      %4246 = vmatmul.mubr.f32.gmra.mrb[0].mxu0 %v4161
      %v4247 = vpop.f32.mrb[0].mxu0
      %v4248 = vadd.f32 0.0, %v4247
      %v4249 = vpop.f32.mrb[0].mxu0
      %4250 = vmatprep.mubr.f32.mxu0 0.0
      %4251 = vmatmul.mubr.f32.gmra.mrb[0].mxu0 %v4162
      %v4252 = vpop.f32.mrb[0].mxu0
      %v4253 = vadd.f32 0.0, %v4252
      %v4254 = vpop.f32.mrb[0].mxu0
      %4255 = vmatprep.mubr.f32.mxu0 0.0
      %4256 = vmatmul.mubr.f32.gmra.mrb[0].mxu0 %v4163
      %v4257 = vpop.f32.mrb[0].mxu0
      %v4258 = vadd.f32 0.0, %v4257
      %v4259 = vpop.f32.mrb[0].mxu0
      %4260 = vmatprep.mubr.f32.mxu0 0.0
      %4261 = vmatmul.mubr.f32.gmra.mrb[0].mxu0 %v4164
      %v4262 = vpop.f32.mrb[0].mxu0
      %v4263 = vadd.f32 0.0, %v4262
      %v4264 = vpop.f32.mrb[0].mxu0
      %4265 = vmatprep.mubr.f32.mxu0 0.0
      %4266 = vmatmul.mubr.f32.gmra.mrb[0].mxu0 %v4165
      %v4267 = vpop.f32.mrb[0].mxu0
      %v4268 = vadd.f32 0.0, %v4267
      %v4269 = vpop.f32.mrb[0].mxu0
      %4270 = vmatprep.mubr.f32.mxu0 0.0
      %4271 = vmatmul.mubr.f32.gmra.mrb[0].mxu0 %v4166
      %v4272 = vpop.f32.mrb[0].mxu0
      %v4273 = vadd.f32 0.0, %v4272
      %v4274 = vpop.f32.mrb[0].mxu0
      %4275 = vmatprep.mubr.f32.mxu0 0.0
      %4276 = vmatmul.mubr.f32.gmra.mrb[0].mxu0 %v4167
      %v4277 = vpop.f32.mrb[0].mxu0
      %v4278 = vadd.f32 0.0, %v4277
      %v4279 = vpop.f32.mrb[0].mxu0
      %4280 = vmatprep.mubr.f32.mxu0 0.0
      %4281 = vmatmul.mubr.f32.gmra.mrb[0].mxu0 %v4168
      %v4282 = vpop.f32.mrb[0].mxu0
      %v4283 = vadd.f32 0.0, %v4282
      %v4284 = vpop.f32.mrb[0].mxu0
      %4285 = vmatprep.mubr.f32.mxu0 0.0
      %4286 = vmatmul.mubr.f32.gmra.mrb[0].mxu0 %v4169
      %v4287 = vpop.f32.mrb[0].mxu0
      %v4288 = vadd.f32 0.0, %v4287
      %v4289 = vpop.f32.mrb[0].mxu0
      %4290 = vmatprep.mubr.f32.mxu0 0.0
      %4291 = vmatmul.mubr.f32.gmra.mrb[0].mxu0 %v4170
      %v4292 = vpop.f32.mrb[0].mxu0
      %v4293 = vadd.f32 0.0, %v4292
      %v4294 = vpop.f32.mrb[0].mxu0
      %4295 = vmatprep.mubr.f32.mxu0 0.0
      %4296 = vmatmul.mubr.f32.gmra.mrb[0].mxu0 %v4171
      %v4297 = vpop.f32.mrb[0].mxu0
      %v4298 = vadd.f32 0.0, %v4297
      %v4299 = vpop.f32.mrb[0].mxu0
      %4300 = vmatprep.mubr.f32.mxu0 0.0
      %4301 = vmatmul.mubr.f32.gmra.mrb[0].mxu0 %v4172
      %v4302 = vpop.f32.mrb[0].mxu0
      %v4303 = vadd.f32 0.0, %v4302
      %v4304 = vpop.f32.mrb[0].mxu0
      %4305 = vmatprep.mubr.f32.mxu0 0.0
      %4306 = vmatmul.mubr.f32.gmra.mrb[0].mxu0 %v4173
      %v4307 = vpop.f32.mrb[0].mxu0
      %v4308 = vadd.f32 0.0, %v4307
      %v4309 = vpop.f32.mrb[0].mxu0
      %4310 = vmatprep.mubr.f32.mxu0 0.0
      %4311 = vmatmul.mubr.f32.gmra.mrb[0].mxu0 %v4174
      %v4312 = vpop.f32.mrb[0].mxu0
      %v4313 = vadd.f32 0.0, %v4312
      %v4314 = vpop.f32.mrb[0].mxu0
      %4315 = vmatprep.mubr.f32.mxu0 0.0
      %4316 = vmatmul.mubr.f32.gmra.mrb[0].mxu0 %v4175
      %v4317 = vpop.f32.mrb[0].mxu0
      %v4318 = vadd.f32 0.0, %v4317
      %v4319 = vpop.f32.mrb[0].mxu0
      %4320 = vmatprep.mubr.f32.mxu0 0.0
      %4321 = vmatmul.mubr.f32.gmra.mrb[0].mxu0 %v4176
      %v4322 = vpop.f32.mrb[0].mxu0
      %v4323 = vadd.f32 0.0, %v4322
      %v4324 = vpop.f32.mrb[0].mxu0
      %4325 = vdwg.mxu0
      %v4326 = vadd.f32 %v4145, %v4248
      %v4327 = vadd.f32 %v4146, %v4253
      %v4328 = vadd.f32 %v4147, %v4258
      %v4329 = vadd.f32 %v4148, %v4263
      %v4330 = vadd.f32 %v4149, %v4268
      %v4331 = vadd.f32 %v4150, %v4273
      %v4332 = vadd.f32 %v4151, %v4278
      %v4333 = vadd.f32 %v4152, %v4283
      %v4334 = vadd.f32 %v4153, %v4288
      %v4335 = vadd.f32 %v4154, %v4293
      %v4336 = vadd.f32 %v4155, %v4298
      %v4337 = vadd.f32 %v4156, %v4303
      %v4338 = vadd.f32 %v4157, %v4308
      %v4339 = vadd.f32 %v4158, %v4313
      %v4340 = vadd.f32 %v4159, %v4318
      %v4341 = vadd.f32 %v4160, %v4323
      %v4342 = vld [vmem:[#allocation2 + $0x41] sm:$0xff]
      %v4343 = vld [vmem:[#allocation2 + $0x49] sm:$0xff]
      %v4344 = vld [vmem:[#allocation2 + $0x51] sm:$0xff]
      %v4345 = vld [vmem:[#allocation2 + $0x59] sm:$0xff]
      %v4346 = vld [vmem:[#allocation2 + $0x61] sm:$0xff]
      %v4347 = vld [vmem:[#allocation2 + $0x69] sm:$0xff]
      %v4348 = vld [vmem:[#allocation2 + $0x71] sm:$0xff]
      %v4349 = vld [vmem:[#allocation2 + $0x79] sm:$0xff]
      %v4350 = vld [vmem:[#allocation2 + $0x81] sm:$0xff]
      %v4351 = vld [vmem:[#allocation2 + $0x89] sm:$0xff]
      %v4352 = vld [vmem:[#allocation2 + $0x91] sm:$0xff]
      %v4353 = vld [vmem:[#allocation2 + $0x99] sm:$0xff]
      %v4354 = vld [vmem:[#allocation2 + $0xa1] sm:$0xff]
      %v4355 = vld [vmem:[#allocation2 + $0xa9] sm:$0xff]
      %v4356 = vld [vmem:[#allocation2 + $0xb1] sm:$0xff]
      %v4357 = vld [vmem:[#allocation2 + $0xb9] sm:$0xff]
      %s4358 = scalar_lea.vmem %s3, 504
      %v4359 = vld [vmem:[%s4358] sm:$0xff]
      %v4360 = vld [vmem:[%s4358 + $0x8] sm:$0xff]
      %v4361 = vld [vmem:[%s4358 + $0x10] sm:$0xff]
      %4362 = vmatprep.subr.mxu0 0.0
      %4363 = vmatpush1.msra.mxu0 %v4359
      %4364 = vmatprep.subr.mxu0 0.0
      %4365 = vmatpush1.msra.mxu0 %v4360
      %4366 = vmatprep.subr.mxu0 0.0
      %4367 = vmatpush1.msra.mxu0 %v4361
      %4368 = vmatprep.subr.mxu0 0.0
      %4369 = vmatpush1.msra.mxu0 0.0
      %4370 = vmatprep.subr.mxu0 0.0
      %4371 = vmatpush1.msra.mxu0 0.0
      %4372 = vmatprep.subr.mxu0 0.0
      %4373 = vmatpush1.msra.mxu0 0.0
      %4374 = vmatprep.subr.mxu0 0.0
      %4375 = vmatpush1.msra.mxu0 0.0
      %4376 = vmatprep.subr.mxu0 0.0
      %4377 = vmatpush1.msra.mxu0 0.0
      %4378 = vmatprep.subr.mxu0 0.0
      %4379 = vmatpush1.msra.mxu0 0.0
      %4380 = vmatprep.subr.mxu0 0.0
      %4381 = vmatpush1.msra.mxu0 0.0
      %4382 = vmatprep.subr.mxu0 0.0
      %4383 = vmatpush1.msra.mxu0 0.0
      %4384 = vmatprep.subr.mxu0 0.0
      %4385 = vmatpush1.msra.mxu0 0.0
      %4386 = vmatprep.subr.mxu0 0.0
      %4387 = vmatpush1.msra.mxu0 0.0
      %4388 = vmatprep.subr.mxu0 0.0
      %4389 = vmatpush1.msra.mxu0 0.0
      %4390 = vmatprep.subr.mxu0 0.0
      %4391 = vmatpush1.msra.mxu0 0.0
      %4392 = vmatprep.subr.mxu0 0.0
      %4393 = vmatpush1.msra.mxu0 0.0
      %4394 = vmatprep.subr.mxu0 0.0
      %4395 = vmatpush1.msra.mxu0 0.0
      %4396 = vmatprep.subr.mxu0 0.0
      %4397 = vmatpush1.msra.mxu0 0.0
      %4398 = vmatprep.subr.mxu0 0.0
      %4399 = vmatpush1.msra.mxu0 0.0
      %4400 = vmatprep.subr.mxu0 0.0
      %4401 = vmatpush1.msra.mxu0 0.0
      %4402 = vmatprep.subr.mxu0 0.0
      %4403 = vmatpush1.msra.mxu0 0.0
      %4404 = vmatprep.subr.mxu0 0.0
      %4405 = vmatpush1.msra.mxu0 0.0
      %4406 = vmatprep.subr.mxu0 0.0
      %4407 = vmatpush1.msra.mxu0 0.0
      %4408 = vmatprep.subr.mxu0 0.0
      %4409 = vmatpush1.msra.mxu0 0.0
      %4410 = vmatprep.subr.mxu0 0.0
      %4411 = vmatpush1.msra.mxu0 0.0
      %4412 = vmatprep.subr.mxu0 0.0
      %4413 = vmatpush1.msra.mxu0 0.0
      %4414 = vmatprep.subr.mxu0 0.0
      %4415 = vmatpush1.msra.mxu0 0.0
      %4416 = vmatprep.subr.mxu0 0.0
      %4417 = vmatpush1.msra.mxu0 0.0
      %4418 = vmatprep.subr.mxu0 0.0
      %4419 = vmatpush1.msra.mxu0 0.0
      %4420 = vmatprep.subr.mxu0 0.0
      %4421 = vmatpush1.msra.mxu0 0.0
      %4422 = vmatprep.subr.mxu0 0.0
      %4423 = vmatpush1.msra.mxu0 0.0
      %4424 = vmatprep.subr.mxu0 0.0
      %4425 = vmatpush1.msra.mxu0 0.0
      %4426 = vmatprep.mubr.f32.mxu0 0.0
      %4427 = vmatmul.mubr.f32.gmra.mrb[0].mxu0 %v4342
      %v4428 = vpop.f32.mrb[0].mxu0
      %v4429 = vadd.f32 0.0, %v4428
      %v4430 = vpop.f32.mrb[0].mxu0
      %4431 = vmatprep.mubr.f32.mxu0 0.0
      %4432 = vmatmul.mubr.f32.gmra.mrb[0].mxu0 %v4343
      %v4433 = vpop.f32.mrb[0].mxu0
      %v4434 = vadd.f32 0.0, %v4433
      %v4435 = vpop.f32.mrb[0].mxu0
      %4436 = vmatprep.mubr.f32.mxu0 0.0
      %4437 = vmatmul.mubr.f32.gmra.mrb[0].mxu0 %v4344
      %v4438 = vpop.f32.mrb[0].mxu0
      %v4439 = vadd.f32 0.0, %v4438
      %v4440 = vpop.f32.mrb[0].mxu0
      %4441 = vmatprep.mubr.f32.mxu0 0.0
      %4442 = vmatmul.mubr.f32.gmra.mrb[0].mxu0 %v4345
      %v4443 = vpop.f32.mrb[0].mxu0
      %v4444 = vadd.f32 0.0, %v4443
      %v4445 = vpop.f32.mrb[0].mxu0
      %4446 = vmatprep.mubr.f32.mxu0 0.0
      %4447 = vmatmul.mubr.f32.gmra.mrb[0].mxu0 %v4346
      %v4448 = vpop.f32.mrb[0].mxu0
      %v4449 = vadd.f32 0.0, %v4448
      %v4450 = vpop.f32.mrb[0].mxu0
      %4451 = vmatprep.mubr.f32.mxu0 0.0
      %4452 = vmatmul.mubr.f32.gmra.mrb[0].mxu0 %v4347
      %v4453 = vpop.f32.mrb[0].mxu0
      %v4454 = vadd.f32 0.0, %v4453
      %v4455 = vpop.f32.mrb[0].mxu0
      %4456 = vmatprep.mubr.f32.mxu0 0.0
      %4457 = vmatmul.mubr.f32.gmra.mrb[0].mxu0 %v4348
      %v4458 = vpop.f32.mrb[0].mxu0
      %v4459 = vadd.f32 0.0, %v4458
      %v4460 = vpop.f32.mrb[0].mxu0
      %4461 = vmatprep.mubr.f32.mxu0 0.0
      %4462 = vmatmul.mubr.f32.gmra.mrb[0].mxu0 %v4349
      %v4463 = vpop.f32.mrb[0].mxu0
      %v4464 = vadd.f32 0.0, %v4463
      %v4465 = vpop.f32.mrb[0].mxu0
      %4466 = vmatprep.mubr.f32.mxu0 0.0
      %4467 = vmatmul.mubr.f32.gmra.mrb[0].mxu0 %v4350
      %v4468 = vpop.f32.mrb[0].mxu0
      %v4469 = vadd.f32 0.0, %v4468
      %v4470 = vpop.f32.mrb[0].mxu0
      %4471 = vmatprep.mubr.f32.mxu0 0.0
      %4472 = vmatmul.mubr.f32.gmra.mrb[0].mxu0 %v4351
      %v4473 = vpop.f32.mrb[0].mxu0
      %v4474 = vadd.f32 0.0, %v4473
      %v4475 = vpop.f32.mrb[0].mxu0
      %4476 = vmatprep.mubr.f32.mxu0 0.0
      %4477 = vmatmul.mubr.f32.gmra.mrb[0].mxu0 %v4352
      %v4478 = vpop.f32.mrb[0].mxu0
      %v4479 = vadd.f32 0.0, %v4478
      %v4480 = vpop.f32.mrb[0].mxu0
      %4481 = vmatprep.mubr.f32.mxu0 0.0
      %4482 = vmatmul.mubr.f32.gmra.mrb[0].mxu0 %v4353
      %v4483 = vpop.f32.mrb[0].mxu0
      %v4484 = vadd.f32 0.0, %v4483
      %v4485 = vpop.f32.mrb[0].mxu0
      %4486 = vmatprep.mubr.f32.mxu0 0.0
      %4487 = vmatmul.mubr.f32.gmra.mrb[0].mxu0 %v4354
      %v4488 = vpop.f32.mrb[0].mxu0
      %v4489 = vadd.f32 0.0, %v4488
      %v4490 = vpop.f32.mrb[0].mxu0
      %4491 = vmatprep.mubr.f32.mxu0 0.0
      %4492 = vmatmul.mubr.f32.gmra.mrb[0].mxu0 %v4355
      %v4493 = vpop.f32.mrb[0].mxu0
      %v4494 = vadd.f32 0.0, %v4493
      %v4495 = vpop.f32.mrb[0].mxu0
      %4496 = vmatprep.mubr.f32.mxu0 0.0
      %4497 = vmatmul.mubr.f32.gmra.mrb[0].mxu0 %v4356
      %v4498 = vpop.f32.mrb[0].mxu0
      %v4499 = vadd.f32 0.0, %v4498
      %v4500 = vpop.f32.mrb[0].mxu0
      %4501 = vmatprep.mubr.f32.mxu0 0.0
      %4502 = vmatmul.mubr.f32.gmra.mrb[0].mxu0 %v4357
      %v4503 = vpop.f32.mrb[0].mxu0
      %v4504 = vadd.f32 0.0, %v4503
      %v4505 = vpop.f32.mrb[0].mxu0
      %4506 = vdwg.mxu0
      %v4507 = vadd.f32 %v4326, %v4429
      %v4508 = vadd.f32 %v4327, %v4434
      %v4509 = vadd.f32 %v4328, %v4439
      %v4510 = vadd.f32 %v4329, %v4444
      %v4511 = vadd.f32 %v4330, %v4449
      %v4512 = vadd.f32 %v4331, %v4454
      %v4513 = vadd.f32 %v4332, %v4459
      %v4514 = vadd.f32 %v4333, %v4464
      %v4515 = vadd.f32 %v4334, %v4469
      %v4516 = vadd.f32 %v4335, %v4474
      %v4517 = vadd.f32 %v4336, %v4479
      %v4518 = vadd.f32 %v4337, %v4484
      %v4519 = vadd.f32 %v4338, %v4489
      %v4520 = vadd.f32 %v4339, %v4494
      %v4521 = vadd.f32 %v4340, %v4499
      %v4522 = vadd.f32 %v4341, %v4504
      %v4523 = vld [vmem:[#allocation2 + $0x42] sm:$0xff]
      %v4524 = vld [vmem:[#allocation2 + $0x4a] sm:$0xff]
      %v4525 = vld [vmem:[#allocation2 + $0x52] sm:$0xff]
      %v4526 = vld [vmem:[#allocation2 + $0x5a] sm:$0xff]
      %v4527 = vld [vmem:[#allocation2 + $0x62] sm:$0xff]
      %v4528 = vld [vmem:[#allocation2 + $0x6a] sm:$0xff]
      %v4529 = vld [vmem:[#allocation2 + $0x72] sm:$0xff]
      %v4530 = vld [vmem:[#allocation2 + $0x7a] sm:$0xff]
      %v4531 = vld [vmem:[#allocation2 + $0x82] sm:$0xff]
      %v4532 = vld [vmem:[#allocation2 + $0x8a] sm:$0xff]
      %v4533 = vld [vmem:[#allocation2 + $0x92] sm:$0xff]
      %v4534 = vld [vmem:[#allocation2 + $0x9a] sm:$0xff]
      %v4535 = vld [vmem:[#allocation2 + $0xa2] sm:$0xff]
      %v4536 = vld [vmem:[#allocation2 + $0xaa] sm:$0xff]
      %v4537 = vld [vmem:[#allocation2 + $0xb2] sm:$0xff]
      %v4538 = vld [vmem:[#allocation2 + $0xba] sm:$0xff]
      %s4539 = scalar_lea.vmem %s3, 528
      %v4540 = vld [vmem:[%s4539] sm:$0xff]
      %v4541 = vld [vmem:[%s4539 + $0x8] sm:$0xff]
      %v4542 = vld [vmem:[%s4539 + $0x10] sm:$0xff]
      %4543 = vmatprep.subr.mxu0 0.0
      %4544 = vmatpush1.msra.mxu0 %v4540
      %4545 = vmatprep.subr.mxu0 0.0
      %4546 = vmatpush1.msra.mxu0 %v4541
      %4547 = vmatprep.subr.mxu0 0.0
      %4548 = vmatpush1.msra.mxu0 %v4542
      %4549 = vmatprep.subr.mxu0 0.0
      %4550 = vmatpush1.msra.mxu0 0.0
      %4551 = vmatprep.subr.mxu0 0.0
      %4552 = vmatpush1.msra.mxu0 0.0
      %4553 = vmatprep.subr.mxu0 0.0
      %4554 = vmatpush1.msra.mxu0 0.0
      %4555 = vmatprep.subr.mxu0 0.0
      %4556 = vmatpush1.msra.mxu0 0.0
      %4557 = vmatprep.subr.mxu0 0.0
      %4558 = vmatpush1.msra.mxu0 0.0
      %4559 = vmatprep.subr.mxu0 0.0
      %4560 = vmatpush1.msra.mxu0 0.0
      %4561 = vmatprep.subr.mxu0 0.0
      %4562 = vmatpush1.msra.mxu0 0.0
      %4563 = vmatprep.subr.mxu0 0.0
      %4564 = vmatpush1.msra.mxu0 0.0
      %4565 = vmatprep.subr.mxu0 0.0
      %4566 = vmatpush1.msra.mxu0 0.0
      %4567 = vmatprep.subr.mxu0 0.0
      %4568 = vmatpush1.msra.mxu0 0.0
      %4569 = vmatprep.subr.mxu0 0.0
      %4570 = vmatpush1.msra.mxu0 0.0
      %4571 = vmatprep.subr.mxu0 0.0
      %4572 = vmatpush1.msra.mxu0 0.0
      %4573 = vmatprep.subr.mxu0 0.0
      %4574 = vmatpush1.msra.mxu0 0.0
      %4575 = vmatprep.subr.mxu0 0.0
      %4576 = vmatpush1.msra.mxu0 0.0
      %4577 = vmatprep.subr.mxu0 0.0
      %4578 = vmatpush1.msra.mxu0 0.0
      %4579 = vmatprep.subr.mxu0 0.0
      %4580 = vmatpush1.msra.mxu0 0.0
      %4581 = vmatprep.subr.mxu0 0.0
      %4582 = vmatpush1.msra.mxu0 0.0
      %4583 = vmatprep.subr.mxu0 0.0
      %4584 = vmatpush1.msra.mxu0 0.0
      %4585 = vmatprep.subr.mxu0 0.0
      %4586 = vmatpush1.msra.mxu0 0.0
      %4587 = vmatprep.subr.mxu0 0.0
      %4588 = vmatpush1.msra.mxu0 0.0
      %4589 = vmatprep.subr.mxu0 0.0
      %4590 = vmatpush1.msra.mxu0 0.0
      %4591 = vmatprep.subr.mxu0 0.0
      %4592 = vmatpush1.msra.mxu0 0.0
      %4593 = vmatprep.subr.mxu0 0.0
      %4594 = vmatpush1.msra.mxu0 0.0
      %4595 = vmatprep.subr.mxu0 0.0
      %4596 = vmatpush1.msra.mxu0 0.0
      %4597 = vmatprep.subr.mxu0 0.0
      %4598 = vmatpush1.msra.mxu0 0.0
      %4599 = vmatprep.subr.mxu0 0.0
      %4600 = vmatpush1.msra.mxu0 0.0
      %4601 = vmatprep.subr.mxu0 0.0
      %4602 = vmatpush1.msra.mxu0 0.0
      %4603 = vmatprep.subr.mxu0 0.0
      %4604 = vmatpush1.msra.mxu0 0.0
      %4605 = vmatprep.subr.mxu0 0.0
      %4606 = vmatpush1.msra.mxu0 0.0
      %4607 = vmatprep.mubr.f32.mxu0 0.0
      %4608 = vmatmul.mubr.f32.gmra.mrb[0].mxu0 %v4523
      %v4609 = vpop.f32.mrb[0].mxu0
      %v4610 = vadd.f32 0.0, %v4609
      %v4611 = vpop.f32.mrb[0].mxu0
      %4612 = vmatprep.mubr.f32.mxu0 0.0
      %4613 = vmatmul.mubr.f32.gmra.mrb[0].mxu0 %v4524
      %v4614 = vpop.f32.mrb[0].mxu0
      %v4615 = vadd.f32 0.0, %v4614
      %v4616 = vpop.f32.mrb[0].mxu0
      %4617 = vmatprep.mubr.f32.mxu0 0.0
      %4618 = vmatmul.mubr.f32.gmra.mrb[0].mxu0 %v4525
      %v4619 = vpop.f32.mrb[0].mxu0
      %v4620 = vadd.f32 0.0, %v4619
      %v4621 = vpop.f32.mrb[0].mxu0
      %4622 = vmatprep.mubr.f32.mxu0 0.0
      %4623 = vmatmul.mubr.f32.gmra.mrb[0].mxu0 %v4526
      %v4624 = vpop.f32.mrb[0].mxu0
      %v4625 = vadd.f32 0.0, %v4624
      %v4626 = vpop.f32.mrb[0].mxu0
      %4627 = vmatprep.mubr.f32.mxu0 0.0
      %4628 = vmatmul.mubr.f32.gmra.mrb[0].mxu0 %v4527
      %v4629 = vpop.f32.mrb[0].mxu0
      %v4630 = vadd.f32 0.0, %v4629
      %v4631 = vpop.f32.mrb[0].mxu0
      %4632 = vmatprep.mubr.f32.mxu0 0.0
      %4633 = vmatmul.mubr.f32.gmra.mrb[0].mxu0 %v4528
      %v4634 = vpop.f32.mrb[0].mxu0
      %v4635 = vadd.f32 0.0, %v4634
      %v4636 = vpop.f32.mrb[0].mxu0
      %4637 = vmatprep.mubr.f32.mxu0 0.0
      %4638 = vmatmul.mubr.f32.gmra.mrb[0].mxu0 %v4529
      %v4639 = vpop.f32.mrb[0].mxu0
      %v4640 = vadd.f32 0.0, %v4639
      %v4641 = vpop.f32.mrb[0].mxu0
      %4642 = vmatprep.mubr.f32.mxu0 0.0
      %4643 = vmatmul.mubr.f32.gmra.mrb[0].mxu0 %v4530
      %v4644 = vpop.f32.mrb[0].mxu0
      %v4645 = vadd.f32 0.0, %v4644
      %v4646 = vpop.f32.mrb[0].mxu0
      %4647 = vmatprep.mubr.f32.mxu0 0.0
      %4648 = vmatmul.mubr.f32.gmra.mrb[0].mxu0 %v4531
      %v4649 = vpop.f32.mrb[0].mxu0
      %v4650 = vadd.f32 0.0, %v4649
      %v4651 = vpop.f32.mrb[0].mxu0
      %4652 = vmatprep.mubr.f32.mxu0 0.0
      %4653 = vmatmul.mubr.f32.gmra.mrb[0].mxu0 %v4532
      %v4654 = vpop.f32.mrb[0].mxu0
      %v4655 = vadd.f32 0.0, %v4654
      %v4656 = vpop.f32.mrb[0].mxu0
      %4657 = vmatprep.mubr.f32.mxu0 0.0
      %4658 = vmatmul.mubr.f32.gmra.mrb[0].mxu0 %v4533
      %v4659 = vpop.f32.mrb[0].mxu0
      %v4660 = vadd.f32 0.0, %v4659
      %v4661 = vpop.f32.mrb[0].mxu0
      %4662 = vmatprep.mubr.f32.mxu0 0.0
      %4663 = vmatmul.mubr.f32.gmra.mrb[0].mxu0 %v4534
      %v4664 = vpop.f32.mrb[0].mxu0
      %v4665 = vadd.f32 0.0, %v4664
      %v4666 = vpop.f32.mrb[0].mxu0
      %4667 = vmatprep.mubr.f32.mxu0 0.0
      %4668 = vmatmul.mubr.f32.gmra.mrb[0].mxu0 %v4535
      %v4669 = vpop.f32.mrb[0].mxu0
      %v4670 = vadd.f32 0.0, %v4669
      %v4671 = vpop.f32.mrb[0].mxu0
      %4672 = vmatprep.mubr.f32.mxu0 0.0
      %4673 = vmatmul.mubr.f32.gmra.mrb[0].mxu0 %v4536
      %v4674 = vpop.f32.mrb[0].mxu0
      %v4675 = vadd.f32 0.0, %v4674
      %v4676 = vpop.f32.mrb[0].mxu0
      %4677 = vmatprep.mubr.f32.mxu0 0.0
      %4678 = vmatmul.mubr.f32.gmra.mrb[0].mxu0 %v4537
      %v4679 = vpop.f32.mrb[0].mxu0
      %v4680 = vadd.f32 0.0, %v4679
      %v4681 = vpop.f32.mrb[0].mxu0
      %4682 = vmatprep.mubr.f32.mxu0 0.0
      %4683 = vmatmul.mubr.f32.gmra.mrb[0].mxu0 %v4538
      %v4684 = vpop.f32.mrb[0].mxu0
      %v4685 = vadd.f32 0.0, %v4684
      %v4686 = vpop.f32.mrb[0].mxu0
      %4687 = vdwg.mxu0
      %v4688 = vadd.f32 %v4507, %v4610
      %v4689 = vadd.f32 %v4508, %v4615
      %v4690 = vadd.f32 %v4509, %v4620
      %v4691 = vadd.f32 %v4510, %v4625
      %v4692 = vadd.f32 %v4511, %v4630
      %v4693 = vadd.f32 %v4512, %v4635
      %v4694 = vadd.f32 %v4513, %v4640
      %v4695 = vadd.f32 %v4514, %v4645
      %v4696 = vadd.f32 %v4515, %v4650
      %v4697 = vadd.f32 %v4516, %v4655
      %v4698 = vadd.f32 %v4517, %v4660
      %v4699 = vadd.f32 %v4518, %v4665
      %v4700 = vadd.f32 %v4519, %v4670
      %v4701 = vadd.f32 %v4520, %v4675
      %v4702 = vadd.f32 %v4521, %v4680
      %v4703 = vadd.f32 %v4522, %v4685
      %v4704 = vld [vmem:[#allocation2 + $0x43] sm:$0xff]
      %v4705 = vld [vmem:[#allocation2 + $0x4b] sm:$0xff]
      %v4706 = vld [vmem:[#allocation2 + $0x53] sm:$0xff]
      %v4707 = vld [vmem:[#allocation2 + $0x5b] sm:$0xff]
      %v4708 = vld [vmem:[#allocation2 + $0x63] sm:$0xff]
      %v4709 = vld [vmem:[#allocation2 + $0x6b] sm:$0xff]
      %v4710 = vld [vmem:[#allocation2 + $0x73] sm:$0xff]
      %v4711 = vld [vmem:[#allocation2 + $0x7b] sm:$0xff]
      %v4712 = vld [vmem:[#allocation2 + $0x83] sm:$0xff]
      %v4713 = vld [vmem:[#allocation2 + $0x8b] sm:$0xff]
      %v4714 = vld [vmem:[#allocation2 + $0x93] sm:$0xff]
      %v4715 = vld [vmem:[#allocation2 + $0x9b] sm:$0xff]
      %v4716 = vld [vmem:[#allocation2 + $0xa3] sm:$0xff]
      %v4717 = vld [vmem:[#allocation2 + $0xab] sm:$0xff]
      %v4718 = vld [vmem:[#allocation2 + $0xb3] sm:$0xff]
      %v4719 = vld [vmem:[#allocation2 + $0xbb] sm:$0xff]
      %s4720 = scalar_lea.vmem %s3, 552
      %v4721 = vld [vmem:[%s4720] sm:$0xff]
      %v4722 = vld [vmem:[%s4720 + $0x8] sm:$0xff]
      %v4723 = vld [vmem:[%s4720 + $0x10] sm:$0xff]
      %4724 = vmatprep.subr.mxu0 0.0
      %4725 = vmatpush1.msra.mxu0 %v4721
      %4726 = vmatprep.subr.mxu0 0.0
      %4727 = vmatpush1.msra.mxu0 %v4722
      %4728 = vmatprep.subr.mxu0 0.0
      %4729 = vmatpush1.msra.mxu0 %v4723
      %4730 = vmatprep.subr.mxu0 0.0
      %4731 = vmatpush1.msra.mxu0 0.0
      %4732 = vmatprep.subr.mxu0 0.0
      %4733 = vmatpush1.msra.mxu0 0.0
      %4734 = vmatprep.subr.mxu0 0.0
      %4735 = vmatpush1.msra.mxu0 0.0
      %4736 = vmatprep.subr.mxu0 0.0
      %4737 = vmatpush1.msra.mxu0 0.0
      %4738 = vmatprep.subr.mxu0 0.0
      %4739 = vmatpush1.msra.mxu0 0.0
      %4740 = vmatprep.subr.mxu0 0.0
      %4741 = vmatpush1.msra.mxu0 0.0
      %4742 = vmatprep.subr.mxu0 0.0
      %4743 = vmatpush1.msra.mxu0 0.0
      %4744 = vmatprep.subr.mxu0 0.0
      %4745 = vmatpush1.msra.mxu0 0.0
      %4746 = vmatprep.subr.mxu0 0.0
      %4747 = vmatpush1.msra.mxu0 0.0
      %4748 = vmatprep.subr.mxu0 0.0
      %4749 = vmatpush1.msra.mxu0 0.0
      %4750 = vmatprep.subr.mxu0 0.0
      %4751 = vmatpush1.msra.mxu0 0.0
      %4752 = vmatprep.subr.mxu0 0.0
      %4753 = vmatpush1.msra.mxu0 0.0
      %4754 = vmatprep.subr.mxu0 0.0
      %4755 = vmatpush1.msra.mxu0 0.0
      %4756 = vmatprep.subr.mxu0 0.0
      %4757 = vmatpush1.msra.mxu0 0.0
      %4758 = vmatprep.subr.mxu0 0.0
      %4759 = vmatpush1.msra.mxu0 0.0
      %4760 = vmatprep.subr.mxu0 0.0
      %4761 = vmatpush1.msra.mxu0 0.0
      %4762 = vmatprep.subr.mxu0 0.0
      %4763 = vmatpush1.msra.mxu0 0.0
      %4764 = vmatprep.subr.mxu0 0.0
      %4765 = vmatpush1.msra.mxu0 0.0
      %4766 = vmatprep.subr.mxu0 0.0
      %4767 = vmatpush1.msra.mxu0 0.0
      %4768 = vmatprep.subr.mxu0 0.0
      %4769 = vmatpush1.msra.mxu0 0.0
      %4770 = vmatprep.subr.mxu0 0.0
      %4771 = vmatpush1.msra.mxu0 0.0
      %4772 = vmatprep.subr.mxu0 0.0
      %4773 = vmatpush1.msra.mxu0 0.0
      %4774 = vmatprep.subr.mxu0 0.0
      %4775 = vmatpush1.msra.mxu0 0.0
      %4776 = vmatprep.subr.mxu0 0.0
      %4777 = vmatpush1.msra.mxu0 0.0
      %4778 = vmatprep.subr.mxu0 0.0
      %4779 = vmatpush1.msra.mxu0 0.0
      %4780 = vmatprep.subr.mxu0 0.0
      %4781 = vmatpush1.msra.mxu0 0.0
      %4782 = vmatprep.subr.mxu0 0.0
      %4783 = vmatpush1.msra.mxu0 0.0
      %4784 = vmatprep.subr.mxu0 0.0
      %4785 = vmatpush1.msra.mxu0 0.0
      %4786 = vmatprep.subr.mxu0 0.0
      %4787 = vmatpush1.msra.mxu0 0.0
      %4788 = vmatprep.mubr.f32.mxu0 0.0
      %4789 = vmatmul.mubr.f32.gmra.mrb[0].mxu0 %v4704
      %v4790 = vpop.f32.mrb[0].mxu0
      %v4791 = vadd.f32 0.0, %v4790
      %v4792 = vpop.f32.mrb[0].mxu0
      %4793 = vmatprep.mubr.f32.mxu0 0.0
      %4794 = vmatmul.mubr.f32.gmra.mrb[0].mxu0 %v4705
      %v4795 = vpop.f32.mrb[0].mxu0
      %v4796 = vadd.f32 0.0, %v4795
      %v4797 = vpop.f32.mrb[0].mxu0
      %4798 = vmatprep.mubr.f32.mxu0 0.0
      %4799 = vmatmul.mubr.f32.gmra.mrb[0].mxu0 %v4706
      %v4800 = vpop.f32.mrb[0].mxu0
      %v4801 = vadd.f32 0.0, %v4800
      %v4802 = vpop.f32.mrb[0].mxu0
      %4803 = vmatprep.mubr.f32.mxu0 0.0
      %4804 = vmatmul.mubr.f32.gmra.mrb[0].mxu0 %v4707
      %v4805 = vpop.f32.mrb[0].mxu0
      %v4806 = vadd.f32 0.0, %v4805
      %v4807 = vpop.f32.mrb[0].mxu0
      %4808 = vmatprep.mubr.f32.mxu0 0.0
      %4809 = vmatmul.mubr.f32.gmra.mrb[0].mxu0 %v4708
      %v4810 = vpop.f32.mrb[0].mxu0
      %v4811 = vadd.f32 0.0, %v4810
      %v4812 = vpop.f32.mrb[0].mxu0
      %4813 = vmatprep.mubr.f32.mxu0 0.0
      %4814 = vmatmul.mubr.f32.gmra.mrb[0].mxu0 %v4709
      %v4815 = vpop.f32.mrb[0].mxu0
      %v4816 = vadd.f32 0.0, %v4815
      %v4817 = vpop.f32.mrb[0].mxu0
      %4818 = vmatprep.mubr.f32.mxu0 0.0
      %4819 = vmatmul.mubr.f32.gmra.mrb[0].mxu0 %v4710
      %v4820 = vpop.f32.mrb[0].mxu0
      %v4821 = vadd.f32 0.0, %v4820
      %v4822 = vpop.f32.mrb[0].mxu0
      %4823 = vmatprep.mubr.f32.mxu0 0.0
      %4824 = vmatmul.mubr.f32.gmra.mrb[0].mxu0 %v4711
      %v4825 = vpop.f32.mrb[0].mxu0
      %v4826 = vadd.f32 0.0, %v4825
      %v4827 = vpop.f32.mrb[0].mxu0
      %4828 = vmatprep.mubr.f32.mxu0 0.0
      %4829 = vmatmul.mubr.f32.gmra.mrb[0].mxu0 %v4712
      %v4830 = vpop.f32.mrb[0].mxu0
      %v4831 = vadd.f32 0.0, %v4830
      %v4832 = vpop.f32.mrb[0].mxu0
      %4833 = vmatprep.mubr.f32.mxu0 0.0
      %4834 = vmatmul.mubr.f32.gmra.mrb[0].mxu0 %v4713
      %v4835 = vpop.f32.mrb[0].mxu0
      %v4836 = vadd.f32 0.0, %v4835
      %v4837 = vpop.f32.mrb[0].mxu0
      %4838 = vmatprep.mubr.f32.mxu0 0.0
      %4839 = vmatmul.mubr.f32.gmra.mrb[0].mxu0 %v4714
      %v4840 = vpop.f32.mrb[0].mxu0
      %v4841 = vadd.f32 0.0, %v4840
      %v4842 = vpop.f32.mrb[0].mxu0
      %4843 = vmatprep.mubr.f32.mxu0 0.0
      %4844 = vmatmul.mubr.f32.gmra.mrb[0].mxu0 %v4715
      %v4845 = vpop.f32.mrb[0].mxu0
      %v4846 = vadd.f32 0.0, %v4845
      %v4847 = vpop.f32.mrb[0].mxu0
      %4848 = vmatprep.mubr.f32.mxu0 0.0
      %4849 = vmatmul.mubr.f32.gmra.mrb[0].mxu0 %v4716
      %v4850 = vpop.f32.mrb[0].mxu0
      %v4851 = vadd.f32 0.0, %v4850
      %v4852 = vpop.f32.mrb[0].mxu0
      %4853 = vmatprep.mubr.f32.mxu0 0.0
      %4854 = vmatmul.mubr.f32.gmra.mrb[0].mxu0 %v4717
      %v4855 = vpop.f32.mrb[0].mxu0
      %v4856 = vadd.f32 0.0, %v4855
      %v4857 = vpop.f32.mrb[0].mxu0
      %4858 = vmatprep.mubr.f32.mxu0 0.0
      %4859 = vmatmul.mubr.f32.gmra.mrb[0].mxu0 %v4718
      %v4860 = vpop.f32.mrb[0].mxu0
      %v4861 = vadd.f32 0.0, %v4860
      %v4862 = vpop.f32.mrb[0].mxu0
      %4863 = vmatprep.mubr.f32.mxu0 0.0
      %4864 = vmatmul.mubr.f32.gmra.mrb[0].mxu0 %v4719
      %v4865 = vpop.f32.mrb[0].mxu0
      %v4866 = vadd.f32 0.0, %v4865
      %v4867 = vpop.f32.mrb[0].mxu0
      %4868 = vdwg.mxu0
      %v4869 = vadd.f32 %v4688, %v4791
      %v4870 = vadd.f32 %v4689, %v4796
      %v4871 = vadd.f32 %v4690, %v4801
      %v4872 = vadd.f32 %v4691, %v4806
      %v4873 = vadd.f32 %v4692, %v4811
      %v4874 = vadd.f32 %v4693, %v4816
      %v4875 = vadd.f32 %v4694, %v4821
      %v4876 = vadd.f32 %v4695, %v4826
      %v4877 = vadd.f32 %v4696, %v4831
      %v4878 = vadd.f32 %v4697, %v4836
      %v4879 = vadd.f32 %v4698, %v4841
      %v4880 = vadd.f32 %v4699, %v4846
      %v4881 = vadd.f32 %v4700, %v4851
      %v4882 = vadd.f32 %v4701, %v4856
      %v4883 = vadd.f32 %v4702, %v4861
      %v4884 = vadd.f32 %v4703, %v4866
      %v4885 = vld [vmem:[#allocation2 + $0x44] sm:$0xff]
      %v4886 = vld [vmem:[#allocation2 + $0x4c] sm:$0xff]
      %v4887 = vld [vmem:[#allocation2 + $0x54] sm:$0xff]
      %v4888 = vld [vmem:[#allocation2 + $0x5c] sm:$0xff]
      %v4889 = vld [vmem:[#allocation2 + $0x64] sm:$0xff]
      %v4890 = vld [vmem:[#allocation2 + $0x6c] sm:$0xff]
      %v4891 = vld [vmem:[#allocation2 + $0x74] sm:$0xff]
      %v4892 = vld [vmem:[#allocation2 + $0x7c] sm:$0xff]
      %v4893 = vld [vmem:[#allocation2 + $0x84] sm:$0xff]
      %v4894 = vld [vmem:[#allocation2 + $0x8c] sm:$0xff]
      %v4895 = vld [vmem:[#allocation2 + $0x94] sm:$0xff]
      %v4896 = vld [vmem:[#allocation2 + $0x9c] sm:$0xff]
      %v4897 = vld [vmem:[#allocation2 + $0xa4] sm:$0xff]
      %v4898 = vld [vmem:[#allocation2 + $0xac] sm:$0xff]
      %v4899 = vld [vmem:[#allocation2 + $0xb4] sm:$0xff]
      %v4900 = vld [vmem:[#allocation2 + $0xbc] sm:$0xff]
      %s4901 = scalar_lea.vmem %s3, 576
      %v4902 = vld [vmem:[%s4901] sm:$0xff]
      %v4903 = vld [vmem:[%s4901 + $0x8] sm:$0xff]
      %v4904 = vld [vmem:[%s4901 + $0x10] sm:$0xff]
      %4905 = vmatprep.subr.mxu0 0.0
      %4906 = vmatpush1.msra.mxu0 %v4902
      %4907 = vmatprep.subr.mxu0 0.0
      %4908 = vmatpush1.msra.mxu0 %v4903
      %4909 = vmatprep.subr.mxu0 0.0
      %4910 = vmatpush1.msra.mxu0 %v4904
      %4911 = vmatprep.subr.mxu0 0.0
      %4912 = vmatpush1.msra.mxu0 0.0
      %4913 = vmatprep.subr.mxu0 0.0
      %4914 = vmatpush1.msra.mxu0 0.0
      %4915 = vmatprep.subr.mxu0 0.0
      %4916 = vmatpush1.msra.mxu0 0.0
      %4917 = vmatprep.subr.mxu0 0.0
      %4918 = vmatpush1.msra.mxu0 0.0
      %4919 = vmatprep.subr.mxu0 0.0
      %4920 = vmatpush1.msra.mxu0 0.0
      %4921 = vmatprep.subr.mxu0 0.0
      %4922 = vmatpush1.msra.mxu0 0.0
      %4923 = vmatprep.subr.mxu0 0.0
      %4924 = vmatpush1.msra.mxu0 0.0
      %4925 = vmatprep.subr.mxu0 0.0
      %4926 = vmatpush1.msra.mxu0 0.0
      %4927 = vmatprep.subr.mxu0 0.0
      %4928 = vmatpush1.msra.mxu0 0.0
      %4929 = vmatprep.subr.mxu0 0.0
      %4930 = vmatpush1.msra.mxu0 0.0
      %4931 = vmatprep.subr.mxu0 0.0
      %4932 = vmatpush1.msra.mxu0 0.0
      %4933 = vmatprep.subr.mxu0 0.0
      %4934 = vmatpush1.msra.mxu0 0.0
      %4935 = vmatprep.subr.mxu0 0.0
      %4936 = vmatpush1.msra.mxu0 0.0
      %4937 = vmatprep.subr.mxu0 0.0
      %4938 = vmatpush1.msra.mxu0 0.0
      %4939 = vmatprep.subr.mxu0 0.0
      %4940 = vmatpush1.msra.mxu0 0.0
      %4941 = vmatprep.subr.mxu0 0.0
      %4942 = vmatpush1.msra.mxu0 0.0
      %4943 = vmatprep.subr.mxu0 0.0
      %4944 = vmatpush1.msra.mxu0 0.0
      %4945 = vmatprep.subr.mxu0 0.0
      %4946 = vmatpush1.msra.mxu0 0.0
      %4947 = vmatprep.subr.mxu0 0.0
      %4948 = vmatpush1.msra.mxu0 0.0
      %4949 = vmatprep.subr.mxu0 0.0
      %4950 = vmatpush1.msra.mxu0 0.0
      %4951 = vmatprep.subr.mxu0 0.0
      %4952 = vmatpush1.msra.mxu0 0.0
      %4953 = vmatprep.subr.mxu0 0.0
      %4954 = vmatpush1.msra.mxu0 0.0
      %4955 = vmatprep.subr.mxu0 0.0
      %4956 = vmatpush1.msra.mxu0 0.0
      %4957 = vmatprep.subr.mxu0 0.0
      %4958 = vmatpush1.msra.mxu0 0.0
      %4959 = vmatprep.subr.mxu0 0.0
      %4960 = vmatpush1.msra.mxu0 0.0
      %4961 = vmatprep.subr.mxu0 0.0
      %4962 = vmatpush1.msra.mxu0 0.0
      %4963 = vmatprep.subr.mxu0 0.0
      %4964 = vmatpush1.msra.mxu0 0.0
      %4965 = vmatprep.subr.mxu0 0.0
      %4966 = vmatpush1.msra.mxu0 0.0
      %4967 = vmatprep.subr.mxu0 0.0
      %4968 = vmatpush1.msra.mxu0 0.0
      %4969 = vmatprep.mubr.f32.mxu0 0.0
      %4970 = vmatmul.mubr.f32.gmra.mrb[0].mxu0 %v4885
      %v4971 = vpop.f32.mrb[0].mxu0
      %v4972 = vadd.f32 0.0, %v4971
      %v4973 = vpop.f32.mrb[0].mxu0
      %4974 = vmatprep.mubr.f32.mxu0 0.0
      %4975 = vmatmul.mubr.f32.gmra.mrb[0].mxu0 %v4886
      %v4976 = vpop.f32.mrb[0].mxu0
      %v4977 = vadd.f32 0.0, %v4976
      %v4978 = vpop.f32.mrb[0].mxu0
      %4979 = vmatprep.mubr.f32.mxu0 0.0
      %4980 = vmatmul.mubr.f32.gmra.mrb[0].mxu0 %v4887
      %v4981 = vpop.f32.mrb[0].mxu0
      %v4982 = vadd.f32 0.0, %v4981
      %v4983 = vpop.f32.mrb[0].mxu0
      %4984 = vmatprep.mubr.f32.mxu0 0.0
      %4985 = vmatmul.mubr.f32.gmra.mrb[0].mxu0 %v4888
      %v4986 = vpop.f32.mrb[0].mxu0
      %v4987 = vadd.f32 0.0, %v4986
      %v4988 = vpop.f32.mrb[0].mxu0
      %4989 = vmatprep.mubr.f32.mxu0 0.0
      %4990 = vmatmul.mubr.f32.gmra.mrb[0].mxu0 %v4889
      %v4991 = vpop.f32.mrb[0].mxu0
      %v4992 = vadd.f32 0.0, %v4991
      %v4993 = vpop.f32.mrb[0].mxu0
      %4994 = vmatprep.mubr.f32.mxu0 0.0
      %4995 = vmatmul.mubr.f32.gmra.mrb[0].mxu0 %v4890
      %v4996 = vpop.f32.mrb[0].mxu0
      %v4997 = vadd.f32 0.0, %v4996
      %v4998 = vpop.f32.mrb[0].mxu0
      %4999 = vmatprep.mubr.f32.mxu0 0.0
      %5000 = vmatmul.mubr.f32.gmra.mrb[0].mxu0 %v4891
      %v5001 = vpop.f32.mrb[0].mxu0
      %v5002 = vadd.f32 0.0, %v5001
      %v5003 = vpop.f32.mrb[0].mxu0
      %5004 = vmatprep.mubr.f32.mxu0 0.0
      %5005 = vmatmul.mubr.f32.gmra.mrb[0].mxu0 %v4892
      %v5006 = vpop.f32.mrb[0].mxu0
      %v5007 = vadd.f32 0.0, %v5006
      %v5008 = vpop.f32.mrb[0].mxu0
      %5009 = vmatprep.mubr.f32.mxu0 0.0
      %5010 = vmatmul.mubr.f32.gmra.mrb[0].mxu0 %v4893
      %v5011 = vpop.f32.mrb[0].mxu0
      %v5012 = vadd.f32 0.0, %v5011
      %v5013 = vpop.f32.mrb[0].mxu0
      %5014 = vmatprep.mubr.f32.mxu0 0.0
      %5015 = vmatmul.mubr.f32.gmra.mrb[0].mxu0 %v4894
      %v5016 = vpop.f32.mrb[0].mxu0
      %v5017 = vadd.f32 0.0, %v5016
      %v5018 = vpop.f32.mrb[0].mxu0
      %5019 = vmatprep.mubr.f32.mxu0 0.0
      %5020 = vmatmul.mubr.f32.gmra.mrb[0].mxu0 %v4895
      %v5021 = vpop.f32.mrb[0].mxu0
      %v5022 = vadd.f32 0.0, %v5021
      %v5023 = vpop.f32.mrb[0].mxu0
      %5024 = vmatprep.mubr.f32.mxu0 0.0
      %5025 = vmatmul.mubr.f32.gmra.mrb[0].mxu0 %v4896
      %v5026 = vpop.f32.mrb[0].mxu0
      %v5027 = vadd.f32 0.0, %v5026
      %v5028 = vpop.f32.mrb[0].mxu0
      %5029 = vmatprep.mubr.f32.mxu0 0.0
      %5030 = vmatmul.mubr.f32.gmra.mrb[0].mxu0 %v4897
      %v5031 = vpop.f32.mrb[0].mxu0
      %v5032 = vadd.f32 0.0, %v5031
      %v5033 = vpop.f32.mrb[0].mxu0
      %5034 = vmatprep.mubr.f32.mxu0 0.0
      %5035 = vmatmul.mubr.f32.gmra.mrb[0].mxu0 %v4898
      %v5036 = vpop.f32.mrb[0].mxu0
      %v5037 = vadd.f32 0.0, %v5036
      %v5038 = vpop.f32.mrb[0].mxu0
      %5039 = vmatprep.mubr.f32.mxu0 0.0
      %5040 = vmatmul.mubr.f32.gmra.mrb[0].mxu0 %v4899
      %v5041 = vpop.f32.mrb[0].mxu0
      %v5042 = vadd.f32 0.0, %v5041
      %v5043 = vpop.f32.mrb[0].mxu0
      %5044 = vmatprep.mubr.f32.mxu0 0.0
      %5045 = vmatmul.mubr.f32.gmra.mrb[0].mxu0 %v4900
      %v5046 = vpop.f32.mrb[0].mxu0
      %v5047 = vadd.f32 0.0, %v5046
      %v5048 = vpop.f32.mrb[0].mxu0
      %5049 = vdwg.mxu0
      %v5050 = vadd.f32 %v4869, %v4972
      %v5051 = vadd.f32 %v4870, %v4977
      %v5052 = vadd.f32 %v4871, %v4982
      %v5053 = vadd.f32 %v4872, %v4987
      %v5054 = vadd.f32 %v4873, %v4992
      %v5055 = vadd.f32 %v4874, %v4997
      %v5056 = vadd.f32 %v4875, %v5002
      %v5057 = vadd.f32 %v4876, %v5007
      %v5058 = vadd.f32 %v4877, %v5012
      %v5059 = vadd.f32 %v4878, %v5017
      %v5060 = vadd.f32 %v4879, %v5022
      %v5061 = vadd.f32 %v4880, %v5027
      %v5062 = vadd.f32 %v4881, %v5032
      %v5063 = vadd.f32 %v4882, %v5037
      %v5064 = vadd.f32 %v4883, %v5042
      %v5065 = vadd.f32 %v4884, %v5047
      %v5066 = vld [vmem:[%s4] sm:$0x1]
      %v5068 = vlaneseq
      %v5069 = vshrl.u32 %v5068, 7
      %v5070 = vsub.s32 0, %v5069
      %v5071 = vrot.slane %v5066, %v5070
      %v5073 = vadd.f32 %v5050, %v5071
      %v5074 = vadd.f32 %v5051, %v5071
      %v5075 = vadd.f32 %v5052, %v5071
      %v5076 = vadd.f32 %v5053, %v5071
      %v5077 = vadd.f32 %v5054, %v5071
      %v5078 = vadd.f32 %v5055, %v5071
      %v5079 = vadd.f32 %v5056, %v5071
      %v5080 = vadd.f32 %v5057, %v5071
      %v5081 = vadd.f32 %v5058, %v5071
      %v5082 = vadd.f32 %v5059, %v5071
      %v5083 = vadd.f32 %v5060, %v5071
      %v5084 = vadd.f32 %v5061, %v5071
      %v5085 = vadd.f32 %v5062, %v5071
      %v5086 = vadd.f32 %v5063, %v5071
      %v5087 = vadd.f32 %v5064, %v5071
      %v5088 = vadd.f32 %v5065, %v5071
      %v5089 = vmax.f32 %v5073, 0.0
      %v5090 = vmax.f32 %v5074, 0.0
      %v5091 = vmax.f32 %v5075, 0.0
      %v5092 = vmax.f32 %v5076, 0.0
      %v5093 = vmax.f32 %v5077, 0.0
      %v5094 = vmax.f32 %v5078, 0.0
      %v5095 = vmax.f32 %v5079, 0.0
      %v5096 = vmax.f32 %v5080, 0.0
      %v5097 = vmax.f32 %v5081, 0.0
      %v5098 = vmax.f32 %v5082, 0.0
      %v5099 = vmax.f32 %v5083, 0.0
      %v5100 = vmax.f32 %v5084, 0.0
      %v5101 = vmax.f32 %v5085, 0.0
      %v5102 = vmax.f32 %v5086, 0.0
      %v5103 = vmax.f32 %v5087, 0.0
      %v5104 = vmax.f32 %v5088, 0.0
      %5105 = vst [vmem:[%s226] sm:$0xff] %v5089
      %5106 = vst [vmem:[%s226 + $0x8] sm:$0xff] %v5090
      %5107 = vst [vmem:[%s226 + $0x10] sm:$0xff] %v5091
      %5108 = vst [vmem:[%s226 + $0x18] sm:$0xff] %v5092
      %5109 = vst [vmem:[%s226 + $0x20] sm:$0xff] %v5093
      %5110 = vst [vmem:[%s226 + $0x28] sm:$0xff] %v5094
      %5111 = vst [vmem:[%s226 + $0x30] sm:$0xff] %v5095
      %5112 = vst [vmem:[%s226 + $0x38] sm:$0xff] %v5096
      %5113 = vst [vmem:[%s226 + $0x40] sm:$0xff] %v5097
      %5114 = vst [vmem:[%s226 + $0x48] sm:$0xff] %v5098
      %5115 = vst [vmem:[%s226 + $0x50] sm:$0xff] %v5099
      %5116 = vst [vmem:[%s226 + $0x58] sm:$0xff] %v5100
      %5117 = vst [vmem:[%s226 + $0x60] sm:$0xff] %v5101
      %5118 = vst [vmem:[%s226 + $0x68] sm:$0xff] %v5102
      %5119 = vst [vmem:[%s226 + $0x70] sm:$0xff] %v5103
      %5120 = vst [vmem:[%s226 + $0x78] sm:$0xff] %v5104
      %s5121 = smul.u32 16, %s16
      %p5122 = scmp.lt.s32.totalorder %s5121, 31
      %s5123 = scalar_select %p5122, %s5121, 31
      %s5124 = smul.addr %s5123, 8
      %s5125 = scalar_lea.vmem %s5, %s5124
      // Predicated region
      $region41: #{sequential_forward.1} parent=39 // pred_check
        %p5126 = pneg %p144
      $region42: #{sequential_forward.1} parent=39 // pred_check_branch
        %5128 = sbr.rel (%p5126) target = $region44
      $region43: #{sequential_forward.1} parent=39 // pred_region
        %s5129 = smul.u32 16, %s16
      $region44: #{sequential_forward.1} parent=39 // pred_fallthru
        _
    $region40: #{sequential_forward.1} parent=5 // pred_fallthru
      _
    %p5130 = scmp.le.s32.totalorder 2, %s11
    // Predicated region
    $region45: #{sequential_forward.1} parent=5 // pred_check
      %p5131 = pneg %p5130
    $region46: #{sequential_forward.1} parent=5 // pred_check_branch
      %5133 = sbr.rel (%p5131) target = $region48
    $region47: #{sequential_forward.1} parent=5 // pred_region
      %s5134 = ssub.s32 %s11, 2
      // Predicated region
      $region49: #{sequential_forward.1} parent=47 // pred_check
        %p5135 = pneg %p150
      $region50: #{sequential_forward.1} parent=47 // pred_check_branch
        %5137 = sbr.rel (%p5135) target = $region52
      $region51: #{sequential_forward.1} parent=47 // pred_region
        %s5138 = smul.u32 16, %s17
        %p5139 = scmp.lt.s32.totalorder %s5138, 31
        %s5140 = scalar_select %p5139, %s5138, 31
        %s5141 = smul.addr %s5140, 8
        %s5142 = scalar_lea.vmem %s5, %s5141
      $region52: #{sequential_forward.1} parent=47 // pred_fallthru
        _
    $region48: #{sequential_forward.1} parent=5 // pred_fallthru
      _
  $region6: #{sequential_forward.1} parent=0 // loop_footer
    %s15 = sadd.s32 1, %s11
  $region7: #{sequential_forward.1} parent=0 // loop_footer_branch
    %10 = sbr.rel target = $region3
  $region8: #{sequential_forward.1} parent=0 // loop_exit
    _

</llo_original>
